<compile_context>
chip_gen: v5e
topology: v5e:2x2
jax: 0.10.0
libtpu: 0.0.40
codegen_flags: <defaults>
</compile_context>

<pallas_src>
import functools

import jax
import jax.numpy as jnp
import numpy as np
from jax import lax
from jax.experimental import pallas as pl
from jax.experimental.pallas import tpu as pltpu


def _round_up(x, m):
    return ((x + m - 1) // m) * m


def _vmem_capacity_bytes():
    try:
        info = pltpu.get_tpu_info()
        cap = getattr(info, "vmem_capacity_bytes", None)
        if cap:
            return int(cap)
    except Exception:
        pass
    return 64 << 20  # conservative default (v7x-sized VMEM)


def _vmem_budget_bytes():
    cap = _vmem_capacity_bytes()
    # ~100 MiB usable on 128 MiB parts (v5e/v6e), ~52 MiB on 64 MiB parts (v7x).
    return max(32 << 20, min(100 << 20, cap - (12 << 20)))


# ----------------------------------------------------------------------------
# Kernel 1a: embedding gather, table resident in VMEM (fast path)
# ----------------------------------------------------------------------------
def _embed_vmem_kernel(ids_ref, w_ref, out_ref, *, tok_block, vocab_size):
    base = pl.program_id(0) * tok_block
    for r in range(tok_block):
        # Clamp ids: TPU refs have no runtime OOB check (PyTorch would raise).
        row = jnp.clip(ids_ref[base + r], 0, vocab_size - 1)
        out_ref[pl.ds(r, 1), :] = w_ref[pl.ds(row, 1), :]


# ----------------------------------------------------------------------------
# Kernel 1b: embedding gather, table in HBM, double-buffered row DMAs
# ----------------------------------------------------------------------------
def _embed_hbm_kernel(ids_ref, w_hbm, out_ref, buf, sems, *, tok_block, vocab_size):
    step = pl.program_id(0)
    nsteps = pl.num_programs(0)

    def issue(s, slot):
        base = s * tok_block
        for r in range(tok_block):
            row = jnp.clip(ids_ref[base + r], 0, vocab_size - 1)
            pltpu.make_async_copy(
                w_hbm.at[pl.ds(row, 1), :],
                buf.at[slot, pl.ds(r, 1), :],
                sems.at[slot, r],
            ).start()

    @pl.when(step == 0)
    def _():
        issue(0, 0)                        # prime the current slot

    @pl.when(step + 1 < nsteps)
    def _():
        issue(step + 1, (step + 1) % 2)    # prefetch next block's rows (ids in SMEM)

    slot = step % 2
    for r in range(tok_block):
        pltpu.make_async_copy(
            w_hbm.at[pl.ds(0, 1), :],      # shape-only; wait is on the semaphore
            buf.at[slot, pl.ds(r, 1), :],
            sems.at[slot, r],
        ).wait()
    out_ref[...] = buf[slot]


def embedding_lookup(ids_flat, w, *, tok_block=None, force_hbm=False):
    """out[i, :] = w[ids[i], :]"""
    n_tok = int(ids_flat.shape[0])
    V, E = w.shape
    itemsize = jnp.dtype(w.dtype).itemsize
    table_bytes = V * E * itemsize
    cap = _vmem_capacity_bytes()

    # Fast path threshold is generation-aware: ~16 MiB on 64 MiB v7x parts,
    # ~32 MiB on 128 MiB v5e/v6e parts.
    use_vmem_table = (not force_hbm) and table_bytes <= cap // 4

    if tok_block is None:
        tok_block = 64 if use_vmem_table else 32

    n_pad = _round_up(max(n_tok, 1), tok_block)
    if n_pad != n_tok:
        ids_flat = jnp.pad(ids_flat, (0, n_pad - n_tok))  # pad with valid id 0

    grid = (n_pad // tok_block,)

    if use_vmem_table:
        vmem_limit = int(min(table_bytes + 2 * tok_block * E * itemsize + (8 << 20),
                             max(cap - (8 << 20), 16 << 20)))
        out = pl.pallas_call(
            functools.partial(_embed_vmem_kernel, tok_block=tok_block, vocab_size=V),
            out_shape=jax.ShapeDtypeStruct((n_pad, E), w.dtype),
            grid_spec=pltpu.PrefetchScalarGridSpec(
                num_scalar_prefetch=1,                       # token ids -> SMEM
                grid=grid,
                in_specs=[pl.BlockSpec(memory_space=pltpu.MemorySpace.VMEM)],
                out_specs=pl.BlockSpec((tok_block, E), lambda i, ids: (i, 0)),
            ),
            compiler_params=pltpu.CompilerParams(
                dimension_semantics=("parallel",),  # disjoint output blocks
                vmem_limit_bytes=vmem_limit,
            ),
        )(ids_flat, w)
    else:
        out = pl.pallas_call(
            functools.partial(_embed_hbm_kernel, tok_block=tok_block, vocab_size=V),
            out_shape=jax.ShapeDtypeStruct((n_pad, E), w.dtype),
            grid_spec=pltpu.PrefetchScalarGridSpec(
                num_scalar_prefetch=1,
                grid=grid,
                in_specs=[pl.BlockSpec(memory_space=pl.ANY)],  # table stays in HBM
                out_specs=pl.BlockSpec((tok_block, E), lambda i, ids: (i, 0)),
                scratch_shapes=[
                    pltpu.VMEM((2, tok_block, E), w.dtype),    # double buffer
                    pltpu.SemaphoreType.DMA((2, tok_block)),
                ],
            ),
            compiler_params=pltpu.CompilerParams(
                # Cross-step prefetch carries state; keep the axis sequential.
                dimension_semantics=("arbitrary",),
            ),
        )(ids_flat, w)
    return out[:n_tok]


# ----------------------------------------------------------------------------
# Kernel 2: tied softmax projection  out = x @ w.T + b   (tk = E, no scratch)
# ----------------------------------------------------------------------------
def _proj_kernel(x_ref, w_ref, b_ref, o_ref, *, mxu_dtype):
    # x tile: (tm, E), w tile: (tn, E) -> contract both last dims on the MXU
    # (no in-kernel transpose materialized); accumulate in f32.
    a = x_ref[...]
    wt = w_ref[...]
    if mxu_dtype is not None:
        a = a.astype(mxu_dtype)
        wt = wt.astype(mxu_dtype)
    acc = lax.dot_general(a, wt, dimension_numbers=(((1,), (1,)), ((), ())),
                          preferred_element_type=jnp.float32)
    o_ref[...] = (acc + b_ref[...]).astype(o_ref.dtype)


def tied_projection(x_flat, w, b, *, v_logical=None, tm=None, tn=None,
                    use_bf16_mxu=True):
    M, E = x_flat.shape
    V_in = w.shape[0]
    V = V_in if v_logical is None else v_logical

    # Pad the vocab axis to a lane multiple.  Callers (the module) pre-pad once
    # so this is normally a no-op; padding here would re-copy the table per call.
    V_pad = _round_up(V_in, 128)
    if V_pad != V_in:
        w = jnp.pad(w, ((0, V_pad - V_in), (0, 0)))
        b = jnp.pad(b, (0, V_pad - V_in))
    b2 = b.reshape(1, V_pad)

    # Lane-dense vocab tiles (up to 1024); token tiles up to 512 so the dominant
    # HBM stream (the weight table, re-read M_pad/tm times) is minimized.
    if tn is None:
        tn = next(t for t in (1024, 512, 256, 128) if V_pad % t == 0)
    if tm is None:
        tm = min(512, _round_up(M, 128)) if M >= 128 else _round_up(max(M, 1), 8)

    budget = _vmem_budget_bytes()

    def footprint(tm_, tn_):  # double-buffered f32 tiles + bias
        return 4 * (2 * tm_ * E + 2 * tn_ * E + 2 * tm_ * tn_ + 2 * tn_)

    while footprint(tm, tn) + (8 << 20) > budget and (tm > 128 or tn > 128):
        if tn >= tm and tn > 128:
            tn //= 2
        else:
            tm //= 2
    # TODO(synk): add a K-split grid axis + f32 VMEM accumulator for very large E
    # where even 128x128 tiles with tk=E no longer fit the VMEM budget.

    M_pad = _round_up(max(M, 1), tm)
    if M_pad != M:
        x_flat = jnp.pad(x_flat, ((0, M_pad - M), (0, 0)))

    grid = (M_pad // tm, V_pad // tn)
    vmem_limit = int(min(footprint(tm, tn) + (16 << 20), budget))
    mxu_dtype = jnp.bfloat16 if use_bf16_mxu else None

    out = pl.pallas_call(
        functools.partial(_proj_kernel, mxu_dtype=mxu_dtype),
        out_shape=jax.ShapeDtypeStruct((M_pad, V_pad), x_flat.dtype),
        grid_spec=pltpu.PrefetchScalarGridSpec(
            num_scalar_prefetch=0,
            grid=grid,
            in_specs=[
                pl.BlockSpec((tm, E), lambda i, j: (i, 0)),   # activations (resident over j)
                pl.BlockSpec((tn, E), lambda i, j: (j, 0)),   # tied weights (streamed)
                pl.BlockSpec((1, tn), lambda i, j: (0, j)),   # bias
            ],
            out_specs=pl.BlockSpec((tm, tn), lambda i, j: (i, j)),
        ),
        compiler_params=pltpu.CompilerParams(
            dimension_semantics=("parallel", "parallel"),
            vmem_limit_bytes=vmem_limit,
        ),
    )(x_flat, w, b2)
    return out[:M, :V]


# ----------------------------------------------------------------------------
# Module wrapper (mirrors the PyTorch TiedEmbeddingSoftmax forward)
# ----------------------------------------------------------------------------
class TiedEmbeddingSoftmax:
    def __init__(self, vocab_size, embedding_size, key):
        self.vocab_size = int(vocab_size)
        self.embedding_size = int(embedding_size)
        self._v_pad = _round_up(self.vocab_size, 128)
        # torch.normal(0.0, 0.01, size=(V, E)) ; torch.zeros(V)
        w = 0.01 * jax.random.normal(key, (vocab_size, embedding_size), dtype=jnp.float32)
        b = jnp.zeros((vocab_size,), dtype=jnp.float32)
        self.set_weights(w=w, b=b)

    def set_weights(self, w=None, b=None):
        """Update parameters; keeps lane-padded copies so the projection kernel
        never has to re-pad the full table on every call."""
        pad = self._v_pad - self.vocab_size
        if w is not None:
            self.w = w
            self._w_pad = jnp.pad(w, ((0, pad), (0, 0))) if pad else w
        if b is not None:
            self.b = b
            self._b_pad = jnp.pad(b, (0, pad)) if pad else b

    def __call__(self, inputs, embed=True):
        if embed:
            # integer ids of arbitrary shape -> inputs.shape + (E,)
            ids_flat = inputs.reshape(-1).astype(jnp.int32)
            out = embedding_lookup(ids_flat, self.w)
            return out.reshape(inputs.shape + (self.embedding_size,))
        else:
            # (..., E) float -> (..., V) logits = x @ w.T + b
            lead = inputs.shape[:-1]
            x_flat = inputs.reshape(-1, inputs.shape[-1])
            out = tied_projection(x_flat, self._w_pad, self._b_pad,
                                  v_logical=self.vocab_size)
            return out.reshape(lead + (self.vocab_size,))


if __name__ == "__main__":
    # Module-consistent sizes: embedding_dim matches the spec (1280); the real
    # vocab comes from a file, so use a small stand-in vocab of 2048.
    vocab_size = 2048
    embedding_dim = 1280
    batch, seq = 2, 8

    key = jax.random.PRNGKey(0)
    k_w, k_b, k_ids = jax.random.split(key, 3)

    model = TiedEmbeddingSoftmax(vocab_size, embedding_dim, k_w)
    # Use a non-zero bias so the fused bias add is actually checked
    # (the module initializes it to zeros, which would hide a missing add).
    model.set_weights(b=0.01 * jax.random.normal(k_b, (vocab_size,), dtype=jnp.float32))

    ids = jax.random.randint(k_ids, (batch, seq), 0, vocab_size, dtype=jnp.int32)

    # embed=True path (VMEM-resident fast gather): (2, 8) int32 -> (2, 8, 1280) f32
    emb = jax.block_until_ready(model(ids, embed=True))

    # Also exercise the HBM-resident double-buffered DMA gather fallback.
    emb_hbm = jax.block_until_ready(
        embedding_lookup(ids.reshape(-1), model.w, force_hbm=True)
    ).reshape(batch, seq, embedding_dim)

    # embed=False path: (2, 8, 1280) f32 -> (2, 8, 2048) f32
    logits = jax.block_until_ready(model(emb, embed=False))

    # Reference check in plain JAX (f32).
    emb_ref = jnp.take(model.w, ids, axis=0)
    logits_ref = jnp.einsum("bse,ve->bsv", emb_ref, model.w) + model.b

    np.testing.assert_allclose(np.asarray(emb), np.asarray(emb_ref),
                               rtol=1e-5, atol=1e-6)
    np.testing.assert_allclose(np.asarray(emb_hbm), np.asarray(emb_ref),
                               rtol=1e-5, atol=1e-6)
    # bf16 MXU operands (f32 accumulation) vs f32 reference: tolerance chosen to
    # absorb bf16 input rounding while still catching a missing bias add.
    np.testing.assert_allclose(np.asarray(logits), np.asarray(logits_ref),
                               rtol=2e-2, atol=5e-4)

    assert emb.shape == (batch, seq, embedding_dim)
    assert logits.shape == (batch, seq, vocab_size)
    print("KERNEL_OK")
</pallas_src>

<mosaic_0001>
module attributes {stable_mosaic.version = 11 : i64} {
  func.func @_embed_vmem_kernel(%arg0: i32, %arg1: memref<64xi32, #tpu.memory_space<smem>>, %arg2: memref<2048x1280xf32, #tpu.memory_space<vmem>>, %arg3: memref<64x1280xf32, #tpu.memory_space<vmem>>) attributes {dimension_semantics = [#tpu.dimension_semantics<parallel>], iteration_bounds = array<i64: 1>, scalar_prefetch = 1 : i64, scratch_operands = 0 : i64, tpu.core_type = #tpu.core_type<tc>, window_params = [{pipeline_mode = #tpu.pipeline_mode<synchronous>, transform_indices = @transform_0, window_bounds = array<i64: 2048, 1280>}, {transform_indices = @transform_1, window_bounds = array<i64: 64, 1280>}]} {
    %c64_i32 = arith.constant 64 : i32
    %0 = arith.muli %arg0, %c64_i32 : i32
    %c0_i32 = arith.constant 0 : i32
    %1 = arith.addi %0, %c0_i32 : i32
    %2 = arith.index_cast %1 : i32 to index
    %3 = memref.load %arg1[%2] : memref<64xi32, #tpu.memory_space<smem>>
    %c0_i32_0 = arith.constant 0 : i32
    %c2047_i32 = arith.constant 2047 : i32
    %4 = arith.maxsi %c0_i32_0, %3 : i32
    %5 = arith.minsi %c2047_i32, %4 : i32
    %6 = arith.index_cast %5 : i32 to index
    %c0 = arith.constant 0 : index
    %7 = vector.load %arg2[%6, %c0] : memref<2048x1280xf32, #tpu.memory_space<vmem>>, vector<1x1280xf32>
    %c0_1 = arith.constant 0 : index
    %c0_2 = arith.constant 0 : index
    %8 = vector.load %arg3[%c0_1, %c0_2] : memref<64x1280xf32, #tpu.memory_space<vmem>>, vector<1x1280xf32>
    tpu.vector_store %arg3[%c0_1, %c0_2], %7 {strides = array<i32>} : memref<64x1280xf32, #tpu.memory_space<vmem>>, vector<1x1280xf32>,
    %c1_i32 = arith.constant 1 : i32
    %9 = arith.addi %0, %c1_i32 : i32
    %10 = arith.index_cast %9 : i32 to index
    %11 = memref.load %arg1[%10] : memref<64xi32, #tpu.memory_space<smem>>
    %c0_i32_3 = arith.constant 0 : i32
    %c2047_i32_4 = arith.constant 2047 : i32
    %12 = arith.maxsi %c0_i32_3, %11 : i32
    %13 = arith.minsi %c2047_i32_4, %12 : i32
    %14 = arith.index_cast %13 : i32 to index
    %c0_5 = arith.constant 0 : index
    %15 = vector.load %arg2[%14, %c0_5] : memref<2048x1280xf32, #tpu.memory_space<vmem>>, vector<1x1280xf32>
    %c1 = arith.constant 1 : index
    %c0_6 = arith.constant 0 : index
    %16 = vector.load %arg3[%c1, %c0_6] : memref<64x1280xf32, #tpu.memory_space<vmem>>, vector<1x1280xf32>
    tpu.vector_store %arg3[%c1, %c0_6], %15 {strides = array<i32>} : memref<64x1280xf32, #tpu.memory_space<vmem>>, vector<1x1280xf32>,
    %c2_i32 = arith.constant 2 : i32
    %17 = arith.addi %0, %c2_i32 : i32
    %18 = arith.index_cast %17 : i32 to index
    %19 = memref.load %arg1[%18] : memref<64xi32, #tpu.memory_space<smem>>
    %c0_i32_7 = arith.constant 0 : i32
    %c2047_i32_8 = arith.constant 2047 : i32
    %20 = arith.maxsi %c0_i32_7, %19 : i32
    %21 = arith.minsi %c2047_i32_8, %20 : i32
    %22 = arith.index_cast %21 : i32 to index
    %c0_9 = arith.constant 0 : index
    %23 = vector.load %arg2[%22, %c0_9] : memref<2048x1280xf32, #tpu.memory_space<vmem>>, vector<1x1280xf32>
    %c2 = arith.constant 2 : index
    %c0_10 = arith.constant 0 : index
    %24 = vector.load %arg3[%c2, %c0_10] : memref<64x1280xf32, #tpu.memory_space<vmem>>, vector<1x1280xf32>
    tpu.vector_store %arg3[%c2, %c0_10], %23 {strides = array<i32>} : memref<64x1280xf32, #tpu.memory_space<vmem>>, vector<1x1280xf32>,
    %c3_i32 = arith.constant 3 : i32
    %25 = arith.addi %0, %c3_i32 : i32
    %26 = arith.index_cast %25 : i32 to index
    %27 = memref.load %arg1[%26] : memref<64xi32, #tpu.memory_space<smem>>
    %c0_i32_11 = arith.constant 0 : i32
    %c2047_i32_12 = arith.constant 2047 : i32
    %28 = arith.maxsi %c0_i32_11, %27 : i32
    %29 = arith.minsi %c2047_i32_12, %28 : i32
    %30 = arith.index_cast %29 : i32 to index
    %c0_13 = arith.constant 0 : index
    %31 = vector.load %arg2[%30, %c0_13] : memref<2048x1280xf32, #tpu.memory_space<vmem>>, vector<1x1280xf32>
    %c3 = arith.constant 3 : index
    %c0_14 = arith.constant 0 : index
    %32 = vector.load %arg3[%c3, %c0_14] : memref<64x1280xf32, #tpu.memory_space<vmem>>, vector<1x1280xf32>
    tpu.vector_store %arg3[%c3, %c0_14], %31 {strides = array<i32>} : memref<64x1280xf32, #tpu.memory_space<vmem>>, vector<1x1280xf32>,
    %c4_i32 = arith.constant 4 : i32
    %33 = arith.addi %0, %c4_i32 : i32
    %34 = arith.index_cast %33 : i32 to index
    %35 = memref.load %arg1[%34] : memref<64xi32, #tpu.memory_space<smem>>
    %c0_i32_15 = arith.constant 0 : i32
    %c2047_i32_16 = arith.constant 2047 : i32
    %36 = arith.maxsi %c0_i32_15, %35 : i32
    %37 = arith.minsi %c2047_i32_16, %36 : i32
    %38 = arith.index_cast %37 : i32 to index
    %c0_17 = arith.constant 0 : index
    %39 = vector.load %arg2[%38, %c0_17] : memref<2048x1280xf32, #tpu.memory_space<vmem>>, vector<1x1280xf32>
    %c4 = arith.constant 4 : index
    %c0_18 = arith.constant 0 : index
    %40 = vector.load %arg3[%c4, %c0_18] : memref<64x1280xf32, #tpu.memory_space<vmem>>, vector<1x1280xf32>
    tpu.vector_store %arg3[%c4, %c0_18], %39 {strides = array<i32>} : memref<64x1280xf32, #tpu.memory_space<vmem>>, vector<1x1280xf32>,
    %c5_i32 = arith.constant 5 : i32
    %41 = arith.addi %0, %c5_i32 : i32
    %42 = arith.index_cast %41 : i32 to index
    %43 = memref.load %arg1[%42] : memref<64xi32, #tpu.memory_space<smem>>
    %c0_i32_19 = arith.constant 0 : i32
    %c2047_i32_20 = arith.constant 2047 : i32
    %44 = arith.maxsi %c0_i32_19, %43 : i32
    %45 = arith.minsi %c2047_i32_20, %44 : i32
    %46 = arith.index_cast %45 : i32 to index
    %c0_21 = arith.constant 0 : index
    %47 = vector.load %arg2[%46, %c0_21] : memref<2048x1280xf32, #tpu.memory_space<vmem>>, vector<1x1280xf32>
    %c5 = arith.constant 5 : index
    %c0_22 = arith.constant 0 : index
    %48 = vector.load %arg3[%c5, %c0_22] : memref<64x1280xf32, #tpu.memory_space<vmem>>, vector<1x1280xf32>
    tpu.vector_store %arg3[%c5, %c0_22], %47 {strides = array<i32>} : memref<64x1280xf32, #tpu.memory_space<vmem>>, vector<1x1280xf32>,
    %c6_i32 = arith.constant 6 : i32
    %49 = arith.addi %0, %c6_i32 : i32
    %50 = arith.index_cast %49 : i32 to index
    %51 = memref.load %arg1[%50] : memref<64xi32, #tpu.memory_space<smem>>
    %c0_i32_23 = arith.constant 0 : i32
    %c2047_i32_24 = arith.constant 2047 : i32
    %52 = arith.maxsi %c0_i32_23, %51 : i32
    %53 = arith.minsi %c2047_i32_24, %52 : i32
    %54 = arith.index_cast %53 : i32 to index
    %c0_25 = arith.constant 0 : index
    %55 = vector.load %arg2[%54, %c0_25] : memref<2048x1280xf32, #tpu.memory_space<vmem>>, vector<1x1280xf32>
    %c6 = arith.constant 6 : index
    %c0_26 = arith.constant 0 : index
    %56 = vector.load %arg3[%c6, %c0_26] : memref<64x1280xf32, #tpu.memory_space<vmem>>, vector<1x1280xf32>
    tpu.vector_store %arg3[%c6, %c0_26], %55 {strides = array<i32>} : memref<64x1280xf32, #tpu.memory_space<vmem>>, vector<1x1280xf32>,
    %c7_i32 = arith.constant 7 : i32
    %57 = arith.addi %0, %c7_i32 : i32
    %58 = arith.index_cast %57 : i32 to index
    %59 = memref.load %arg1[%58] : memref<64xi32, #tpu.memory_space<smem>>
    %c0_i32_27 = arith.constant 0 : i32
    %c2047_i32_28 = arith.constant 2047 : i32
    %60 = arith.maxsi %c0_i32_27, %59 : i32
    %61 = arith.minsi %c2047_i32_28, %60 : i32
    %62 = arith.index_cast %61 : i32 to index
    %c0_29 = arith.constant 0 : index
    %63 = vector.load %arg2[%62, %c0_29] : memref<2048x1280xf32, #tpu.memory_space<vmem>>, vector<1x1280xf32>
    %c7 = arith.constant 7 : index
    %c0_30 = arith.constant 0 : index
    %64 = vector.load %arg3[%c7, %c0_30] : memref<64x1280xf32, #tpu.memory_space<vmem>>, vector<1x1280xf32>
    tpu.vector_store %arg3[%c7, %c0_30], %63 {strides = array<i32>} : memref<64x1280xf32, #tpu.memory_space<vmem>>, vector<1x1280xf32>,
    %c8_i32 = arith.constant 8 : i32
    %65 = arith.addi %0, %c8_i32 : i32
    %66 = arith.index_cast %65 : i32 to index
    %67 = memref.load %arg1[%66] : memref<64xi32, #tpu.memory_space<smem>>
    %c0_i32_31 = arith.constant 0 : i32
    %c2047_i32_32 = arith.constant 2047 : i32
    %68 = arith.maxsi %c0_i32_31, %67 : i32
    %69 = arith.minsi %c2047_i32_32, %68 : i32
    %70 = arith.index_cast %69 : i32 to index
    %c0_33 = arith.constant 0 : index
    %71 = vector.load %arg2[%70, %c0_33] : memref<2048x1280xf32, #tpu.memory_space<vmem>>, vector<1x1280xf32>
    %c8 = arith.constant 8 : index
    %c0_34 = arith.constant 0 : index
    %72 = vector.load %arg3[%c8, %c0_34] : memref<64x1280xf32, #tpu.memory_space<vmem>>, vector<1x1280xf32>
    tpu.vector_store %arg3[%c8, %c0_34], %71 {strides = array<i32>} : memref<64x1280xf32, #tpu.memory_space<vmem>>, vector<1x1280xf32>,
    %c9_i32 = arith.constant 9 : i32
    %73 = arith.addi %0, %c9_i32 : i32
    %74 = arith.index_cast %73 : i32 to index
    %75 = memref.load %arg1[%74] : memref<64xi32, #tpu.memory_space<smem>>
    %c0_i32_35 = arith.constant 0 : i32
    %c2047_i32_36 = arith.constant 2047 : i32
    %76 = arith.maxsi %c0_i32_35, %75 : i32
    %77 = arith.minsi %c2047_i32_36, %76 : i32
    %78 = arith.index_cast %77 : i32 to index
    %c0_37 = arith.constant 0 : index
    %79 = vector.load %arg2[%78, %c0_37] : memref<2048x1280xf32, #tpu.memory_space<vmem>>, vector<1x1280xf32>
    %c9 = arith.constant 9 : index
    %c0_38 = arith.constant 0 : index
    %80 = vector.load %arg3[%c9, %c0_38] : memref<64x1280xf32, #tpu.memory_space<vmem>>, vector<1x1280xf32>
    tpu.vector_store %arg3[%c9, %c0_38], %79 {strides = array<i32>} : memref<64x1280xf32, #tpu.memory_space<vmem>>, vector<1x1280xf32>,
    %c10_i32 = arith.constant 10 : i32
    %81 = arith.addi %0, %c10_i32 : i32
    %82 = arith.index_cast %81 : i32 to index
    %83 = memref.load %arg1[%82] : memref<64xi32, #tpu.memory_space<smem>>
    %c0_i32_39 = arith.constant 0 : i32
    %c2047_i32_40 = arith.constant 2047 : i32
    %84 = arith.maxsi %c0_i32_39, %83 : i32
    %85 = arith.minsi %c2047_i32_40, %84 : i32
    %86 = arith.index_cast %85 : i32 to index
    %c0_41 = arith.constant 0 : index
    %87 = vector.load %arg2[%86, %c0_41] : memref<2048x1280xf32, #tpu.memory_space<vmem>>, vector<1x1280xf32>
    %c10 = arith.constant 10 : index
    %c0_42 = arith.constant 0 : index
    %88 = vector.load %arg3[%c10, %c0_42] : memref<64x1280xf32, #tpu.memory_space<vmem>>, vector<1x1280xf32>
    tpu.vector_store %arg3[%c10, %c0_42], %87 {strides = array<i32>} : memref<64x1280xf32, #tpu.memory_space<vmem>>, vector<1x1280xf32>,
    %c11_i32 = arith.constant 11 : i32
    %89 = arith.addi %0, %c11_i32 : i32
    %90 = arith.index_cast %89 : i32 to index
    %91 = memref.load %arg1[%90] : memref<64xi32, #tpu.memory_space<smem>>
    %c0_i32_43 = arith.constant 0 : i32
    %c2047_i32_44 = arith.constant 2047 : i32
    %92 = arith.maxsi %c0_i32_43, %91 : i32
    %93 = arith.minsi %c2047_i32_44, %92 : i32
    %94 = arith.index_cast %93 : i32 to index
    %c0_45 = arith.constant 0 : index
    %95 = vector.load %arg2[%94, %c0_45] : memref<2048x1280xf32, #tpu.memory_space<vmem>>, vector<1x1280xf32>
    %c11 = arith.constant 11 : index
    %c0_46 = arith.constant 0 : index
    %96 = vector.load %arg3[%c11, %c0_46] : memref<64x1280xf32, #tpu.memory_space<vmem>>, vector<1x1280xf32>
    tpu.vector_store %arg3[%c11, %c0_46], %95 {strides = array<i32>} : memref<64x1280xf32, #tpu.memory_space<vmem>>, vector<1x1280xf32>,
    %c12_i32 = arith.constant 12 : i32
    %97 = arith.addi %0, %c12_i32 : i32
    %98 = arith.index_cast %97 : i32 to index
    %99 = memref.load %arg1[%98] : memref<64xi32, #tpu.memory_space<smem>>
    %c0_i32_47 = arith.constant 0 : i32
    %c2047_i32_48 = arith.constant 2047 : i32
    %100 = arith.maxsi %c0_i32_47, %99 : i32
    %101 = arith.minsi %c2047_i32_48, %100 : i32
    %102 = arith.index_cast %101 : i32 to index
    %c0_49 = arith.constant 0 : index
    %103 = vector.load %arg2[%102, %c0_49] : memref<2048x1280xf32, #tpu.memory_space<vmem>>, vector<1x1280xf32>
    %c12 = arith.constant 12 : index
    %c0_50 = arith.constant 0 : index
    %104 = vector.load %arg3[%c12, %c0_50] : memref<64x1280xf32, #tpu.memory_space<vmem>>, vector<1x1280xf32>
    tpu.vector_store %arg3[%c12, %c0_50], %103 {strides = array<i32>} : memref<64x1280xf32, #tpu.memory_space<vmem>>, vector<1x1280xf32>,
    %c13_i32 = arith.constant 13 : i32
    %105 = arith.addi %0, %c13_i32 : i32
    %106 = arith.index_cast %105 : i32 to index
    %107 = memref.load %arg1[%106] : memref<64xi32, #tpu.memory_space<smem>>
    %c0_i32_51 = arith.constant 0 : i32
    %c2047_i32_52 = arith.constant 2047 : i32
    %108 = arith.maxsi %c0_i32_51, %107 : i32
    %109 = arith.minsi %c2047_i32_52, %108 : i32
    %110 = arith.index_cast %109 : i32 to index
    %c0_53 = arith.constant 0 : index
    %111 = vector.load %arg2[%110, %c0_53] : memref<2048x1280xf32, #tpu.memory_space<vmem>>, vector<1x1280xf32>
    %c13 = arith.constant 13 : index
    %c0_54 = arith.constant 0 : index
    %112 = vector.load %arg3[%c13, %c0_54] : memref<64x1280xf32, #tpu.memory_space<vmem>>, vector<1x1280xf32>
    tpu.vector_store %arg3[%c13, %c0_54], %111 {strides = array<i32>} : memref<64x1280xf32, #tpu.memory_space<vmem>>, vector<1x1280xf32>,
    %c14_i32 = arith.constant 14 : i32
    %113 = arith.addi %0, %c14_i32 : i32
    %114 = arith.index_cast %113 : i32 to index
    %115 = memref.load %arg1[%114] : memref<64xi32, #tpu.memory_space<smem>>
    %c0_i32_55 = arith.constant 0 : i32
    %c2047_i32_56 = arith.constant 2047 : i32
    %116 = arith.maxsi %c0_i32_55, %115 : i32
    %117 = arith.minsi %c2047_i32_56, %116 : i32
    %118 = arith.index_cast %117 : i32 to index
    %c0_57 = arith.constant 0 : index
    %119 = vector.load %arg2[%118, %c0_57] : memref<2048x1280xf32, #tpu.memory_space<vmem>>, vector<1x1280xf32>
    %c14 = arith.constant 14 : index
    %c0_58 = arith.constant 0 : index
    %120 = vector.load %arg3[%c14, %c0_58] : memref<64x1280xf32, #tpu.memory_space<vmem>>, vector<1x1280xf32>
    tpu.vector_store %arg3[%c14, %c0_58], %119 {strides = array<i32>} : memref<64x1280xf32, #tpu.memory_space<vmem>>, vector<1x1280xf32>,
    %c15_i32 = arith.constant 15 : i32
    %121 = arith.addi %0, %c15_i32 : i32
    %122 = arith.index_cast %121 : i32 to index
    %123 = memref.load %arg1[%122] : memref<64xi32, #tpu.memory_space<smem>>
    %c0_i32_59 = arith.constant 0 : i32
    %c2047_i32_60 = arith.constant 2047 : i32
    %124 = arith.maxsi %c0_i32_59, %123 : i32
    %125 = arith.minsi %c2047_i32_60, %124 : i32
    %126 = arith.index_cast %125 : i32 to index
    %c0_61 = arith.constant 0 : index
    %127 = vector.load %arg2[%126, %c0_61] : memref<2048x1280xf32, #tpu.memory_space<vmem>>, vector<1x1280xf32>
    %c15 = arith.constant 15 : index
    %c0_62 = arith.constant 0 : index
    %128 = vector.load %arg3[%c15, %c0_62] : memref<64x1280xf32, #tpu.memory_space<vmem>>, vector<1x1280xf32>
    tpu.vector_store %arg3[%c15, %c0_62], %127 {strides = array<i32>} : memref<64x1280xf32, #tpu.memory_space<vmem>>, vector<1x1280xf32>,
    %c16_i32 = arith.constant 16 : i32
    %129 = arith.addi %0, %c16_i32 : i32
    %130 = arith.index_cast %129 : i32 to index
    %131 = memref.load %arg1[%130] : memref<64xi32, #tpu.memory_space<smem>>
    %c0_i32_63 = arith.constant 0 : i32
    %c2047_i32_64 = arith.constant 2047 : i32
    %132 = arith.maxsi %c0_i32_63, %131 : i32
    %133 = arith.minsi %c2047_i32_64, %132 : i32
    %134 = arith.index_cast %133 : i32 to index
    %c0_65 = arith.constant 0 : index
    %135 = vector.load %arg2[%134, %c0_65] : memref<2048x1280xf32, #tpu.memory_space<vmem>>, vector<1x1280xf32>
    %c16 = arith.constant 16 : index
    %c0_66 = arith.constant 0 : index
    %136 = vector.load %arg3[%c16, %c0_66] : memref<64x1280xf32, #tpu.memory_space<vmem>>, vector<1x1280xf32>
    tpu.vector_store %arg3[%c16, %c0_66], %135 {strides = array<i32>} : memref<64x1280xf32, #tpu.memory_space<vmem>>, vector<1x1280xf32>,
    %c17_i32 = arith.constant 17 : i32
    %137 = arith.addi %0, %c17_i32 : i32
    %138 = arith.index_cast %137 : i32 to index
    %139 = memref.load %arg1[%138] : memref<64xi32, #tpu.memory_space<smem>>
    %c0_i32_67 = arith.constant 0 : i32
    %c2047_i32_68 = arith.constant 2047 : i32
    %140 = arith.maxsi %c0_i32_67, %139 : i32
    %141 = arith.minsi %c2047_i32_68, %140 : i32
    %142 = arith.index_cast %141 : i32 to index
    %c0_69 = arith.constant 0 : index
    %143 = vector.load %arg2[%142, %c0_69] : memref<2048x1280xf32, #tpu.memory_space<vmem>>, vector<1x1280xf32>
    %c17 = arith.constant 17 : index
    %c0_70 = arith.constant 0 : index
    %144 = vector.load %arg3[%c17, %c0_70] : memref<64x1280xf32, #tpu.memory_space<vmem>>, vector<1x1280xf32>
    tpu.vector_store %arg3[%c17, %c0_70], %143 {strides = array<i32>} : memref<64x1280xf32, #tpu.memory_space<vmem>>, vector<1x1280xf32>,
    %c18_i32 = arith.constant 18 : i32
    %145 = arith.addi %0, %c18_i32 : i32
    %146 = arith.index_cast %145 : i32 to index
    %147 = memref.load %arg1[%146] : memref<64xi32, #tpu.memory_space<smem>>
    %c0_i32_71 = arith.constant 0 : i32
    %c2047_i32_72 = arith.constant 2047 : i32
    %148 = arith.maxsi %c0_i32_71, %147 : i32
    %149 = arith.minsi %c2047_i32_72, %148 : i32
    %150 = arith.index_cast %149 : i32 to index
    %c0_73 = arith.constant 0 : index
    %151 = vector.load %arg2[%150, %c0_73] : memref<2048x1280xf32, #tpu.memory_space<vmem>>, vector<1x1280xf32>
    %c18 = arith.constant 18 : index
    %c0_74 = arith.constant 0 : index
    %152 = vector.load %arg3[%c18, %c0_74] : memref<64x1280xf32, #tpu.memory_space<vmem>>, vector<1x1280xf32>
    tpu.vector_store %arg3[%c18, %c0_74], %151 {strides = array<i32>} : memref<64x1280xf32, #tpu.memory_space<vmem>>, vector<1x1280xf32>,
    %c19_i32 = arith.constant 19 : i32
    %153 = arith.addi %0, %c19_i32 : i32
    %154 = arith.index_cast %153 : i32 to index
    %155 = memref.load %arg1[%154] : memref<64xi32, #tpu.memory_space<smem>>
    %c0_i32_75 = arith.constant 0 : i32
    %c2047_i32_76 = arith.constant 2047 : i32
    %156 = arith.maxsi %c0_i32_75, %155 : i32
    %157 = arith.minsi %c2047_i32_76, %156 : i32
    %158 = arith.index_cast %157 : i32 to index
    %c0_77 = arith.constant 0 : index
    %159 = vector.load %arg2[%158, %c0_77] : memref<2048x1280xf32, #tpu.memory_space<vmem>>, vector<1x1280xf32>
    %c19 = arith.constant 19 : index
    %c0_78 = arith.constant 0 : index
    %160 = vector.load %arg3[%c19, %c0_78] : memref<64x1280xf32, #tpu.memory_space<vmem>>, vector<1x1280xf32>
    tpu.vector_store %arg3[%c19, %c0_78], %159 {strides = array<i32>} : memref<64x1280xf32, #tpu.memory_space<vmem>>, vector<1x1280xf32>,
    %c20_i32 = arith.constant 20 : i32
    %161 = arith.addi %0, %c20_i32 : i32
    %162 = arith.index_cast %161 : i32 to index
    %163 = memref.load %arg1[%162] : memref<64xi32, #tpu.memory_space<smem>>
    %c0_i32_79 = arith.constant 0 : i32
    %c2047_i32_80 = arith.constant 2047 : i32
    %164 = arith.maxsi %c0_i32_79, %163 : i32
    %165 = arith.minsi %c2047_i32_80, %164 : i32
    %166 = arith.index_cast %165 : i32 to index
    %c0_81 = arith.constant 0 : index
    %167 = vector.load %arg2[%166, %c0_81] : memref<2048x1280xf32, #tpu.memory_space<vmem>>, vector<1x1280xf32>
    %c20 = arith.constant 20 : index
    %c0_82 = arith.constant 0 : index
    %168 = vector.load %arg3[%c20, %c0_82] : memref<64x1280xf32, #tpu.memory_space<vmem>>, vector<1x1280xf32>
    tpu.vector_store %arg3[%c20, %c0_82], %167 {strides = array<i32>} : memref<64x1280xf32, #tpu.memory_space<vmem>>, vector<1x1280xf32>,
    %c21_i32 = arith.constant 21 : i32
    %169 = arith.addi %0, %c21_i32 : i32
    %170 = arith.index_cast %169 : i32 to index
    %171 = memref.load %arg1[%170] : memref<64xi32, #tpu.memory_space<smem>>
    %c0_i32_83 = arith.constant 0 : i32
    %c2047_i32_84 = arith.constant 2047 : i32
    %172 = arith.maxsi %c0_i32_83, %171 : i32
    %173 = arith.minsi %c2047_i32_84, %172 : i32
    %174 = arith.index_cast %173 : i32 to index
    %c0_85 = arith.constant 0 : index
    %175 = vector.load %arg2[%174, %c0_85] : memref<2048x1280xf32, #tpu.memory_space<vmem>>, vector<1x1280xf32>
    %c21 = arith.constant 21 : index
    %c0_86 = arith.constant 0 : index
    %176 = vector.load %arg3[%c21, %c0_86] : memref<64x1280xf32, #tpu.memory_space<vmem>>, vector<1x1280xf32>
    tpu.vector_store %arg3[%c21, %c0_86], %175 {strides = array<i32>} : memref<64x1280xf32, #tpu.memory_space<vmem>>, vector<1x1280xf32>,
    %c22_i32 = arith.constant 22 : i32
    %177 = arith.addi %0, %c22_i32 : i32
    %178 = arith.index_cast %177 : i32 to index
    %179 = memref.load %arg1[%178] : memref<64xi32, #tpu.memory_space<smem>>
    %c0_i32_87 = arith.constant 0 : i32
    %c2047_i32_88 = arith.constant 2047 : i32
    %180 = arith.maxsi %c0_i32_87, %179 : i32
    %181 = arith.minsi %c2047_i32_88, %180 : i32
    %182 = arith.index_cast %181 : i32 to index
    %c0_89 = arith.constant 0 : index
    %183 = vector.load %arg2[%182, %c0_89] : memref<2048x1280xf32, #tpu.memory_space<vmem>>, vector<1x1280xf32>
    %c22 = arith.constant 22 : index
    %c0_90 = arith.constant 0 : index
    %184 = vector.load %arg3[%c22, %c0_90] : memref<64x1280xf32, #tpu.memory_space<vmem>>, vector<1x1280xf32>
    tpu.vector_store %arg3[%c22, %c0_90], %183 {strides = array<i32>} : memref<64x1280xf32, #tpu.memory_space<vmem>>, vector<1x1280xf32>,
    %c23_i32 = arith.constant 23 : i32
    %185 = arith.addi %0, %c23_i32 : i32
    %186 = arith.index_cast %185 : i32 to index
    %187 = memref.load %arg1[%186] : memref<64xi32, #tpu.memory_space<smem>>
    %c0_i32_91 = arith.constant 0 : i32
    %c2047_i32_92 = arith.constant 2047 : i32
    %188 = arith.maxsi %c0_i32_91, %187 : i32
    %189 = arith.minsi %c2047_i32_92, %188 : i32
    %190 = arith.index_cast %189 : i32 to index
    %c0_93 = arith.constant 0 : index
    %191 = vector.load %arg2[%190, %c0_93] : memref<2048x1280xf32, #tpu.memory_space<vmem>>, vector<1x1280xf32>
    %c23 = arith.constant 23 : index
    %c0_94 = arith.constant 0 : index
    %192 = vector.load %arg3[%c23, %c0_94] : memref<64x1280xf32, #tpu.memory_space<vmem>>, vector<1x1280xf32>
    tpu.vector_store %arg3[%c23, %c0_94], %191 {strides = array<i32>} : memref<64x1280xf32, #tpu.memory_space<vmem>>, vector<1x1280xf32>,
    %c24_i32 = arith.constant 24 : i32
    %193 = arith.addi %0, %c24_i32 : i32
    %194 = arith.index_cast %193 : i32 to index
    %195 = memref.load %arg1[%194] : memref<64xi32, #tpu.memory_space<smem>>
    %c0_i32_95 = arith.constant 0 : i32
    %c2047_i32_96 = arith.constant 2047 : i32
    %196 = arith.maxsi %c0_i32_95, %195 : i32
    %197 = arith.minsi %c2047_i32_96, %196 : i32
    %198 = arith.index_cast %197 : i32 to index
    %c0_97 = arith.constant 0 : index
    %199 = vector.load %arg2[%198, %c0_97] : memref<2048x1280xf32, #tpu.memory_space<vmem>>, vector<1x1280xf32>
    %c24 = arith.constant 24 : index
    %c0_98 = arith.constant 0 : index
    %200 = vector.load %arg3[%c24, %c0_98] : memref<64x1280xf32, #tpu.memory_space<vmem>>, vector<1x1280xf32>
    tpu.vector_store %arg3[%c24, %c0_98], %199 {strides = array<i32>} : memref<64x1280xf32, #tpu.memory_space<vmem>>, vector<1x1280xf32>,
    %c25_i32 = arith.constant 25 : i32
    %201 = arith.addi %0, %c25_i32 : i32
    %202 = arith.index_cast %201 : i32 to index
    %203 = memref.load %arg1[%202] : memref<64xi32, #tpu.memory_space<smem>>
    %c0_i32_99 = arith.constant 0 : i32
    %c2047_i32_100 = arith.constant 2047 : i32
    %204 = arith.maxsi %c0_i32_99, %203 : i32
    %205 = arith.minsi %c2047_i32_100, %204 : i32
    %206 = arith.index_cast %205 : i32 to index
    %c0_101 = arith.constant 0 : index
    %207 = vector.load %arg2[%206, %c0_101] : memref<2048x1280xf32, #tpu.memory_space<vmem>>, vector<1x1280xf32>
    %c25 = arith.constant 25 : index
    %c0_102 = arith.constant 0 : index
    %208 = vector.load %arg3[%c25, %c0_102] : memref<64x1280xf32, #tpu.memory_space<vmem>>, vector<1x1280xf32>
    tpu.vector_store %arg3[%c25, %c0_102], %207 {strides = array<i32>} : memref<64x1280xf32, #tpu.memory_space<vmem>>, vector<1x1280xf32>,
    %c26_i32 = arith.constant 26 : i32
    %209 = arith.addi %0, %c26_i32 : i32
    %210 = arith.index_cast %209 : i32 to index
    %211 = memref.load %arg1[%210] : memref<64xi32, #tpu.memory_space<smem>>
    %c0_i32_103 = arith.constant 0 : i32
    %c2047_i32_104 = arith.constant 2047 : i32
    %212 = arith.maxsi %c0_i32_103, %211 : i32
    %213 = arith.minsi %c2047_i32_104, %212 : i32
    %214 = arith.index_cast %213 : i32 to index
    %c0_105 = arith.constant 0 : index
    %215 = vector.load %arg2[%214, %c0_105] : memref<2048x1280xf32, #tpu.memory_space<vmem>>, vector<1x1280xf32>
    %c26 = arith.constant 26 : index
    %c0_106 = arith.constant 0 : index
    %216 = vector.load %arg3[%c26, %c0_106] : memref<64x1280xf32, #tpu.memory_space<vmem>>, vector<1x1280xf32>
    tpu.vector_store %arg3[%c26, %c0_106], %215 {strides = array<i32>} : memref<64x1280xf32, #tpu.memory_space<vmem>>, vector<1x1280xf32>,
    %c27_i32 = arith.constant 27 : i32
    %217 = arith.addi %0, %c27_i32 : i32
    %218 = arith.index_cast %217 : i32 to index
    %219 = memref.load %arg1[%218] : memref<64xi32, #tpu.memory_space<smem>>
    %c0_i32_107 = arith.constant 0 : i32
    %c2047_i32_108 = arith.constant 2047 : i32
    %220 = arith.maxsi %c0_i32_107, %219 : i32
    %221 = arith.minsi %c2047_i32_108, %220 : i32
    %222 = arith.index_cast %221 : i32 to index
    %c0_109 = arith.constant 0 : index
    %223 = vector.load %arg2[%222, %c0_109] : memref<2048x1280xf32, #tpu.memory_space<vmem>>, vector<1x1280xf32>
    %c27 = arith.constant 27 : index
    %c0_110 = arith.constant 0 : index
    %224 = vector.load %arg3[%c27, %c0_110] : memref<64x1280xf32, #tpu.memory_space<vmem>>, vector<1x1280xf32>
    tpu.vector_store %arg3[%c27, %c0_110], %223 {strides = array<i32>} : memref<64x1280xf32, #tpu.memory_space<vmem>>, vector<1x1280xf32>,
    %c28_i32 = arith.constant 28 : i32
    %225 = arith.addi %0, %c28_i32 : i32
    %226 = arith.index_cast %225 : i32 to index
    %227 = memref.load %arg1[%226] : memref<64xi32, #tpu.memory_space<smem>>
    %c0_i32_111 = arith.constant 0 : i32
    %c2047_i32_112 = arith.constant 2047 : i32
    %228 = arith.maxsi %c0_i32_111, %227 : i32
    %229 = arith.minsi %c2047_i32_112, %228 : i32
    %230 = arith.index_cast %229 : i32 to index
    %c0_113 = arith.constant 0 : index
    %231 = vector.load %arg2[%230, %c0_113] : memref<2048x1280xf32, #tpu.memory_space<vmem>>, vector<1x1280xf32>
    %c28 = arith.constant 28 : index
    %c0_114 = arith.constant 0 : index
    %232 = vector.load %arg3[%c28, %c0_114] : memref<64x1280xf32, #tpu.memory_space<vmem>>, vector<1x1280xf32>
    tpu.vector_store %arg3[%c28, %c0_114], %231 {strides = array<i32>} : memref<64x1280xf32, #tpu.memory_space<vmem>>, vector<1x1280xf32>,
    %c29_i32 = arith.constant 29 : i32
    %233 = arith.addi %0, %c29_i32 : i32
    %234 = arith.index_cast %233 : i32 to index
    %235 = memref.load %arg1[%234] : memref<64xi32, #tpu.memory_space<smem>>
    %c0_i32_115 = arith.constant 0 : i32
    %c2047_i32_116 = arith.constant 2047 : i32
    %236 = arith.maxsi %c0_i32_115, %235 : i32
    %237 = arith.minsi %c2047_i32_116, %236 : i32
    %238 = arith.index_cast %237 : i32 to index
    %c0_117 = arith.constant 0 : index
    %239 = vector.load %arg2[%238, %c0_117] : memref<2048x1280xf32, #tpu.memory_space<vmem>>, vector<1x1280xf32>
    %c29 = arith.constant 29 : index
    %c0_118 = arith.constant 0 : index
    %240 = vector.load %arg3[%c29, %c0_118] : memref<64x1280xf32, #tpu.memory_space<vmem>>, vector<1x1280xf32>
    tpu.vector_store %arg3[%c29, %c0_118], %239 {strides = array<i32>} : memref<64x1280xf32, #tpu.memory_space<vmem>>, vector<1x1280xf32>,
    %c30_i32 = arith.constant 30 : i32
    %241 = arith.addi %0, %c30_i32 : i32
    %242 = arith.index_cast %241 : i32 to index
    %243 = memref.load %arg1[%242] : memref<64xi32, #tpu.memory_space<smem>>
    %c0_i32_119 = arith.constant 0 : i32
    %c2047_i32_120 = arith.constant 2047 : i32
    %244 = arith.maxsi %c0_i32_119, %243 : i32
    %245 = arith.minsi %c2047_i32_120, %244 : i32
    %246 = arith.index_cast %245 : i32 to index
    %c0_121 = arith.constant 0 : index
    %247 = vector.load %arg2[%246, %c0_121] : memref<2048x1280xf32, #tpu.memory_space<vmem>>, vector<1x1280xf32>
    %c30 = arith.constant 30 : index
    %c0_122 = arith.constant 0 : index
    %248 = vector.load %arg3[%c30, %c0_122] : memref<64x1280xf32, #tpu.memory_space<vmem>>, vector<1x1280xf32>
    tpu.vector_store %arg3[%c30, %c0_122], %247 {strides = array<i32>} : memref<64x1280xf32, #tpu.memory_space<vmem>>, vector<1x1280xf32>,
    %c31_i32 = arith.constant 31 : i32
    %249 = arith.addi %0, %c31_i32 : i32
    %250 = arith.index_cast %249 : i32 to index
    %251 = memref.load %arg1[%250] : memref<64xi32, #tpu.memory_space<smem>>
    %c0_i32_123 = arith.constant 0 : i32
    %c2047_i32_124 = arith.constant 2047 : i32
    %252 = arith.maxsi %c0_i32_123, %251 : i32
    %253 = arith.minsi %c2047_i32_124, %252 : i32
    %254 = arith.index_cast %253 : i32 to index
    %c0_125 = arith.constant 0 : index
    %255 = vector.load %arg2[%254, %c0_125] : memref<2048x1280xf32, #tpu.memory_space<vmem>>, vector<1x1280xf32>
    %c31 = arith.constant 31 : index
    %c0_126 = arith.constant 0 : index
    %256 = vector.load %arg3[%c31, %c0_126] : memref<64x1280xf32, #tpu.memory_space<vmem>>, vector<1x1280xf32>
    tpu.vector_store %arg3[%c31, %c0_126], %255 {strides = array<i32>} : memref<64x1280xf32, #tpu.memory_space<vmem>>, vector<1x1280xf32>,
    %c32_i32 = arith.constant 32 : i32
    %257 = arith.addi %0, %c32_i32 : i32
    %258 = arith.index_cast %257 : i32 to index
    %259 = memref.load %arg1[%258] : memref<64xi32, #tpu.memory_space<smem>>
    %c0_i32_127 = arith.constant 0 : i32
    %c2047_i32_128 = arith.constant 2047 : i32
    %260 = arith.maxsi %c0_i32_127, %259 : i32
    %261 = arith.minsi %c2047_i32_128, %260 : i32
    %262 = arith.index_cast %261 : i32 to index
    %c0_129 = arith.constant 0 : index
    %263 = vector.load %arg2[%262, %c0_129] : memref<2048x1280xf32, #tpu.memory_space<vmem>>, vector<1x1280xf32>
    %c32 = arith.constant 32 : index
    %c0_130 = arith.constant 0 : index
    %264 = vector.load %arg3[%c32, %c0_130] : memref<64x1280xf32, #tpu.memory_space<vmem>>, vector<1x1280xf32>
    tpu.vector_store %arg3[%c32, %c0_130], %263 {strides = array<i32>} : memref<64x1280xf32, #tpu.memory_space<vmem>>, vector<1x1280xf32>,
    %c33_i32 = arith.constant 33 : i32
    %265 = arith.addi %0, %c33_i32 : i32
    %266 = arith.index_cast %265 : i32 to index
    %267 = memref.load %arg1[%266] : memref<64xi32, #tpu.memory_space<smem>>
    %c0_i32_131 = arith.constant 0 : i32
    %c2047_i32_132 = arith.constant 2047 : i32
    %268 = arith.maxsi %c0_i32_131, %267 : i32
    %269 = arith.minsi %c2047_i32_132, %268 : i32
    %270 = arith.index_cast %269 : i32 to index
    %c0_133 = arith.constant 0 : index
    %271 = vector.load %arg2[%270, %c0_133] : memref<2048x1280xf32, #tpu.memory_space<vmem>>, vector<1x1280xf32>
    %c33 = arith.constant 33 : index
    %c0_134 = arith.constant 0 : index
    %272 = vector.load %arg3[%c33, %c0_134] : memref<64x1280xf32, #tpu.memory_space<vmem>>, vector<1x1280xf32>
    tpu.vector_store %arg3[%c33, %c0_134], %271 {strides = array<i32>} : memref<64x1280xf32, #tpu.memory_space<vmem>>, vector<1x1280xf32>,
    %c34_i32 = arith.constant 34 : i32
    %273 = arith.addi %0, %c34_i32 : i32
    %274 = arith.index_cast %273 : i32 to index
    %275 = memref.load %arg1[%274] : memref<64xi32, #tpu.memory_space<smem>>
    %c0_i32_135 = arith.constant 0 : i32
    %c2047_i32_136 = arith.constant 2047 : i32
    %276 = arith.maxsi %c0_i32_135, %275 : i32
    %277 = arith.minsi %c2047_i32_136, %276 : i32
    %278 = arith.index_cast %277 : i32 to index
    %c0_137 = arith.constant 0 : index
    %279 = vector.load %arg2[%278, %c0_137] : memref<2048x1280xf32, #tpu.memory_space<vmem>>, vector<1x1280xf32>
    %c34 = arith.constant 34 : index
    %c0_138 = arith.constant 0 : index
    %280 = vector.load %arg3[%c34, %c0_138] : memref<64x1280xf32, #tpu.memory_space<vmem>>, vector<1x1280xf32>
    tpu.vector_store %arg3[%c34, %c0_138], %279 {strides = array<i32>} : memref<64x1280xf32, #tpu.memory_space<vmem>>, vector<1x1280xf32>,
    %c35_i32 = arith.constant 35 : i32
    %281 = arith.addi %0, %c35_i32 : i32
    %282 = arith.index_cast %281 : i32 to index
    %283 = memref.load %arg1[%282] : memref<64xi32, #tpu.memory_space<smem>>
    %c0_i32_139 = arith.constant 0 : i32
    %c2047_i32_140 = arith.constant 2047 : i32
    %284 = arith.maxsi %c0_i32_139, %283 : i32
    %285 = arith.minsi %c2047_i32_140, %284 : i32
    %286 = arith.index_cast %285 : i32 to index
    %c0_141 = arith.constant 0 : index
    %287 = vector.load %arg2[%286, %c0_141] : memref<2048x1280xf32, #tpu.memory_space<vmem>>, vector<1x1280xf32>
    %c35 = arith.constant 35 : index
    %c0_142 = arith.constant 0 : index
    %288 = vector.load %arg3[%c35, %c0_142] : memref<64x1280xf32, #tpu.memory_space<vmem>>, vector<1x1280xf32>
    tpu.vector_store %arg3[%c35, %c0_142], %287 {strides = array<i32>} : memref<64x1280xf32, #tpu.memory_space<vmem>>, vector<1x1280xf32>,
    %c36_i32 = arith.constant 36 : i32
    %289 = arith.addi %0, %c36_i32 : i32
    %290 = arith.index_cast %289 : i32 to index
    %291 = memref.load %arg1[%290] : memref<64xi32, #tpu.memory_space<smem>>
    %c0_i32_143 = arith.constant 0 : i32
    %c2047_i32_144 = arith.constant 2047 : i32
    %292 = arith.maxsi %c0_i32_143, %291 : i32
    %293 = arith.minsi %c2047_i32_144, %292 : i32
    %294 = arith.index_cast %293 : i32 to index
    %c0_145 = arith.constant 0 : index
    %295 = vector.load %arg2[%294, %c0_145] : memref<2048x1280xf32, #tpu.memory_space<vmem>>, vector<1x1280xf32>
    %c36 = arith.constant 36 : index
    %c0_146 = arith.constant 0 : index
    %296 = vector.load %arg3[%c36, %c0_146] : memref<64x1280xf32, #tpu.memory_space<vmem>>, vector<1x1280xf32>
    tpu.vector_store %arg3[%c36, %c0_146], %295 {strides = array<i32>} : memref<64x1280xf32, #tpu.memory_space<vmem>>, vector<1x1280xf32>,
    %c37_i32 = arith.constant 37 : i32
    %297 = arith.addi %0, %c37_i32 : i32
    %298 = arith.index_cast %297 : i32 to index
    %299 = memref.load %arg1[%298] : memref<64xi32, #tpu.memory_space<smem>>
    %c0_i32_147 = arith.constant 0 : i32
    %c2047_i32_148 = arith.constant 2047 : i32
    %300 = arith.maxsi %c0_i32_147, %299 : i32
    %301 = arith.minsi %c2047_i32_148, %300 : i32
    %302 = arith.index_cast %301 : i32 to index
    %c0_149 = arith.constant 0 : index
    %303 = vector.load %arg2[%302, %c0_149] : memref<2048x1280xf32, #tpu.memory_space<vmem>>, vector<1x1280xf32>
    %c37 = arith.constant 37 : index
    %c0_150 = arith.constant 0 : index
    %304 = vector.load %arg3[%c37, %c0_150] : memref<64x1280xf32, #tpu.memory_space<vmem>>, vector<1x1280xf32>
    tpu.vector_store %arg3[%c37, %c0_150], %303 {strides = array<i32>} : memref<64x1280xf32, #tpu.memory_space<vmem>>, vector<1x1280xf32>,
    %c38_i32 = arith.constant 38 : i32
    %305 = arith.addi %0, %c38_i32 : i32
    %306 = arith.index_cast %305 : i32 to index
    %307 = memref.load %arg1[%306] : memref<64xi32, #tpu.memory_space<smem>>
    %c0_i32_151 = arith.constant 0 : i32
    %c2047_i32_152 = arith.constant 2047 : i32
    %308 = arith.maxsi %c0_i32_151, %307 : i32
    %309 = arith.minsi %c2047_i32_152, %308 : i32
    %310 = arith.index_cast %309 : i32 to index
    %c0_153 = arith.constant 0 : index
    %311 = vector.load %arg2[%310, %c0_153] : memref<2048x1280xf32, #tpu.memory_space<vmem>>, vector<1x1280xf32>
    %c38 = arith.constant 38 : index
    %c0_154 = arith.constant 0 : index
    %312 = vector.load %arg3[%c38, %c0_154] : memref<64x1280xf32, #tpu.memory_space<vmem>>, vector<1x1280xf32>
    tpu.vector_store %arg3[%c38, %c0_154], %311 {strides = array<i32>} : memref<64x1280xf32, #tpu.memory_space<vmem>>, vector<1x1280xf32>,
    %c39_i32 = arith.constant 39 : i32
    %313 = arith.addi %0, %c39_i32 : i32
    %314 = arith.index_cast %313 : i32 to index
    %315 = memref.load %arg1[%314] : memref<64xi32, #tpu.memory_space<smem>>
    %c0_i32_155 = arith.constant 0 : i32
    %c2047_i32_156 = arith.constant 2047 : i32
    %316 = arith.maxsi %c0_i32_155, %315 : i32
    %317 = arith.minsi %c2047_i32_156, %316 : i32
    %318 = arith.index_cast %317 : i32 to index
    %c0_157 = arith.constant 0 : index
    %319 = vector.load %arg2[%318, %c0_157] : memref<2048x1280xf32, #tpu.memory_space<vmem>>, vector<1x1280xf32>
    %c39 = arith.constant 39 : index
    %c0_158 = arith.constant 0 : index
    %320 = vector.load %arg3[%c39, %c0_158] : memref<64x1280xf32, #tpu.memory_space<vmem>>, vector<1x1280xf32>
    tpu.vector_store %arg3[%c39, %c0_158], %319 {strides = array<i32>} : memref<64x1280xf32, #tpu.memory_space<vmem>>, vector<1x1280xf32>,
    %c40_i32 = arith.constant 40 : i32
    %321 = arith.addi %0, %c40_i32 : i32
    %322 = arith.index_cast %321 : i32 to index
    %323 = memref.load %arg1[%322] : memref<64xi32, #tpu.memory_space<smem>>
    %c0_i32_159 = arith.constant 0 : i32
    %c2047_i32_160 = arith.constant 2047 : i32
    %324 = arith.maxsi %c0_i32_159, %323 : i32
    %325 = arith.minsi %c2047_i32_160, %324 : i32
    %326 = arith.index_cast %325 : i32 to index
    %c0_161 = arith.constant 0 : index
    %327 = vector.load %arg2[%326, %c0_161] : memref<2048x1280xf32, #tpu.memory_space<vmem>>, vector<1x1280xf32>
    %c40 = arith.constant 40 : index
    %c0_162 = arith.constant 0 : index
    %328 = vector.load %arg3[%c40, %c0_162] : memref<64x1280xf32, #tpu.memory_space<vmem>>, vector<1x1280xf32>
    tpu.vector_store %arg3[%c40, %c0_162], %327 {strides = array<i32>} : memref<64x1280xf32, #tpu.memory_space<vmem>>, vector<1x1280xf32>,
    %c41_i32 = arith.constant 41 : i32
    %329 = arith.addi %0, %c41_i32 : i32
    %330 = arith.index_cast %329 : i32 to index
    %331 = memref.load %arg1[%330] : memref<64xi32, #tpu.memory_space<smem>>
    %c0_i32_163 = arith.constant 0 : i32
    %c2047_i32_164 = arith.constant 2047 : i32
    %332 = arith.maxsi %c0_i32_163, %331 : i32
    %333 = arith.minsi %c2047_i32_164, %332 : i32
    %334 = arith.index_cast %333 : i32 to index
    %c0_165 = arith.constant 0 : index
    %335 = vector.load %arg2[%334, %c0_165] : memref<2048x1280xf32, #tpu.memory_space<vmem>>, vector<1x1280xf32>
    %c41 = arith.constant 41 : index
    %c0_166 = arith.constant 0 : index
    %336 = vector.load %arg3[%c41, %c0_166] : memref<64x1280xf32, #tpu.memory_space<vmem>>, vector<1x1280xf32>
    tpu.vector_store %arg3[%c41, %c0_166], %335 {strides = array<i32>} : memref<64x1280xf32, #tpu.memory_space<vmem>>, vector<1x1280xf32>,
    %c42_i32 = arith.constant 42 : i32
    %337 = arith.addi %0, %c42_i32 : i32
    %338 = arith.index_cast %337 : i32 to index
    %339 = memref.load %arg1[%338] : memref<64xi32, #tpu.memory_space<smem>>
    %c0_i32_167 = arith.constant 0 : i32
    %c2047_i32_168 = arith.constant 2047 : i32
    %340 = arith.maxsi %c0_i32_167, %339 : i32
    %341 = arith.minsi %c2047_i32_168, %340 : i32
    %342 = arith.index_cast %341 : i32 to index
    %c0_169 = arith.constant 0 : index
    %343 = vector.load %arg2[%342, %c0_169] : memref<2048x1280xf32, #tpu.memory_space<vmem>>, vector<1x1280xf32>
    %c42 = arith.constant 42 : index
    %c0_170 = arith.constant 0 : index
    %344 = vector.load %arg3[%c42, %c0_170] : memref<64x1280xf32, #tpu.memory_space<vmem>>, vector<1x1280xf32>
    tpu.vector_store %arg3[%c42, %c0_170], %343 {strides = array<i32>} : memref<64x1280xf32, #tpu.memory_space<vmem>>, vector<1x1280xf32>,
    %c43_i32 = arith.constant 43 : i32
    %345 = arith.addi %0, %c43_i32 : i32
    %346 = arith.index_cast %345 : i32 to index
    %347 = memref.load %arg1[%346] : memref<64xi32, #tpu.memory_space<smem>>
    %c0_i32_171 = arith.constant 0 : i32
    %c2047_i32_172 = arith.constant 2047 : i32
    %348 = arith.maxsi %c0_i32_171, %347 : i32
    %349 = arith.minsi %c2047_i32_172, %348 : i32
    %350 = arith.index_cast %349 : i32 to index
    %c0_173 = arith.constant 0 : index
    %351 = vector.load %arg2[%350, %c0_173] : memref<2048x1280xf32, #tpu.memory_space<vmem>>, vector<1x1280xf32>
    %c43 = arith.constant 43 : index
    %c0_174 = arith.constant 0 : index
    %352 = vector.load %arg3[%c43, %c0_174] : memref<64x1280xf32, #tpu.memory_space<vmem>>, vector<1x1280xf32>
    tpu.vector_store %arg3[%c43, %c0_174], %351 {strides = array<i32>} : memref<64x1280xf32, #tpu.memory_space<vmem>>, vector<1x1280xf32>,
    %c44_i32 = arith.constant 44 : i32
    %353 = arith.addi %0, %c44_i32 : i32
    %354 = arith.index_cast %353 : i32 to index
    %355 = memref.load %arg1[%354] : memref<64xi32, #tpu.memory_space<smem>>
    %c0_i32_175 = arith.constant 0 : i32
    %c2047_i32_176 = arith.constant 2047 : i32
    %356 = arith.maxsi %c0_i32_175, %355 : i32
    %357 = arith.minsi %c2047_i32_176, %356 : i32
    %358 = arith.index_cast %357 : i32 to index
    %c0_177 = arith.constant 0 : index
    %359 = vector.load %arg2[%358, %c0_177] : memref<2048x1280xf32, #tpu.memory_space<vmem>>, vector<1x1280xf32>
    %c44 = arith.constant 44 : index
    %c0_178 = arith.constant 0 : index
    %360 = vector.load %arg3[%c44, %c0_178] : memref<64x1280xf32, #tpu.memory_space<vmem>>, vector<1x1280xf32>
    tpu.vector_store %arg3[%c44, %c0_178], %359 {strides = array<i32>} : memref<64x1280xf32, #tpu.memory_space<vmem>>, vector<1x1280xf32>,
    %c45_i32 = arith.constant 45 : i32
    %361 = arith.addi %0, %c45_i32 : i32
    %362 = arith.index_cast %361 : i32 to index
    %363 = memref.load %arg1[%362] : memref<64xi32, #tpu.memory_space<smem>>
    %c0_i32_179 = arith.constant 0 : i32
    %c2047_i32_180 = arith.constant 2047 : i32
    %364 = arith.maxsi %c0_i32_179, %363 : i32
    %365 = arith.minsi %c2047_i32_180, %364 : i32
    %366 = arith.index_cast %365 : i32 to index
    %c0_181 = arith.constant 0 : index
    %367 = vector.load %arg2[%366, %c0_181] : memref<2048x1280xf32, #tpu.memory_space<vmem>>, vector<1x1280xf32>
    %c45 = arith.constant 45 : index
    %c0_182 = arith.constant 0 : index
    %368 = vector.load %arg3[%c45, %c0_182] : memref<64x1280xf32, #tpu.memory_space<vmem>>, vector<1x1280xf32>
    tpu.vector_store %arg3[%c45, %c0_182], %367 {strides = array<i32>} : memref<64x1280xf32, #tpu.memory_space<vmem>>, vector<1x1280xf32>,
    %c46_i32 = arith.constant 46 : i32
    %369 = arith.addi %0, %c46_i32 : i32
    %370 = arith.index_cast %369 : i32 to index
    %371 = memref.load %arg1[%370] : memref<64xi32, #tpu.memory_space<smem>>
    %c0_i32_183 = arith.constant 0 : i32
    %c2047_i32_184 = arith.constant 2047 : i32
    %372 = arith.maxsi %c0_i32_183, %371 : i32
    %373 = arith.minsi %c2047_i32_184, %372 : i32
    %374 = arith.index_cast %373 : i32 to index
    %c0_185 = arith.constant 0 : index
    %375 = vector.load %arg2[%374, %c0_185] : memref<2048x1280xf32, #tpu.memory_space<vmem>>, vector<1x1280xf32>
    %c46 = arith.constant 46 : index
    %c0_186 = arith.constant 0 : index
    %376 = vector.load %arg3[%c46, %c0_186] : memref<64x1280xf32, #tpu.memory_space<vmem>>, vector<1x1280xf32>
    tpu.vector_store %arg3[%c46, %c0_186], %375 {strides = array<i32>} : memref<64x1280xf32, #tpu.memory_space<vmem>>, vector<1x1280xf32>,
    %c47_i32 = arith.constant 47 : i32
    %377 = arith.addi %0, %c47_i32 : i32
    %378 = arith.index_cast %377 : i32 to index
    %379 = memref.load %arg1[%378] : memref<64xi32, #tpu.memory_space<smem>>
    %c0_i32_187 = arith.constant 0 : i32
    %c2047_i32_188 = arith.constant 2047 : i32
    %380 = arith.maxsi %c0_i32_187, %379 : i32
    %381 = arith.minsi %c2047_i32_188, %380 : i32
    %382 = arith.index_cast %381 : i32 to index
    %c0_189 = arith.constant 0 : index
    %383 = vector.load %arg2[%382, %c0_189] : memref<2048x1280xf32, #tpu.memory_space<vmem>>, vector<1x1280xf32>
    %c47 = arith.constant 47 : index
    %c0_190 = arith.constant 0 : index
    %384 = vector.load %arg3[%c47, %c0_190] : memref<64x1280xf32, #tpu.memory_space<vmem>>, vector<1x1280xf32>
    tpu.vector_store %arg3[%c47, %c0_190], %383 {strides = array<i32>} : memref<64x1280xf32, #tpu.memory_space<vmem>>, vector<1x1280xf32>,
    %c48_i32 = arith.constant 48 : i32
    %385 = arith.addi %0, %c48_i32 : i32
    %386 = arith.index_cast %385 : i32 to index
    %387 = memref.load %arg1[%386] : memref<64xi32, #tpu.memory_space<smem>>
    %c0_i32_191 = arith.constant 0 : i32
    %c2047_i32_192 = arith.constant 2047 : i32
    %388 = arith.maxsi %c0_i32_191, %387 : i32
    %389 = arith.minsi %c2047_i32_192, %388 : i32
    %390 = arith.index_cast %389 : i32 to index
    %c0_193 = arith.constant 0 : index
    %391 = vector.load %arg2[%390, %c0_193] : memref<2048x1280xf32, #tpu.memory_space<vmem>>, vector<1x1280xf32>
    %c48 = arith.constant 48 : index
    %c0_194 = arith.constant 0 : index
    %392 = vector.load %arg3[%c48, %c0_194] : memref<64x1280xf32, #tpu.memory_space<vmem>>, vector<1x1280xf32>
    tpu.vector_store %arg3[%c48, %c0_194], %391 {strides = array<i32>} : memref<64x1280xf32, #tpu.memory_space<vmem>>, vector<1x1280xf32>,
    %c49_i32 = arith.constant 49 : i32
    %393 = arith.addi %0, %c49_i32 : i32
    %394 = arith.index_cast %393 : i32 to index
    %395 = memref.load %arg1[%394] : memref<64xi32, #tpu.memory_space<smem>>
    %c0_i32_195 = arith.constant 0 : i32
    %c2047_i32_196 = arith.constant 2047 : i32
    %396 = arith.maxsi %c0_i32_195, %395 : i32
    %397 = arith.minsi %c2047_i32_196, %396 : i32
    %398 = arith.index_cast %397 : i32 to index
    %c0_197 = arith.constant 0 : index
    %399 = vector.load %arg2[%398, %c0_197] : memref<2048x1280xf32, #tpu.memory_space<vmem>>, vector<1x1280xf32>
    %c49 = arith.constant 49 : index
    %c0_198 = arith.constant 0 : index
    %400 = vector.load %arg3[%c49, %c0_198] : memref<64x1280xf32, #tpu.memory_space<vmem>>, vector<1x1280xf32>
    tpu.vector_store %arg3[%c49, %c0_198], %399 {strides = array<i32>} : memref<64x1280xf32, #tpu.memory_space<vmem>>, vector<1x1280xf32>,
    %c50_i32 = arith.constant 50 : i32
    %401 = arith.addi %0, %c50_i32 : i32
    %402 = arith.index_cast %401 : i32 to index
    %403 = memref.load %arg1[%402] : memref<64xi32, #tpu.memory_space<smem>>
    %c0_i32_199 = arith.constant 0 : i32
    %c2047_i32_200 = arith.constant 2047 : i32
    %404 = arith.maxsi %c0_i32_199, %403 : i32
    %405 = arith.minsi %c2047_i32_200, %404 : i32
    %406 = arith.index_cast %405 : i32 to index
    %c0_201 = arith.constant 0 : index
    %407 = vector.load %arg2[%406, %c0_201] : memref<2048x1280xf32, #tpu.memory_space<vmem>>, vector<1x1280xf32>
    %c50 = arith.constant 50 : index
    %c0_202 = arith.constant 0 : index
    %408 = vector.load %arg3[%c50, %c0_202] : memref<64x1280xf32, #tpu.memory_space<vmem>>, vector<1x1280xf32>
    tpu.vector_store %arg3[%c50, %c0_202], %407 {strides = array<i32>} : memref<64x1280xf32, #tpu.memory_space<vmem>>, vector<1x1280xf32>,
    %c51_i32 = arith.constant 51 : i32
    %409 = arith.addi %0, %c51_i32 : i32
    %410 = arith.index_cast %409 : i32 to index
    %411 = memref.load %arg1[%410] : memref<64xi32, #tpu.memory_space<smem>>
    %c0_i32_203 = arith.constant 0 : i32
    %c2047_i32_204 = arith.constant 2047 : i32
    %412 = arith.maxsi %c0_i32_203, %411 : i32
    %413 = arith.minsi %c2047_i32_204, %412 : i32
    %414 = arith.index_cast %413 : i32 to index
    %c0_205 = arith.constant 0 : index
    %415 = vector.load %arg2[%414, %c0_205] : memref<2048x1280xf32, #tpu.memory_space<vmem>>, vector<1x1280xf32>
    %c51 = arith.constant 51 : index
    %c0_206 = arith.constant 0 : index
    %416 = vector.load %arg3[%c51, %c0_206] : memref<64x1280xf32, #tpu.memory_space<vmem>>, vector<1x1280xf32>
    tpu.vector_store %arg3[%c51, %c0_206], %415 {strides = array<i32>} : memref<64x1280xf32, #tpu.memory_space<vmem>>, vector<1x1280xf32>,
    %c52_i32 = arith.constant 52 : i32
    %417 = arith.addi %0, %c52_i32 : i32
    %418 = arith.index_cast %417 : i32 to index
    %419 = memref.load %arg1[%418] : memref<64xi32, #tpu.memory_space<smem>>
    %c0_i32_207 = arith.constant 0 : i32
    %c2047_i32_208 = arith.constant 2047 : i32
    %420 = arith.maxsi %c0_i32_207, %419 : i32
    %421 = arith.minsi %c2047_i32_208, %420 : i32
    %422 = arith.index_cast %421 : i32 to index
    %c0_209 = arith.constant 0 : index
    %423 = vector.load %arg2[%422, %c0_209] : memref<2048x1280xf32, #tpu.memory_space<vmem>>, vector<1x1280xf32>
    %c52 = arith.constant 52 : index
    %c0_210 = arith.constant 0 : index
    %424 = vector.load %arg3[%c52, %c0_210] : memref<64x1280xf32, #tpu.memory_space<vmem>>, vector<1x1280xf32>
    tpu.vector_store %arg3[%c52, %c0_210], %423 {strides = array<i32>} : memref<64x1280xf32, #tpu.memory_space<vmem>>, vector<1x1280xf32>,
    %c53_i32 = arith.constant 53 : i32
    %425 = arith.addi %0, %c53_i32 : i32
    %426 = arith.index_cast %425 : i32 to index
    %427 = memref.load %arg1[%426] : memref<64xi32, #tpu.memory_space<smem>>
    %c0_i32_211 = arith.constant 0 : i32
    %c2047_i32_212 = arith.constant 2047 : i32
    %428 = arith.maxsi %c0_i32_211, %427 : i32
    %429 = arith.minsi %c2047_i32_212, %428 : i32
    %430 = arith.index_cast %429 : i32 to index
    %c0_213 = arith.constant 0 : index
    %431 = vector.load %arg2[%430, %c0_213] : memref<2048x1280xf32, #tpu.memory_space<vmem>>, vector<1x1280xf32>
    %c53 = arith.constant 53 : index
    %c0_214 = arith.constant 0 : index
    %432 = vector.load %arg3[%c53, %c0_214] : memref<64x1280xf32, #tpu.memory_space<vmem>>, vector<1x1280xf32>
    tpu.vector_store %arg3[%c53, %c0_214], %431 {strides = array<i32>} : memref<64x1280xf32, #tpu.memory_space<vmem>>, vector<1x1280xf32>,
    %c54_i32 = arith.constant 54 : i32
    %433 = arith.addi %0, %c54_i32 : i32
    %434 = arith.index_cast %433 : i32 to index
    %435 = memref.load %arg1[%434] : memref<64xi32, #tpu.memory_space<smem>>
    %c0_i32_215 = arith.constant 0 : i32
    %c2047_i32_216 = arith.constant 2047 : i32
    %436 = arith.maxsi %c0_i32_215, %435 : i32
    %437 = arith.minsi %c2047_i32_216, %436 : i32
    %438 = arith.index_cast %437 : i32 to index
    %c0_217 = arith.constant 0 : index
    %439 = vector.load %arg2[%438, %c0_217] : memref<2048x1280xf32, #tpu.memory_space<vmem>>, vector<1x1280xf32>
    %c54 = arith.constant 54 : index
    %c0_218 = arith.constant 0 : index
    %440 = vector.load %arg3[%c54, %c0_218] : memref<64x1280xf32, #tpu.memory_space<vmem>>, vector<1x1280xf32>
    tpu.vector_store %arg3[%c54, %c0_218], %439 {strides = array<i32>} : memref<64x1280xf32, #tpu.memory_space<vmem>>, vector<1x1280xf32>,
    %c55_i32 = arith.constant 55 : i32
    %441 = arith.addi %0, %c55_i32 : i32
    %442 = arith.index_cast %441 : i32 to index
    %443 = memref.load %arg1[%442] : memref<64xi32, #tpu.memory_space<smem>>
    %c0_i32_219 = arith.constant 0 : i32
    %c2047_i32_220 = arith.constant 2047 : i32
    %444 = arith.maxsi %c0_i32_219, %443 : i32
    %445 = arith.minsi %c2047_i32_220, %444 : i32
    %446 = arith.index_cast %445 : i32 to index
    %c0_221 = arith.constant 0 : index
    %447 = vector.load %arg2[%446, %c0_221] : memref<2048x1280xf32, #tpu.memory_space<vmem>>, vector<1x1280xf32>
    %c55 = arith.constant 55 : index
    %c0_222 = arith.constant 0 : index
    %448 = vector.load %arg3[%c55, %c0_222] : memref<64x1280xf32, #tpu.memory_space<vmem>>, vector<1x1280xf32>
    tpu.vector_store %arg3[%c55, %c0_222], %447 {strides = array<i32>} : memref<64x1280xf32, #tpu.memory_space<vmem>>, vector<1x1280xf32>,
    %c56_i32 = arith.constant 56 : i32
    %449 = arith.addi %0, %c56_i32 : i32
    %450 = arith.index_cast %449 : i32 to index
    %451 = memref.load %arg1[%450] : memref<64xi32, #tpu.memory_space<smem>>
    %c0_i32_223 = arith.constant 0 : i32
    %c2047_i32_224 = arith.constant 2047 : i32
    %452 = arith.maxsi %c0_i32_223, %451 : i32
    %453 = arith.minsi %c2047_i32_224, %452 : i32
    %454 = arith.index_cast %453 : i32 to index
    %c0_225 = arith.constant 0 : index
    %455 = vector.load %arg2[%454, %c0_225] : memref<2048x1280xf32, #tpu.memory_space<vmem>>, vector<1x1280xf32>
    %c56 = arith.constant 56 : index
    %c0_226 = arith.constant 0 : index
    %456 = vector.load %arg3[%c56, %c0_226] : memref<64x1280xf32, #tpu.memory_space<vmem>>, vector<1x1280xf32>
    tpu.vector_store %arg3[%c56, %c0_226], %455 {strides = array<i32>} : memref<64x1280xf32, #tpu.memory_space<vmem>>, vector<1x1280xf32>,
    %c57_i32 = arith.constant 57 : i32
    %457 = arith.addi %0, %c57_i32 : i32
    %458 = arith.index_cast %457 : i32 to index
    %459 = memref.load %arg1[%458] : memref<64xi32, #tpu.memory_space<smem>>
    %c0_i32_227 = arith.constant 0 : i32
    %c2047_i32_228 = arith.constant 2047 : i32
    %460 = arith.maxsi %c0_i32_227, %459 : i32
    %461 = arith.minsi %c2047_i32_228, %460 : i32
    %462 = arith.index_cast %461 : i32 to index
    %c0_229 = arith.constant 0 : index
    %463 = vector.load %arg2[%462, %c0_229] : memref<2048x1280xf32, #tpu.memory_space<vmem>>, vector<1x1280xf32>
    %c57 = arith.constant 57 : index
    %c0_230 = arith.constant 0 : index
    %464 = vector.load %arg3[%c57, %c0_230] : memref<64x1280xf32, #tpu.memory_space<vmem>>, vector<1x1280xf32>
    tpu.vector_store %arg3[%c57, %c0_230], %463 {strides = array<i32>} : memref<64x1280xf32, #tpu.memory_space<vmem>>, vector<1x1280xf32>,
    %c58_i32 = arith.constant 58 : i32
    %465 = arith.addi %0, %c58_i32 : i32
    %466 = arith.index_cast %465 : i32 to index
    %467 = memref.load %arg1[%466] : memref<64xi32, #tpu.memory_space<smem>>
    %c0_i32_231 = arith.constant 0 : i32
    %c2047_i32_232 = arith.constant 2047 : i32
    %468 = arith.maxsi %c0_i32_231, %467 : i32
    %469 = arith.minsi %c2047_i32_232, %468 : i32
    %470 = arith.index_cast %469 : i32 to index
    %c0_233 = arith.constant 0 : index
    %471 = vector.load %arg2[%470, %c0_233] : memref<2048x1280xf32, #tpu.memory_space<vmem>>, vector<1x1280xf32>
    %c58 = arith.constant 58 : index
    %c0_234 = arith.constant 0 : index
    %472 = vector.load %arg3[%c58, %c0_234] : memref<64x1280xf32, #tpu.memory_space<vmem>>, vector<1x1280xf32>
    tpu.vector_store %arg3[%c58, %c0_234], %471 {strides = array<i32>} : memref<64x1280xf32, #tpu.memory_space<vmem>>, vector<1x1280xf32>,
    %c59_i32 = arith.constant 59 : i32
    %473 = arith.addi %0, %c59_i32 : i32
    %474 = arith.index_cast %473 : i32 to index
    %475 = memref.load %arg1[%474] : memref<64xi32, #tpu.memory_space<smem>>
    %c0_i32_235 = arith.constant 0 : i32
    %c2047_i32_236 = arith.constant 2047 : i32
    %476 = arith.maxsi %c0_i32_235, %475 : i32
    %477 = arith.minsi %c2047_i32_236, %476 : i32
    %478 = arith.index_cast %477 : i32 to index
    %c0_237 = arith.constant 0 : index
    %479 = vector.load %arg2[%478, %c0_237] : memref<2048x1280xf32, #tpu.memory_space<vmem>>, vector<1x1280xf32>
    %c59 = arith.constant 59 : index
    %c0_238 = arith.constant 0 : index
    %480 = vector.load %arg3[%c59, %c0_238] : memref<64x1280xf32, #tpu.memory_space<vmem>>, vector<1x1280xf32>
    tpu.vector_store %arg3[%c59, %c0_238], %479 {strides = array<i32>} : memref<64x1280xf32, #tpu.memory_space<vmem>>, vector<1x1280xf32>,
    %c60_i32 = arith.constant 60 : i32
    %481 = arith.addi %0, %c60_i32 : i32
    %482 = arith.index_cast %481 : i32 to index
    %483 = memref.load %arg1[%482] : memref<64xi32, #tpu.memory_space<smem>>
    %c0_i32_239 = arith.constant 0 : i32
    %c2047_i32_240 = arith.constant 2047 : i32
    %484 = arith.maxsi %c0_i32_239, %483 : i32
    %485 = arith.minsi %c2047_i32_240, %484 : i32
    %486 = arith.index_cast %485 : i32 to index
    %c0_241 = arith.constant 0 : index
    %487 = vector.load %arg2[%486, %c0_241] : memref<2048x1280xf32, #tpu.memory_space<vmem>>, vector<1x1280xf32>
    %c60 = arith.constant 60 : index
    %c0_242 = arith.constant 0 : index
    %488 = vector.load %arg3[%c60, %c0_242] : memref<64x1280xf32, #tpu.memory_space<vmem>>, vector<1x1280xf32>
    tpu.vector_store %arg3[%c60, %c0_242], %487 {strides = array<i32>} : memref<64x1280xf32, #tpu.memory_space<vmem>>, vector<1x1280xf32>,
    %c61_i32 = arith.constant 61 : i32
    %489 = arith.addi %0, %c61_i32 : i32
    %490 = arith.index_cast %489 : i32 to index
    %491 = memref.load %arg1[%490] : memref<64xi32, #tpu.memory_space<smem>>
    %c0_i32_243 = arith.constant 0 : i32
    %c2047_i32_244 = arith.constant 2047 : i32
    %492 = arith.maxsi %c0_i32_243, %491 : i32
    %493 = arith.minsi %c2047_i32_244, %492 : i32
    %494 = arith.index_cast %493 : i32 to index
    %c0_245 = arith.constant 0 : index
    %495 = vector.load %arg2[%494, %c0_245] : memref<2048x1280xf32, #tpu.memory_space<vmem>>, vector<1x1280xf32>
    %c61 = arith.constant 61 : index
    %c0_246 = arith.constant 0 : index
    %496 = vector.load %arg3[%c61, %c0_246] : memref<64x1280xf32, #tpu.memory_space<vmem>>, vector<1x1280xf32>
    tpu.vector_store %arg3[%c61, %c0_246], %495 {strides = array<i32>} : memref<64x1280xf32, #tpu.memory_space<vmem>>, vector<1x1280xf32>,
    %c62_i32 = arith.constant 62 : i32
    %497 = arith.addi %0, %c62_i32 : i32
    %498 = arith.index_cast %497 : i32 to index
    %499 = memref.load %arg1[%498] : memref<64xi32, #tpu.memory_space<smem>>
    %c0_i32_247 = arith.constant 0 : i32
    %c2047_i32_248 = arith.constant 2047 : i32
    %500 = arith.maxsi %c0_i32_247, %499 : i32
    %501 = arith.minsi %c2047_i32_248, %500 : i32
    %502 = arith.index_cast %501 : i32 to index
    %c0_249 = arith.constant 0 : index
    %503 = vector.load %arg2[%502, %c0_249] : memref<2048x1280xf32, #tpu.memory_space<vmem>>, vector<1x1280xf32>
    %c62 = arith.constant 62 : index
    %c0_250 = arith.constant 0 : index
    %504 = vector.load %arg3[%c62, %c0_250] : memref<64x1280xf32, #tpu.memory_space<vmem>>, vector<1x1280xf32>
    tpu.vector_store %arg3[%c62, %c0_250], %503 {strides = array<i32>} : memref<64x1280xf32, #tpu.memory_space<vmem>>, vector<1x1280xf32>,
    %c63_i32 = arith.constant 63 : i32
    %505 = arith.addi %0, %c63_i32 : i32
    %506 = arith.index_cast %505 : i32 to index
    %507 = memref.load %arg1[%506] : memref<64xi32, #tpu.memory_space<smem>>
    %c0_i32_251 = arith.constant 0 : i32
    %c2047_i32_252 = arith.constant 2047 : i32
    %508 = arith.maxsi %c0_i32_251, %507 : i32
    %509 = arith.minsi %c2047_i32_252, %508 : i32
    %510 = arith.index_cast %509 : i32 to index
    %c0_253 = arith.constant 0 : index
    %511 = vector.load %arg2[%510, %c0_253] : memref<2048x1280xf32, #tpu.memory_space<vmem>>, vector<1x1280xf32>
    %c63 = arith.constant 63 : index
    %c0_254 = arith.constant 0 : index
    %512 = vector.load %arg3[%c63, %c0_254] : memref<64x1280xf32, #tpu.memory_space<vmem>>, vector<1x1280xf32>
    tpu.vector_store %arg3[%c63, %c0_254], %511 {strides = array<i32>} : memref<64x1280xf32, #tpu.memory_space<vmem>>, vector<1x1280xf32>,
    return
  }
  func.func @transform_0(%arg0: i32, %arg1: memref<64xi32, #tpu.memory_space<smem>>) -> (i32, i32) {
    %c0_i32 = arith.constant 0 : i32
    %c0_i32_0 = arith.constant 0 : i32
    %c0_i32_1 = arith.constant 0 : i32
    return %c0_i32, %c0_i32_0 : i32, i32
  }
  func.func @transform_1(%arg0: i32, %arg1: memref<64xi32, #tpu.memory_space<smem>>) -> (i32, i32) {
    %c0_i32 = arith.constant 0 : i32
    %c0_i32_0 = arith.constant 0 : i32
    return %arg0, %c0_i32 : i32, i32
  }
}

</mosaic_0001>

<llo_original>
// kernel: tpu_custom_call.1
$region0: #{tpu_custom_call.1}
  #allocation0 [shape = 'u32[]', space=smem, size = 0x4, offset = 0x4, fixed_abs, tag = 'smem constant byte address 0x4 - core index']
  #allocation1 [shape = 'u32[72,128]{1,0:T(1,128)}', space=vmem, size = 0x9000, scoped, tag = 'internal scratch']
  #allocation2 [shape = 's32[1]{0}', space=sflag, size = 0x4, scoped, tag = 'scoped memory for tpu_custom_call.1']
  #allocation3 [shape = 'u8[512]{0}', space=smem, size = 0x200, scoped, tag = 'prefetched SMEM operand 0']
  %s0 = inlined_call_operand.hbm [shape: s32[64], index: 0, kind: input, shape index: {}]
  %s1 = inlined_call_operand.hbm [shape: f32[2048,1280], index: 1, kind: input, shape index: {}]
  %s2 = inlined_call_operand.hbm [shape: f32[64,1280], index: 2, kind: output, shape index: {}]
  %s3 = sld [smem:[#allocation0]]
  $region18: #{tpu_custom_call.1} parent=0
    _
  %s5 = ssub.s32 1, %s3
  %s6 = scalar_select 0, %s5, %s3
  %s8 = sshll.u32 %s0, 4
  %s9 = int_to_ptr.hbm [resolvable:$true] %s8
  %11 = dma.hbm_to_smem %s9, 16, [#allocation3], [#allocation2]
  %13 = dma.done [#allocation2], 16
  %14 = sfence
  $region1: #{tpu_custom_call.1} parent=0
    #allocation4 [shape = 'u8[10485760]{0}', space=vmem, size = 0xa00000, scoped, tag = 'input window, operand 1, single buffered']
    #allocation5 [shape = 's32[1]{0}', space=sflag, size = 0x4, scoped, tag = 'scoped memory for tpu_custom_call.1']
    #allocation6 [shape = 's32[1]{0}', space=sflag, size = 0x4, scoped, tag = 'scoped memory for tpu_custom_call.1']
    #allocation7 [shape = 'u8[327680]{0}', space=vmem, size = 0x50000, scoped, tag = 'output window, operand 0, single buffered']
    %15 = vsyncpa [#allocation5], 0
    %16 = vsyncpa [#allocation6], 0
    // Predicated region
    $region2: #{tpu_custom_call.1} parent=1 // pred_check
      _
    $region3: #{tpu_custom_call.1} parent=1 // pred_check_branch
      %18 = sbr.rel (0) target = $region5
    $region4: #{tpu_custom_call.1} parent=1 // pred_region
      %20 = vsyncadd [#allocation5], 0
      %s21 = sshll.u32 %s1, 4
      %s22 = int_to_ptr.hbm [resolvable:$true] %s21
      %s23 = sshll.u32 [#allocation4], 4
      %s24 = int_to_ptr.vmem [resolvable:$true] %s23
      %29 = dma.hbm_to_vmem [thread:$0]  %s22, 327680, %s24, [#allocation5], 1280, 1280, 80
    $region5: #{tpu_custom_call.1} parent=1 // pred_fallthru
      _
    // Predicated region
    $region6: #{tpu_custom_call.1} parent=1 // pred_check
      _
    $region7: #{tpu_custom_call.1} parent=1 // pred_check_branch
      %31 = sbr.rel (0) target = $region9
    $region8: #{tpu_custom_call.1} parent=1 // pred_region
      %33 = dma.done [#allocation5], 327680
    $region9: #{tpu_custom_call.1} parent=1 // pred_fallthru
      _
    %s34 = smul.u32 0, 64
    %s35 = sld [smem:[#allocation3 + %s34]]
    %p36 = scmp.gt.s32.totalorder %s35, 0
    %s37 = scalar_select %p36, %s35, 0
    %p38 = scmp.lt.s32.totalorder %s37, 2047
    %s39 = scalar_select %p38, %s37, 2047
    %s40 = sshra.s32 %s39, 3
    %s41 = sand.u32 %s39, 7
    %s42 = sshra.s32 %s39, 3
    %s43 = sand.u32 %s39, 7
    %s44 = smul.u32 %s40, 10
    %s45 = smul.u32 %s44, 8
    %s46 = sadd.s32 %s45, %s43
    %s47 = scalar_lea.vmem [#allocation4], %s46
    %v48 = vld [vmem:[%s47] ss:$8 sm:$0xf]
    %v49 = vld [vmem:[%s47] ss:$8 sm:$0xf0]
    %v50 = vor.u32 %v48, %v49
    %s51 = sadd.s32 %s44, 8
    %s52 = smul.u32 %s51, 8
    %s53 = sadd.s32 %s52, %s43
    %s54 = scalar_lea.vmem [#allocation4], %s53
    %v55 = vld [vmem:[%s54] ss:$8 sm:$0x3]
    %56 = vst [vmem:[#allocation7] ss:$8 sm:$0xf] %v50
    %57 = vst [vmem:[#allocation7] ss:$8 sm:$0xf0] %v50
    %v58 = vlaneseq
    %vm59 = vcmp.ge.s32.totalorder %v58, 0
    %vm60 = vcmp.lt.s32.totalorder %v58, 256
    %vm61 = vmand %vm59, %vm60
    %s62 = scalar_lea.vmem [#allocation7], 64
    %63 = vst.msk [vmem:[%s62] ss:$8 sm:$0x3] %vm61, %v55
    %64 = vst.msk [vmem:[%s62] ss:$8 sm:$0x0] %vm61, %v55
    %s65 = sadd.s32 %s34, 1
    %s66 = sld [smem:[#allocation3 + %s65]]
    %p67 = scmp.gt.s32.totalorder %s66, 0
    %s68 = scalar_select %p67, %s66, 0
    %p69 = scmp.lt.s32.totalorder %s68, 2047
    %s70 = scalar_select %p69, %s68, 2047
    %s71 = sshra.s32 %s70, 3
    %s72 = sand.u32 %s70, 7
    %s73 = sshra.s32 %s70, 3
    %s74 = sand.u32 %s70, 7
    %s75 = smul.u32 %s71, 10
    %s76 = smul.u32 %s75, 8
    %s77 = sadd.s32 %s76, %s74
    %s78 = scalar_lea.vmem [#allocation4], %s77
    %v79 = vld [vmem:[%s78] ss:$8 sm:$0xf]
    %v80 = vld [vmem:[%s78] ss:$8 sm:$0xf0]
    %v81 = vor.u32 %v79, %v80
    %s82 = sadd.s32 %s75, 8
    %s83 = smul.u32 %s82, 8
    %s84 = sadd.s32 %s83, %s74
    %s85 = scalar_lea.vmem [#allocation4], %s84
    %v86 = vld [vmem:[%s85] ss:$8 sm:$0x3]
    %s87 = scalar_lea.vmem [#allocation7], 1
    %88 = vst [vmem:[%s87] ss:$8 sm:$0xf] %v81
    %89 = vst [vmem:[%s87] ss:$8 sm:$0xf0] %v81
    %s90 = scalar_lea.vmem [#allocation7], 65
    %91 = vst.msk [vmem:[%s90] ss:$8 sm:$0x3] %vm61, %v86
    %92 = vst.msk [vmem:[%s90] ss:$8 sm:$0x0] %vm61, %v86
    %s93 = sadd.s32 %s34, 2
    %s94 = sld [smem:[#allocation3 + %s93]]
    %p95 = scmp.gt.s32.totalorder %s94, 0
    %s96 = scalar_select %p95, %s94, 0
    %p97 = scmp.lt.s32.totalorder %s96, 2047
    %s98 = scalar_select %p97, %s96, 2047
    %s99 = sshra.s32 %s98, 3
    %s100 = sand.u32 %s98, 7
    %s101 = sshra.s32 %s98, 3
    %s102 = sand.u32 %s98, 7
    %s103 = smul.u32 %s99, 10
    %s104 = smul.u32 %s103, 8
    %s105 = sadd.s32 %s104, %s102
    %s106 = scalar_lea.vmem [#allocation4], %s105
    %v107 = vld [vmem:[%s106] ss:$8 sm:$0xf]
    %v108 = vld [vmem:[%s106] ss:$8 sm:$0xf0]
    %v109 = vor.u32 %v107, %v108
    %s110 = sadd.s32 %s103, 8
    %s111 = smul.u32 %s110, 8
    %s112 = sadd.s32 %s111, %s102
    %s113 = scalar_lea.vmem [#allocation4], %s112
    %v114 = vld [vmem:[%s113] ss:$8 sm:$0x3]
    %s115 = scalar_lea.vmem [#allocation7], 2
    %116 = vst [vmem:[%s115] ss:$8 sm:$0xf] %v109
    %117 = vst [vmem:[%s115] ss:$8 sm:$0xf0] %v109
    %s118 = scalar_lea.vmem [#allocation7], 66
    %119 = vst.msk [vmem:[%s118] ss:$8 sm:$0x3] %vm61, %v114
    %120 = vst.msk [vmem:[%s118] ss:$8 sm:$0x0] %vm61, %v114
    %s121 = sadd.s32 %s34, 3
    %s122 = sld [smem:[#allocation3 + %s121]]
    %p123 = scmp.gt.s32.totalorder %s122, 0
    %s124 = scalar_select %p123, %s122, 0
    %p125 = scmp.lt.s32.totalorder %s124, 2047
    %s126 = scalar_select %p125, %s124, 2047
    %s127 = sshra.s32 %s126, 3
    %s128 = sand.u32 %s126, 7
    %s129 = sshra.s32 %s126, 3
    %s130 = sand.u32 %s126, 7
    %s131 = smul.u32 %s127, 10
    %s132 = smul.u32 %s131, 8
    %s133 = sadd.s32 %s132, %s130
    %s134 = scalar_lea.vmem [#allocation4], %s133
    %v135 = vld [vmem:[%s134] ss:$8 sm:$0xf]
    %v136 = vld [vmem:[%s134] ss:$8 sm:$0xf0]
    %v137 = vor.u32 %v135, %v136
    %s138 = sadd.s32 %s131, 8
    %s139 = smul.u32 %s138, 8
    %s140 = sadd.s32 %s139, %s130
    %s141 = scalar_lea.vmem [#allocation4], %s140
    %v142 = vld [vmem:[%s141] ss:$8 sm:$0x3]
    %s143 = scalar_lea.vmem [#allocation7], 3
    %144 = vst [vmem:[%s143] ss:$8 sm:$0xf] %v137
    %145 = vst [vmem:[%s143] ss:$8 sm:$0xf0] %v137
    %s146 = scalar_lea.vmem [#allocation7], 67
    %147 = vst.msk [vmem:[%s146] ss:$8 sm:$0x3] %vm61, %v142
    %148 = vst.msk [vmem:[%s146] ss:$8 sm:$0x0] %vm61, %v142
    %s149 = sadd.s32 %s34, 4
    %s150 = sld [smem:[#allocation3 + %s149]]
    %p151 = scmp.gt.s32.totalorder %s150, 0
    %s152 = scalar_select %p151, %s150, 0
    %p153 = scmp.lt.s32.totalorder %s152, 2047
    %s154 = scalar_select %p153, %s152, 2047
    %s155 = sshra.s32 %s154, 3
    %s156 = sand.u32 %s154, 7
    %s157 = sshra.s32 %s154, 3
    %s158 = sand.u32 %s154, 7
    %s159 = smul.u32 %s155, 10
    %s160 = smul.u32 %s159, 8
    %s161 = sadd.s32 %s160, %s158
    %s162 = scalar_lea.vmem [#allocation4], %s161
    %v163 = vld [vmem:[%s162] ss:$8 sm:$0xf]
    %v164 = vld [vmem:[%s162] ss:$8 sm:$0xf0]
    %v165 = vor.u32 %v163, %v164
    %s166 = sadd.s32 %s159, 8
    %s167 = smul.u32 %s166, 8
    %s168 = sadd.s32 %s167, %s158
    %s169 = scalar_lea.vmem [#allocation4], %s168
    %v170 = vld [vmem:[%s169] ss:$8 sm:$0x3]
    %s171 = scalar_lea.vmem [#allocation7], 4
    %172 = vst [vmem:[%s171] ss:$8 sm:$0xf] %v165
    %173 = vst [vmem:[%s171] ss:$8 sm:$0xf0] %v165
    %s174 = scalar_lea.vmem [#allocation7], 68
    %175 = vst.msk [vmem:[%s174] ss:$8 sm:$0x3] %vm61, %v170
    %176 = vst.msk [vmem:[%s174] ss:$8 sm:$0x0] %vm61, %v170
    %s177 = sadd.s32 %s34, 5
    %s178 = sld [smem:[#allocation3 + %s177]]
    %p179 = scmp.gt.s32.totalorder %s178, 0
    %s180 = scalar_select %p179, %s178, 0
    %p181 = scmp.lt.s32.totalorder %s180, 2047
    %s182 = scalar_select %p181, %s180, 2047
    %s183 = sshra.s32 %s182, 3
    %s184 = sand.u32 %s182, 7
    %s185 = sshra.s32 %s182, 3
    %s186 = sand.u32 %s182, 7
    %s187 = smul.u32 %s183, 10
    %s188 = smul.u32 %s187, 8
    %s189 = sadd.s32 %s188, %s186
    %s190 = scalar_lea.vmem [#allocation4], %s189
    %v191 = vld [vmem:[%s190] ss:$8 sm:$0xf]
    %v192 = vld [vmem:[%s190] ss:$8 sm:$0xf0]
    %v193 = vor.u32 %v191, %v192
    %s194 = sadd.s32 %s187, 8
    %s195 = smul.u32 %s194, 8
    %s196 = sadd.s32 %s195, %s186
    %s197 = scalar_lea.vmem [#allocation4], %s196
    %v198 = vld [vmem:[%s197] ss:$8 sm:$0x3]
    %s199 = scalar_lea.vmem [#allocation7], 5
    %200 = vst [vmem:[%s199] ss:$8 sm:$0xf] %v193
    %201 = vst [vmem:[%s199] ss:$8 sm:$0xf0] %v193
    %s202 = scalar_lea.vmem [#allocation7], 69
    %203 = vst.msk [vmem:[%s202] ss:$8 sm:$0x3] %vm61, %v198
    %204 = vst.msk [vmem:[%s202] ss:$8 sm:$0x0] %vm61, %v198
    %s205 = sadd.s32 %s34, 6
    %s206 = sld [smem:[#allocation3 + %s205]]
    %p207 = scmp.gt.s32.totalorder %s206, 0
    %s208 = scalar_select %p207, %s206, 0
    %p209 = scmp.lt.s32.totalorder %s208, 2047
    %s210 = scalar_select %p209, %s208, 2047
    %s211 = sshra.s32 %s210, 3
    %s212 = sand.u32 %s210, 7
    %s213 = sshra.s32 %s210, 3
    %s214 = sand.u32 %s210, 7
    %s215 = smul.u32 %s211, 10
    %s216 = smul.u32 %s215, 8
    %s217 = sadd.s32 %s216, %s214
    %s218 = scalar_lea.vmem [#allocation4], %s217
    %v219 = vld [vmem:[%s218] ss:$8 sm:$0xf]
    %v220 = vld [vmem:[%s218] ss:$8 sm:$0xf0]
    %v221 = vor.u32 %v219, %v220
    %s222 = sadd.s32 %s215, 8
    %s223 = smul.u32 %s222, 8
    %s224 = sadd.s32 %s223, %s214
    %s225 = scalar_lea.vmem [#allocation4], %s224
    %v226 = vld [vmem:[%s225] ss:$8 sm:$0x3]
    %s227 = scalar_lea.vmem [#allocation7], 6
    %228 = vst [vmem:[%s227] ss:$8 sm:$0xf] %v221
    %229 = vst [vmem:[%s227] ss:$8 sm:$0xf0] %v221
    %s230 = scalar_lea.vmem [#allocation7], 70
    %231 = vst.msk [vmem:[%s230] ss:$8 sm:$0x3] %vm61, %v226
    %232 = vst.msk [vmem:[%s230] ss:$8 sm:$0x0] %vm61, %v226
    %s233 = sadd.s32 %s34, 7
    %s234 = sld [smem:[#allocation3 + %s233]]
    %p235 = scmp.gt.s32.totalorder %s234, 0
    %s236 = scalar_select %p235, %s234, 0
    %p237 = scmp.lt.s32.totalorder %s236, 2047
    %s238 = scalar_select %p237, %s236, 2047
    %s239 = sshra.s32 %s238, 3
    %s240 = sand.u32 %s238, 7
    %s241 = sshra.s32 %s238, 3
    %s242 = sand.u32 %s238, 7
    %s243 = smul.u32 %s239, 10
    %s244 = smul.u32 %s243, 8
    %s245 = sadd.s32 %s244, %s242
    %s246 = scalar_lea.vmem [#allocation4], %s245
    %v247 = vld [vmem:[%s246] ss:$8 sm:$0xf]
    %v248 = vld [vmem:[%s246] ss:$8 sm:$0xf0]
    %v249 = vor.u32 %v247, %v248
    %s250 = sadd.s32 %s243, 8
    %s251 = smul.u32 %s250, 8
    %s252 = sadd.s32 %s251, %s242
    %s253 = scalar_lea.vmem [#allocation4], %s252
    %v254 = vld [vmem:[%s253] ss:$8 sm:$0x3]
    %s255 = scalar_lea.vmem [#allocation7], 7
    %256 = vst [vmem:[%s255] ss:$8 sm:$0xf] %v249
    %257 = vst [vmem:[%s255] ss:$8 sm:$0xf0] %v249
    %s258 = scalar_lea.vmem [#allocation7], 71
    %259 = vst.msk [vmem:[%s258] ss:$8 sm:$0x3] %vm61, %v254
    %260 = vst.msk [vmem:[%s258] ss:$8 sm:$0x0] %vm61, %v254
    %s261 = sadd.s32 %s34, 8
    %s262 = sld [smem:[#allocation3 + %s261]]
    %p263 = scmp.gt.s32.totalorder %s262, 0
    %s264 = scalar_select %p263, %s262, 0
    %p265 = scmp.lt.s32.totalorder %s264, 2047
    %s266 = scalar_select %p265, %s264, 2047
    %s267 = sshra.s32 %s266, 3
    %s268 = sand.u32 %s266, 7
    %s269 = sshra.s32 %s266, 3
    %s270 = sand.u32 %s266, 7
    %s271 = smul.u32 %s267, 10
    %s272 = smul.u32 %s271, 8
    %s273 = sadd.s32 %s272, %s270
    %s274 = scalar_lea.vmem [#allocation4], %s273
    %v275 = vld [vmem:[%s274] ss:$8 sm:$0xf]
    %v276 = vld [vmem:[%s274] ss:$8 sm:$0xf0]
    %v277 = vor.u32 %v275, %v276
    %s278 = sadd.s32 %s271, 8
    %s279 = smul.u32 %s278, 8
    %s280 = sadd.s32 %s279, %s270
    %s281 = scalar_lea.vmem [#allocation4], %s280
    %v282 = vld [vmem:[%s281] ss:$8 sm:$0x3]
    %s283 = scalar_lea.vmem [#allocation7], 80
    %284 = vst [vmem:[%s283] ss:$8 sm:$0xf] %v277
    %285 = vst [vmem:[%s283] ss:$8 sm:$0xf0] %v277
    %s286 = scalar_lea.vmem [#allocation7], 144
    %287 = vst.msk [vmem:[%s286] ss:$8 sm:$0x3] %vm61, %v282
    %288 = vst.msk [vmem:[%s286] ss:$8 sm:$0x0] %vm61, %v282
    %s289 = sadd.s32 %s34, 9
    %s290 = sld [smem:[#allocation3 + %s289]]
    %p291 = scmp.gt.s32.totalorder %s290, 0
    %s292 = scalar_select %p291, %s290, 0
    %p293 = scmp.lt.s32.totalorder %s292, 2047
    %s294 = scalar_select %p293, %s292, 2047
    %s295 = sshra.s32 %s294, 3
    %s296 = sand.u32 %s294, 7
    %s297 = sshra.s32 %s294, 3
    %s298 = sand.u32 %s294, 7
    %s299 = smul.u32 %s295, 10
    %s300 = smul.u32 %s299, 8
    %s301 = sadd.s32 %s300, %s298
    %s302 = scalar_lea.vmem [#allocation4], %s301
    %v303 = vld [vmem:[%s302] ss:$8 sm:$0xf]
    %v304 = vld [vmem:[%s302] ss:$8 sm:$0xf0]
    %v305 = vor.u32 %v303, %v304
    %s306 = sadd.s32 %s299, 8
    %s307 = smul.u32 %s306, 8
    %s308 = sadd.s32 %s307, %s298
    %s309 = scalar_lea.vmem [#allocation4], %s308
    %v310 = vld [vmem:[%s309] ss:$8 sm:$0x3]
    %s311 = scalar_lea.vmem [#allocation7], 81
    %312 = vst [vmem:[%s311] ss:$8 sm:$0xf] %v305
    %313 = vst [vmem:[%s311] ss:$8 sm:$0xf0] %v305
    %s314 = scalar_lea.vmem [#allocation7], 145
    %315 = vst.msk [vmem:[%s314] ss:$8 sm:$0x3] %vm61, %v310
    %316 = vst.msk [vmem:[%s314] ss:$8 sm:$0x0] %vm61, %v310
    %s317 = sadd.s32 %s34, 10
    %s318 = sld [smem:[#allocation3 + %s317]]
    %p319 = scmp.gt.s32.totalorder %s318, 0
    %s320 = scalar_select %p319, %s318, 0
    %p321 = scmp.lt.s32.totalorder %s320, 2047
    %s322 = scalar_select %p321, %s320, 2047
    %s323 = sshra.s32 %s322, 3
    %s324 = sand.u32 %s322, 7
    %s325 = sshra.s32 %s322, 3
    %s326 = sand.u32 %s322, 7
    %s327 = smul.u32 %s323, 10
    %s328 = smul.u32 %s327, 8
    %s329 = sadd.s32 %s328, %s326
    %s330 = scalar_lea.vmem [#allocation4], %s329
    %v331 = vld [vmem:[%s330] ss:$8 sm:$0xf]
    %v332 = vld [vmem:[%s330] ss:$8 sm:$0xf0]
    %v333 = vor.u32 %v331, %v332
    %s334 = sadd.s32 %s327, 8
    %s335 = smul.u32 %s334, 8
    %s336 = sadd.s32 %s335, %s326
    %s337 = scalar_lea.vmem [#allocation4], %s336
    %v338 = vld [vmem:[%s337] ss:$8 sm:$0x3]
    %s339 = scalar_lea.vmem [#allocation7], 82
    %340 = vst [vmem:[%s339] ss:$8 sm:$0xf] %v333
    %341 = vst [vmem:[%s339] ss:$8 sm:$0xf0] %v333
    %s342 = scalar_lea.vmem [#allocation7], 146
    %343 = vst.msk [vmem:[%s342] ss:$8 sm:$0x3] %vm61, %v338
    %344 = vst.msk [vmem:[%s342] ss:$8 sm:$0x0] %vm61, %v338
    %s345 = sadd.s32 %s34, 11
    %s346 = sld [smem:[#allocation3 + %s345]]
    %p347 = scmp.gt.s32.totalorder %s346, 0
    %s348 = scalar_select %p347, %s346, 0
    %p349 = scmp.lt.s32.totalorder %s348, 2047
    %s350 = scalar_select %p349, %s348, 2047
    %s351 = sshra.s32 %s350, 3
    %s352 = sand.u32 %s350, 7
    %s353 = sshra.s32 %s350, 3
    %s354 = sand.u32 %s350, 7
    %s355 = smul.u32 %s351, 10
    %s356 = smul.u32 %s355, 8
    %s357 = sadd.s32 %s356, %s354
    %s358 = scalar_lea.vmem [#allocation4], %s357
    %v359 = vld [vmem:[%s358] ss:$8 sm:$0xf]
    %v360 = vld [vmem:[%s358] ss:$8 sm:$0xf0]
    %v361 = vor.u32 %v359, %v360
    %s362 = sadd.s32 %s355, 8
    %s363 = smul.u32 %s362, 8
    %s364 = sadd.s32 %s363, %s354
    %s365 = scalar_lea.vmem [#allocation4], %s364
    %v366 = vld [vmem:[%s365] ss:$8 sm:$0x3]
    %s367 = scalar_lea.vmem [#allocation7], 83
    %368 = vst [vmem:[%s367] ss:$8 sm:$0xf] %v361
    %369 = vst [vmem:[%s367] ss:$8 sm:$0xf0] %v361
    %s370 = scalar_lea.vmem [#allocation7], 147
    %371 = vst.msk [vmem:[%s370] ss:$8 sm:$0x3] %vm61, %v366
    %372 = vst.msk [vmem:[%s370] ss:$8 sm:$0x0] %vm61, %v366
    %s373 = sadd.s32 %s34, 12
    %s374 = sld [smem:[#allocation3 + %s373]]
    %p375 = scmp.gt.s32.totalorder %s374, 0
    %s376 = scalar_select %p375, %s374, 0
    %p377 = scmp.lt.s32.totalorder %s376, 2047
    %s378 = scalar_select %p377, %s376, 2047
    %s379 = sshra.s32 %s378, 3
    %s380 = sand.u32 %s378, 7
    %s381 = sshra.s32 %s378, 3
    %s382 = sand.u32 %s378, 7
    %s383 = smul.u32 %s379, 10
    %s384 = smul.u32 %s383, 8
    %s385 = sadd.s32 %s384, %s382
    %s386 = scalar_lea.vmem [#allocation4], %s385
    %v387 = vld [vmem:[%s386] ss:$8 sm:$0xf]
    %v388 = vld [vmem:[%s386] ss:$8 sm:$0xf0]
    %v389 = vor.u32 %v387, %v388
    %s390 = sadd.s32 %s383, 8
    %s391 = smul.u32 %s390, 8
    %s392 = sadd.s32 %s391, %s382
    %s393 = scalar_lea.vmem [#allocation4], %s392
    %v394 = vld [vmem:[%s393] ss:$8 sm:$0x3]
    %s395 = scalar_lea.vmem [#allocation7], 84
    %396 = vst [vmem:[%s395] ss:$8 sm:$0xf] %v389
    %397 = vst [vmem:[%s395] ss:$8 sm:$0xf0] %v389
    %s398 = scalar_lea.vmem [#allocation7], 148
    %399 = vst.msk [vmem:[%s398] ss:$8 sm:$0x3] %vm61, %v394
    %400 = vst.msk [vmem:[%s398] ss:$8 sm:$0x0] %vm61, %v394
    %s401 = sadd.s32 %s34, 13
    %s402 = sld [smem:[#allocation3 + %s401]]
    %p403 = scmp.gt.s32.totalorder %s402, 0
    %s404 = scalar_select %p403, %s402, 0
    %p405 = scmp.lt.s32.totalorder %s404, 2047
    %s406 = scalar_select %p405, %s404, 2047
    %s407 = sshra.s32 %s406, 3
    %s408 = sand.u32 %s406, 7
    %s409 = sshra.s32 %s406, 3
    %s410 = sand.u32 %s406, 7
    %s411 = smul.u32 %s407, 10
    %s412 = smul.u32 %s411, 8
    %s413 = sadd.s32 %s412, %s410
    %s414 = scalar_lea.vmem [#allocation4], %s413
    %v415 = vld [vmem:[%s414] ss:$8 sm:$0xf]
    %v416 = vld [vmem:[%s414] ss:$8 sm:$0xf0]
    %v417 = vor.u32 %v415, %v416
    %s418 = sadd.s32 %s411, 8
    %s419 = smul.u32 %s418, 8
    %s420 = sadd.s32 %s419, %s410
    %s421 = scalar_lea.vmem [#allocation4], %s420
    %v422 = vld [vmem:[%s421] ss:$8 sm:$0x3]
    %s423 = scalar_lea.vmem [#allocation7], 85
    %424 = vst [vmem:[%s423] ss:$8 sm:$0xf] %v417
    %425 = vst [vmem:[%s423] ss:$8 sm:$0xf0] %v417
    %s426 = scalar_lea.vmem [#allocation7], 149
    %427 = vst.msk [vmem:[%s426] ss:$8 sm:$0x3] %vm61, %v422
    %428 = vst.msk [vmem:[%s426] ss:$8 sm:$0x0] %vm61, %v422
    %s429 = sadd.s32 %s34, 14
    %s430 = sld [smem:[#allocation3 + %s429]]
    %p431 = scmp.gt.s32.totalorder %s430, 0
    %s432 = scalar_select %p431, %s430, 0
    %p433 = scmp.lt.s32.totalorder %s432, 2047
    %s434 = scalar_select %p433, %s432, 2047
    %s435 = sshra.s32 %s434, 3
    %s436 = sand.u32 %s434, 7
    %s437 = sshra.s32 %s434, 3
    %s438 = sand.u32 %s434, 7
    %s439 = smul.u32 %s435, 10
    %s440 = smul.u32 %s439, 8
    %s441 = sadd.s32 %s440, %s438
    %s442 = scalar_lea.vmem [#allocation4], %s441
    %v443 = vld [vmem:[%s442] ss:$8 sm:$0xf]
    %v444 = vld [vmem:[%s442] ss:$8 sm:$0xf0]
    %v445 = vor.u32 %v443, %v444
    %s446 = sadd.s32 %s439, 8
    %s447 = smul.u32 %s446, 8
    %s448 = sadd.s32 %s447, %s438
    %s449 = scalar_lea.vmem [#allocation4], %s448
    %v450 = vld [vmem:[%s449] ss:$8 sm:$0x3]
    %s451 = scalar_lea.vmem [#allocation7], 86
    %452 = vst [vmem:[%s451] ss:$8 sm:$0xf] %v445
    %453 = vst [vmem:[%s451] ss:$8 sm:$0xf0] %v445
    %s454 = scalar_lea.vmem [#allocation7], 150
    %455 = vst.msk [vmem:[%s454] ss:$8 sm:$0x3] %vm61, %v450
    %456 = vst.msk [vmem:[%s454] ss:$8 sm:$0x0] %vm61, %v450
    %s457 = sadd.s32 %s34, 15
    %s458 = sld [smem:[#allocation3 + %s457]]
    %p459 = scmp.gt.s32.totalorder %s458, 0
    %s460 = scalar_select %p459, %s458, 0
    %p461 = scmp.lt.s32.totalorder %s460, 2047
    %s462 = scalar_select %p461, %s460, 2047
    %s463 = sshra.s32 %s462, 3
    %s464 = sand.u32 %s462, 7
    %s465 = sshra.s32 %s462, 3
    %s466 = sand.u32 %s462, 7
    %s467 = smul.u32 %s463, 10
    %s468 = smul.u32 %s467, 8
    %s469 = sadd.s32 %s468, %s466
    %s470 = scalar_lea.vmem [#allocation4], %s469
    %v471 = vld [vmem:[%s470] ss:$8 sm:$0xf]
    %v472 = vld [vmem:[%s470] ss:$8 sm:$0xf0]
    %v473 = vor.u32 %v471, %v472
    %s474 = sadd.s32 %s467, 8
    %s475 = smul.u32 %s474, 8
    %s476 = sadd.s32 %s475, %s466
    %s477 = scalar_lea.vmem [#allocation4], %s476
    %v478 = vld [vmem:[%s477] ss:$8 sm:$0x3]
    %s479 = scalar_lea.vmem [#allocation7], 87
    %480 = vst [vmem:[%s479] ss:$8 sm:$0xf] %v473
    %481 = vst [vmem:[%s479] ss:$8 sm:$0xf0] %v473
    %s482 = scalar_lea.vmem [#allocation7], 151
    %483 = vst.msk [vmem:[%s482] ss:$8 sm:$0x3] %vm61, %v478
    %484 = vst.msk [vmem:[%s482] ss:$8 sm:$0x0] %vm61, %v478
    %s485 = sadd.s32 %s34, 16
    %s486 = sld [smem:[#allocation3 + %s485]]
    %p487 = scmp.gt.s32.totalorder %s486, 0
    %s488 = scalar_select %p487, %s486, 0
    %p489 = scmp.lt.s32.totalorder %s488, 2047
    %s490 = scalar_select %p489, %s488, 2047
    %s491 = sshra.s32 %s490, 3
    %s492 = sand.u32 %s490, 7
    %s493 = sshra.s32 %s490, 3
    %s494 = sand.u32 %s490, 7
    %s495 = smul.u32 %s491, 10
    %s496 = smul.u32 %s495, 8
    %s497 = sadd.s32 %s496, %s494
    %s498 = scalar_lea.vmem [#allocation4], %s497
    %v499 = vld [vmem:[%s498] ss:$8 sm:$0xf]
    %v500 = vld [vmem:[%s498] ss:$8 sm:$0xf0]
    %v501 = vor.u32 %v499, %v500
    %s502 = sadd.s32 %s495, 8
    %s503 = smul.u32 %s502, 8
    %s504 = sadd.s32 %s503, %s494
    %s505 = scalar_lea.vmem [#allocation4], %s504
    %v506 = vld [vmem:[%s505] ss:$8 sm:$0x3]
    %s507 = scalar_lea.vmem [#allocation7], 160
    %508 = vst [vmem:[%s507] ss:$8 sm:$0xf] %v501
    %509 = vst [vmem:[%s507] ss:$8 sm:$0xf0] %v501
    %s510 = scalar_lea.vmem [#allocation7], 224
    %511 = vst.msk [vmem:[%s510] ss:$8 sm:$0x3] %vm61, %v506
    %512 = vst.msk [vmem:[%s510] ss:$8 sm:$0x0] %vm61, %v506
    %s513 = sadd.s32 %s34, 17
    %s514 = sld [smem:[#allocation3 + %s513]]
    %p515 = scmp.gt.s32.totalorder %s514, 0
    %s516 = scalar_select %p515, %s514, 0
    %p517 = scmp.lt.s32.totalorder %s516, 2047
    %s518 = scalar_select %p517, %s516, 2047
    %s519 = sshra.s32 %s518, 3
    %s520 = sand.u32 %s518, 7
    %s521 = sshra.s32 %s518, 3
    %s522 = sand.u32 %s518, 7
    %s523 = smul.u32 %s519, 10
    %s524 = smul.u32 %s523, 8
    %s525 = sadd.s32 %s524, %s522
    %s526 = scalar_lea.vmem [#allocation4], %s525
    %v527 = vld [vmem:[%s526] ss:$8 sm:$0xf]
    %v528 = vld [vmem:[%s526] ss:$8 sm:$0xf0]
    %v529 = vor.u32 %v527, %v528
    %s530 = sadd.s32 %s523, 8
    %s531 = smul.u32 %s530, 8
    %s532 = sadd.s32 %s531, %s522
    %s533 = scalar_lea.vmem [#allocation4], %s532
    %v534 = vld [vmem:[%s533] ss:$8 sm:$0x3]
    %s535 = scalar_lea.vmem [#allocation7], 161
    %536 = vst [vmem:[%s535] ss:$8 sm:$0xf] %v529
    %537 = vst [vmem:[%s535] ss:$8 sm:$0xf0] %v529
    %s538 = scalar_lea.vmem [#allocation7], 225
    %539 = vst.msk [vmem:[%s538] ss:$8 sm:$0x3] %vm61, %v534
    %540 = vst.msk [vmem:[%s538] ss:$8 sm:$0x0] %vm61, %v534
    %s541 = sadd.s32 %s34, 18
    %s542 = sld [smem:[#allocation3 + %s541]]
    %p543 = scmp.gt.s32.totalorder %s542, 0
    %s544 = scalar_select %p543, %s542, 0
    %p545 = scmp.lt.s32.totalorder %s544, 2047
    %s546 = scalar_select %p545, %s544, 2047
    %s547 = sshra.s32 %s546, 3
    %s548 = sand.u32 %s546, 7
    %s549 = sshra.s32 %s546, 3
    %s550 = sand.u32 %s546, 7
    %s551 = smul.u32 %s547, 10
    %s552 = smul.u32 %s551, 8
    %s553 = sadd.s32 %s552, %s550
    %s554 = scalar_lea.vmem [#allocation4], %s553
    %v555 = vld [vmem:[%s554] ss:$8 sm:$0xf]
    %v556 = vld [vmem:[%s554] ss:$8 sm:$0xf0]
    %v557 = vor.u32 %v555, %v556
    %s558 = sadd.s32 %s551, 8
    %s559 = smul.u32 %s558, 8
    %s560 = sadd.s32 %s559, %s550
    %s561 = scalar_lea.vmem [#allocation4], %s560
    %v562 = vld [vmem:[%s561] ss:$8 sm:$0x3]
    %s563 = scalar_lea.vmem [#allocation7], 162
    %564 = vst [vmem:[%s563] ss:$8 sm:$0xf] %v557
    %565 = vst [vmem:[%s563] ss:$8 sm:$0xf0] %v557
    %s566 = scalar_lea.vmem [#allocation7], 226
    %567 = vst.msk [vmem:[%s566] ss:$8 sm:$0x3] %vm61, %v562
    %568 = vst.msk [vmem:[%s566] ss:$8 sm:$0x0] %vm61, %v562
    %s569 = sadd.s32 %s34, 19
    %s570 = sld [smem:[#allocation3 + %s569]]
    %p571 = scmp.gt.s32.totalorder %s570, 0
    %s572 = scalar_select %p571, %s570, 0
    %p573 = scmp.lt.s32.totalorder %s572, 2047
    %s574 = scalar_select %p573, %s572, 2047
    %s575 = sshra.s32 %s574, 3
    %s576 = sand.u32 %s574, 7
    %s577 = sshra.s32 %s574, 3
    %s578 = sand.u32 %s574, 7
    %s579 = smul.u32 %s575, 10
    %s580 = smul.u32 %s579, 8
    %s581 = sadd.s32 %s580, %s578
    %s582 = scalar_lea.vmem [#allocation4], %s581
    %v583 = vld [vmem:[%s582] ss:$8 sm:$0xf]
    %v584 = vld [vmem:[%s582] ss:$8 sm:$0xf0]
    %v585 = vor.u32 %v583, %v584
    %s586 = sadd.s32 %s579, 8
    %s587 = smul.u32 %s586, 8
    %s588 = sadd.s32 %s587, %s578
    %s589 = scalar_lea.vmem [#allocation4], %s588
    %v590 = vld [vmem:[%s589] ss:$8 sm:$0x3]
    %s591 = scalar_lea.vmem [#allocation7], 163
    %592 = vst [vmem:[%s591] ss:$8 sm:$0xf] %v585
    %593 = vst [vmem:[%s591] ss:$8 sm:$0xf0] %v585
    %s594 = scalar_lea.vmem [#allocation7], 227
    %595 = vst.msk [vmem:[%s594] ss:$8 sm:$0x3] %vm61, %v590
    %596 = vst.msk [vmem:[%s594] ss:$8 sm:$0x0] %vm61, %v590
    %s597 = sadd.s32 %s34, 20
    %s598 = sld [smem:[#allocation3 + %s597]]
    %p599 = scmp.gt.s32.totalorder %s598, 0
    %s600 = scalar_select %p599, %s598, 0
    %p601 = scmp.lt.s32.totalorder %s600, 2047
    %s602 = scalar_select %p601, %s600, 2047
    %s603 = sshra.s32 %s602, 3
    %s604 = sand.u32 %s602, 7
    %s605 = sshra.s32 %s602, 3
    %s606 = sand.u32 %s602, 7
    %s607 = smul.u32 %s603, 10
    %s608 = smul.u32 %s607, 8
    %s609 = sadd.s32 %s608, %s606
    %s610 = scalar_lea.vmem [#allocation4], %s609
    %v611 = vld [vmem:[%s610] ss:$8 sm:$0xf]
    %v612 = vld [vmem:[%s610] ss:$8 sm:$0xf0]
    %v613 = vor.u32 %v611, %v612
    %s614 = sadd.s32 %s607, 8
    %s615 = smul.u32 %s614, 8
    %s616 = sadd.s32 %s615, %s606
    %s617 = scalar_lea.vmem [#allocation4], %s616
    %v618 = vld [vmem:[%s617] ss:$8 sm:$0x3]
    %s619 = scalar_lea.vmem [#allocation7], 164
    %620 = vst [vmem:[%s619] ss:$8 sm:$0xf] %v613
    %621 = vst [vmem:[%s619] ss:$8 sm:$0xf0] %v613
    %s622 = scalar_lea.vmem [#allocation7], 228
    %623 = vst.msk [vmem:[%s622] ss:$8 sm:$0x3] %vm61, %v618
    %624 = vst.msk [vmem:[%s622] ss:$8 sm:$0x0] %vm61, %v618
    %s625 = sadd.s32 %s34, 21
    %s626 = sld [smem:[#allocation3 + %s625]]
    %p627 = scmp.gt.s32.totalorder %s626, 0
    %s628 = scalar_select %p627, %s626, 0
    %p629 = scmp.lt.s32.totalorder %s628, 2047
    %s630 = scalar_select %p629, %s628, 2047
    %s631 = sshra.s32 %s630, 3
    %s632 = sand.u32 %s630, 7
    %s633 = sshra.s32 %s630, 3
    %s634 = sand.u32 %s630, 7
    %s635 = smul.u32 %s631, 10
    %s636 = smul.u32 %s635, 8
    %s637 = sadd.s32 %s636, %s634
    %s638 = scalar_lea.vmem [#allocation4], %s637
    %v639 = vld [vmem:[%s638] ss:$8 sm:$0xf]
    %v640 = vld [vmem:[%s638] ss:$8 sm:$0xf0]
    %v641 = vor.u32 %v639, %v640
    %s642 = sadd.s32 %s635, 8
    %s643 = smul.u32 %s642, 8
    %s644 = sadd.s32 %s643, %s634
    %s645 = scalar_lea.vmem [#allocation4], %s644
    %v646 = vld [vmem:[%s645] ss:$8 sm:$0x3]
    %s647 = scalar_lea.vmem [#allocation7], 165
    %648 = vst [vmem:[%s647] ss:$8 sm:$0xf] %v641
    %649 = vst [vmem:[%s647] ss:$8 sm:$0xf0] %v641
    %s650 = scalar_lea.vmem [#allocation7], 229
    %651 = vst.msk [vmem:[%s650] ss:$8 sm:$0x3] %vm61, %v646
    %652 = vst.msk [vmem:[%s650] ss:$8 sm:$0x0] %vm61, %v646
    %s653 = sadd.s32 %s34, 22
    %s654 = sld [smem:[#allocation3 + %s653]]
    %p655 = scmp.gt.s32.totalorder %s654, 0
    %s656 = scalar_select %p655, %s654, 0
    %p657 = scmp.lt.s32.totalorder %s656, 2047
    %s658 = scalar_select %p657, %s656, 2047
    %s659 = sshra.s32 %s658, 3
    %s660 = sand.u32 %s658, 7
    %s661 = sshra.s32 %s658, 3
    %s662 = sand.u32 %s658, 7
    %s663 = smul.u32 %s659, 10
    %s664 = smul.u32 %s663, 8
    %s665 = sadd.s32 %s664, %s662
    %s666 = scalar_lea.vmem [#allocation4], %s665
    %v667 = vld [vmem:[%s666] ss:$8 sm:$0xf]
    %v668 = vld [vmem:[%s666] ss:$8 sm:$0xf0]
    %v669 = vor.u32 %v667, %v668
    %s670 = sadd.s32 %s663, 8
    %s671 = smul.u32 %s670, 8
    %s672 = sadd.s32 %s671, %s662
    %s673 = scalar_lea.vmem [#allocation4], %s672
    %v674 = vld [vmem:[%s673] ss:$8 sm:$0x3]
    %s675 = scalar_lea.vmem [#allocation7], 166
    %676 = vst [vmem:[%s675] ss:$8 sm:$0xf] %v669
    %677 = vst [vmem:[%s675] ss:$8 sm:$0xf0] %v669
    %s678 = scalar_lea.vmem [#allocation7], 230
    %679 = vst.msk [vmem:[%s678] ss:$8 sm:$0x3] %vm61, %v674
    %680 = vst.msk [vmem:[%s678] ss:$8 sm:$0x0] %vm61, %v674
    %s681 = sadd.s32 %s34, 23
    %s682 = sld [smem:[#allocation3 + %s681]]
    %p683 = scmp.gt.s32.totalorder %s682, 0
    %s684 = scalar_select %p683, %s682, 0
    %p685 = scmp.lt.s32.totalorder %s684, 2047
    %s686 = scalar_select %p685, %s684, 2047
    %s687 = sshra.s32 %s686, 3
    %s688 = sand.u32 %s686, 7
    %s689 = sshra.s32 %s686, 3
    %s690 = sand.u32 %s686, 7
    %s691 = smul.u32 %s687, 10
    %s692 = smul.u32 %s691, 8
    %s693 = sadd.s32 %s692, %s690
    %s694 = scalar_lea.vmem [#allocation4], %s693
    %v695 = vld [vmem:[%s694] ss:$8 sm:$0xf]
    %v696 = vld [vmem:[%s694] ss:$8 sm:$0xf0]
    %v697 = vor.u32 %v695, %v696
    %s698 = sadd.s32 %s691, 8
    %s699 = smul.u32 %s698, 8
    %s700 = sadd.s32 %s699, %s690
    %s701 = scalar_lea.vmem [#allocation4], %s700
    %v702 = vld [vmem:[%s701] ss:$8 sm:$0x3]
    %s703 = scalar_lea.vmem [#allocation7], 167
    %704 = vst [vmem:[%s703] ss:$8 sm:$0xf] %v697
    %705 = vst [vmem:[%s703] ss:$8 sm:$0xf0] %v697
    %s706 = scalar_lea.vmem [#allocation7], 231
    %707 = vst.msk [vmem:[%s706] ss:$8 sm:$0x3] %vm61, %v702
    %708 = vst.msk [vmem:[%s706] ss:$8 sm:$0x0] %vm61, %v702
    %s709 = sadd.s32 %s34, 24
    %s710 = sld [smem:[#allocation3 + %s709]]
    %p711 = scmp.gt.s32.totalorder %s710, 0
    %s712 = scalar_select %p711, %s710, 0
    %p713 = scmp.lt.s32.totalorder %s712, 2047
    %s714 = scalar_select %p713, %s712, 2047
    %s715 = sshra.s32 %s714, 3
    %s716 = sand.u32 %s714, 7
    %s717 = sshra.s32 %s714, 3
    %s718 = sand.u32 %s714, 7
    %s719 = smul.u32 %s715, 10
    %s720 = smul.u32 %s719, 8
    %s721 = sadd.s32 %s720, %s718
    %s722 = scalar_lea.vmem [#allocation4], %s721
    %v723 = vld [vmem:[%s722] ss:$8 sm:$0xf]
    %v724 = vld [vmem:[%s722] ss:$8 sm:$0xf0]
    %v725 = vor.u32 %v723, %v724
    %s726 = sadd.s32 %s719, 8
    %s727 = smul.u32 %s726, 8
    %s728 = sadd.s32 %s727, %s718
    %s729 = scalar_lea.vmem [#allocation4], %s728
    %v730 = vld [vmem:[%s729] ss:$8 sm:$0x3]
    %s731 = scalar_lea.vmem [#allocation7], 240
    %732 = vst [vmem:[%s731] ss:$8 sm:$0xf] %v725
    %733 = vst [vmem:[%s731] ss:$8 sm:$0xf0] %v725
    %s734 = scalar_lea.vmem [#allocation7], 304
    %735 = vst.msk [vmem:[%s734] ss:$8 sm:$0x3] %vm61, %v730
    %736 = vst.msk [vmem:[%s734] ss:$8 sm:$0x0] %vm61, %v730
    %s737 = sadd.s32 %s34, 25
    %s738 = sld [smem:[#allocation3 + %s737]]
    %p739 = scmp.gt.s32.totalorder %s738, 0
    %s740 = scalar_select %p739, %s738, 0
    %p741 = scmp.lt.s32.totalorder %s740, 2047
    %s742 = scalar_select %p741, %s740, 2047
    %s743 = sshra.s32 %s742, 3
    %s744 = sand.u32 %s742, 7
    %s745 = sshra.s32 %s742, 3
    %s746 = sand.u32 %s742, 7
    %s747 = smul.u32 %s743, 10
    %s748 = smul.u32 %s747, 8
    %s749 = sadd.s32 %s748, %s746
    %s750 = scalar_lea.vmem [#allocation4], %s749
    %v751 = vld [vmem:[%s750] ss:$8 sm:$0xf]
    %v752 = vld [vmem:[%s750] ss:$8 sm:$0xf0]
    %v753 = vor.u32 %v751, %v752
    %s754 = sadd.s32 %s747, 8
    %s755 = smul.u32 %s754, 8
    %s756 = sadd.s32 %s755, %s746
    %s757 = scalar_lea.vmem [#allocation4], %s756
    %v758 = vld [vmem:[%s757] ss:$8 sm:$0x3]
    %s759 = scalar_lea.vmem [#allocation7], 241
    %760 = vst [vmem:[%s759] ss:$8 sm:$0xf] %v753
    %761 = vst [vmem:[%s759] ss:$8 sm:$0xf0] %v753
    %s762 = scalar_lea.vmem [#allocation7], 305
    %763 = vst.msk [vmem:[%s762] ss:$8 sm:$0x3] %vm61, %v758
    %764 = vst.msk [vmem:[%s762] ss:$8 sm:$0x0] %vm61, %v758
    %s765 = sadd.s32 %s34, 26
    %s766 = sld [smem:[#allocation3 + %s765]]
    %p767 = scmp.gt.s32.totalorder %s766, 0
    %s768 = scalar_select %p767, %s766, 0
    %p769 = scmp.lt.s32.totalorder %s768, 2047
    %s770 = scalar_select %p769, %s768, 2047
    %s771 = sshra.s32 %s770, 3
    %s772 = sand.u32 %s770, 7
    %s773 = sshra.s32 %s770, 3
    %s774 = sand.u32 %s770, 7
    %s775 = smul.u32 %s771, 10
    %s776 = smul.u32 %s775, 8
    %s777 = sadd.s32 %s776, %s774
    %s778 = scalar_lea.vmem [#allocation4], %s777
    %v779 = vld [vmem:[%s778] ss:$8 sm:$0xf]
    %v780 = vld [vmem:[%s778] ss:$8 sm:$0xf0]
    %v781 = vor.u32 %v779, %v780
    %s782 = sadd.s32 %s775, 8
    %s783 = smul.u32 %s782, 8
    %s784 = sadd.s32 %s783, %s774
    %s785 = scalar_lea.vmem [#allocation4], %s784
    %v786 = vld [vmem:[%s785] ss:$8 sm:$0x3]
    %s787 = scalar_lea.vmem [#allocation7], 242
    %788 = vst [vmem:[%s787] ss:$8 sm:$0xf] %v781
    %789 = vst [vmem:[%s787] ss:$8 sm:$0xf0] %v781
    %s790 = scalar_lea.vmem [#allocation7], 306
    %791 = vst.msk [vmem:[%s790] ss:$8 sm:$0x3] %vm61, %v786
    %792 = vst.msk [vmem:[%s790] ss:$8 sm:$0x0] %vm61, %v786
    %s793 = sadd.s32 %s34, 27
    %s794 = sld [smem:[#allocation3 + %s793]]
    %p795 = scmp.gt.s32.totalorder %s794, 0
    %s796 = scalar_select %p795, %s794, 0
    %p797 = scmp.lt.s32.totalorder %s796, 2047
    %s798 = scalar_select %p797, %s796, 2047
    %s799 = sshra.s32 %s798, 3
    %s800 = sand.u32 %s798, 7
    %s801 = sshra.s32 %s798, 3
    %s802 = sand.u32 %s798, 7
    %s803 = smul.u32 %s799, 10
    %s804 = smul.u32 %s803, 8
    %s805 = sadd.s32 %s804, %s802
    %s806 = scalar_lea.vmem [#allocation4], %s805
    %v807 = vld [vmem:[%s806] ss:$8 sm:$0xf]
    %v808 = vld [vmem:[%s806] ss:$8 sm:$0xf0]
    %v809 = vor.u32 %v807, %v808
    %s810 = sadd.s32 %s803, 8
    %s811 = smul.u32 %s810, 8
    %s812 = sadd.s32 %s811, %s802
    %s813 = scalar_lea.vmem [#allocation4], %s812
    %v814 = vld [vmem:[%s813] ss:$8 sm:$0x3]
    %s815 = scalar_lea.vmem [#allocation7], 243
    %816 = vst [vmem:[%s815] ss:$8 sm:$0xf] %v809
    %817 = vst [vmem:[%s815] ss:$8 sm:$0xf0] %v809
    %s818 = scalar_lea.vmem [#allocation7], 307
    %819 = vst.msk [vmem:[%s818] ss:$8 sm:$0x3] %vm61, %v814
    %820 = vst.msk [vmem:[%s818] ss:$8 sm:$0x0] %vm61, %v814
    %s821 = sadd.s32 %s34, 28
    %s822 = sld [smem:[#allocation3 + %s821]]
    %p823 = scmp.gt.s32.totalorder %s822, 0
    %s824 = scalar_select %p823, %s822, 0
    %p825 = scmp.lt.s32.totalorder %s824, 2047
    %s826 = scalar_select %p825, %s824, 2047
    %s827 = sshra.s32 %s826, 3
    %s828 = sand.u32 %s826, 7
    %s829 = sshra.s32 %s826, 3
    %s830 = sand.u32 %s826, 7
    %s831 = smul.u32 %s827, 10
    %s832 = smul.u32 %s831, 8
    %s833 = sadd.s32 %s832, %s830
    %s834 = scalar_lea.vmem [#allocation4], %s833
    %v835 = vld [vmem:[%s834] ss:$8 sm:$0xf]
    %v836 = vld [vmem:[%s834] ss:$8 sm:$0xf0]
    %v837 = vor.u32 %v835, %v836
    %s838 = sadd.s32 %s831, 8
    %s839 = smul.u32 %s838, 8
    %s840 = sadd.s32 %s839, %s830
    %s841 = scalar_lea.vmem [#allocation4], %s840
    %v842 = vld [vmem:[%s841] ss:$8 sm:$0x3]
    %s843 = scalar_lea.vmem [#allocation7], 244
    %844 = vst [vmem:[%s843] ss:$8 sm:$0xf] %v837
    %845 = vst [vmem:[%s843] ss:$8 sm:$0xf0] %v837
    %s846 = scalar_lea.vmem [#allocation7], 308
    %847 = vst.msk [vmem:[%s846] ss:$8 sm:$0x3] %vm61, %v842
    %848 = vst.msk [vmem:[%s846] ss:$8 sm:$0x0] %vm61, %v842
    %s849 = sadd.s32 %s34, 29
    %s850 = sld [smem:[#allocation3 + %s849]]
    %p851 = scmp.gt.s32.totalorder %s850, 0
    %s852 = scalar_select %p851, %s850, 0
    %p853 = scmp.lt.s32.totalorder %s852, 2047
    %s854 = scalar_select %p853, %s852, 2047
    %s855 = sshra.s32 %s854, 3
    %s856 = sand.u32 %s854, 7
    %s857 = sshra.s32 %s854, 3
    %s858 = sand.u32 %s854, 7
    %s859 = smul.u32 %s855, 10
    %s860 = smul.u32 %s859, 8
    %s861 = sadd.s32 %s860, %s858
    %s862 = scalar_lea.vmem [#allocation4], %s861
    %v863 = vld [vmem:[%s862] ss:$8 sm:$0xf]
    %v864 = vld [vmem:[%s862] ss:$8 sm:$0xf0]
    %v865 = vor.u32 %v863, %v864
    %s866 = sadd.s32 %s859, 8
    %s867 = smul.u32 %s866, 8
    %s868 = sadd.s32 %s867, %s858
    %s869 = scalar_lea.vmem [#allocation4], %s868
    %v870 = vld [vmem:[%s869] ss:$8 sm:$0x3]
    %s871 = scalar_lea.vmem [#allocation7], 245
    %872 = vst [vmem:[%s871] ss:$8 sm:$0xf] %v865
    %873 = vst [vmem:[%s871] ss:$8 sm:$0xf0] %v865
    %s874 = scalar_lea.vmem [#allocation7], 309
    %875 = vst.msk [vmem:[%s874] ss:$8 sm:$0x3] %vm61, %v870
    %876 = vst.msk [vmem:[%s874] ss:$8 sm:$0x0] %vm61, %v870
    %s877 = sadd.s32 %s34, 30
    %s878 = sld [smem:[#allocation3 + %s877]]
    %p879 = scmp.gt.s32.totalorder %s878, 0
    %s880 = scalar_select %p879, %s878, 0
    %p881 = scmp.lt.s32.totalorder %s880, 2047
    %s882 = scalar_select %p881, %s880, 2047
    %s883 = sshra.s32 %s882, 3
    %s884 = sand.u32 %s882, 7
    %s885 = sshra.s32 %s882, 3
    %s886 = sand.u32 %s882, 7
    %s887 = smul.u32 %s883, 10
    %s888 = smul.u32 %s887, 8
    %s889 = sadd.s32 %s888, %s886
    %s890 = scalar_lea.vmem [#allocation4], %s889
    %v891 = vld [vmem:[%s890] ss:$8 sm:$0xf]
    %v892 = vld [vmem:[%s890] ss:$8 sm:$0xf0]
    %v893 = vor.u32 %v891, %v892
    %s894 = sadd.s32 %s887, 8
    %s895 = smul.u32 %s894, 8
    %s896 = sadd.s32 %s895, %s886
    %s897 = scalar_lea.vmem [#allocation4], %s896
    %v898 = vld [vmem:[%s897] ss:$8 sm:$0x3]
    %s899 = scalar_lea.vmem [#allocation7], 246
    %900 = vst [vmem:[%s899] ss:$8 sm:$0xf] %v893
    %901 = vst [vmem:[%s899] ss:$8 sm:$0xf0] %v893
    %s902 = scalar_lea.vmem [#allocation7], 310
    %903 = vst.msk [vmem:[%s902] ss:$8 sm:$0x3] %vm61, %v898
    %904 = vst.msk [vmem:[%s902] ss:$8 sm:$0x0] %vm61, %v898
    %s905 = sadd.s32 %s34, 31
    %s906 = sld [smem:[#allocation3 + %s905]]
    %p907 = scmp.gt.s32.totalorder %s906, 0
    %s908 = scalar_select %p907, %s906, 0
    %p909 = scmp.lt.s32.totalorder %s908, 2047
    %s910 = scalar_select %p909, %s908, 2047
    %s911 = sshra.s32 %s910, 3
    %s912 = sand.u32 %s910, 7
    %s913 = sshra.s32 %s910, 3
    %s914 = sand.u32 %s910, 7
    %s915 = smul.u32 %s911, 10
    %s916 = smul.u32 %s915, 8
    %s917 = sadd.s32 %s916, %s914
    %s918 = scalar_lea.vmem [#allocation4], %s917
    %v919 = vld [vmem:[%s918] ss:$8 sm:$0xf]
    %v920 = vld [vmem:[%s918] ss:$8 sm:$0xf0]
    %v921 = vor.u32 %v919, %v920
    %s922 = sadd.s32 %s915, 8
    %s923 = smul.u32 %s922, 8
    %s924 = sadd.s32 %s923, %s914
    %s925 = scalar_lea.vmem [#allocation4], %s924
    %v926 = vld [vmem:[%s925] ss:$8 sm:$0x3]
    %s927 = scalar_lea.vmem [#allocation7], 247
    %928 = vst [vmem:[%s927] ss:$8 sm:$0xf] %v921
    %929 = vst [vmem:[%s927] ss:$8 sm:$0xf0] %v921
    %s930 = scalar_lea.vmem [#allocation7], 311
    %931 = vst.msk [vmem:[%s930] ss:$8 sm:$0x3] %vm61, %v926
    %932 = vst.msk [vmem:[%s930] ss:$8 sm:$0x0] %vm61, %v926
    %s933 = sadd.s32 %s34, 32
    %s934 = sld [smem:[#allocation3 + %s933]]
    %p935 = scmp.gt.s32.totalorder %s934, 0
    %s936 = scalar_select %p935, %s934, 0
    %p937 = scmp.lt.s32.totalorder %s936, 2047
    %s938 = scalar_select %p937, %s936, 2047
    %s939 = sshra.s32 %s938, 3
    %s940 = sand.u32 %s938, 7
    %s941 = sshra.s32 %s938, 3
    %s942 = sand.u32 %s938, 7
    %s943 = smul.u32 %s939, 10
    %s944 = smul.u32 %s943, 8
    %s945 = sadd.s32 %s944, %s942
    %s946 = scalar_lea.vmem [#allocation4], %s945
    %v947 = vld [vmem:[%s946] ss:$8 sm:$0xf]
    %v948 = vld [vmem:[%s946] ss:$8 sm:$0xf0]
    %v949 = vor.u32 %v947, %v948
    %s950 = sadd.s32 %s943, 8
    %s951 = smul.u32 %s950, 8
    %s952 = sadd.s32 %s951, %s942
    %s953 = scalar_lea.vmem [#allocation4], %s952
    %v954 = vld [vmem:[%s953] ss:$8 sm:$0x3]
    %s955 = scalar_lea.vmem [#allocation7], 320
    %956 = vst [vmem:[%s955] ss:$8 sm:$0xf] %v949
    %957 = vst [vmem:[%s955] ss:$8 sm:$0xf0] %v949
    %s958 = scalar_lea.vmem [#allocation7], 384
    %959 = vst.msk [vmem:[%s958] ss:$8 sm:$0x3] %vm61, %v954
    %960 = vst.msk [vmem:[%s958] ss:$8 sm:$0x0] %vm61, %v954
    %s961 = sadd.s32 %s34, 33
    %s962 = sld [smem:[#allocation3 + %s961]]
    %p963 = scmp.gt.s32.totalorder %s962, 0
    %s964 = scalar_select %p963, %s962, 0
    %p965 = scmp.lt.s32.totalorder %s964, 2047
    %s966 = scalar_select %p965, %s964, 2047
    %s967 = sshra.s32 %s966, 3
    %s968 = sand.u32 %s966, 7
    %s969 = sshra.s32 %s966, 3
    %s970 = sand.u32 %s966, 7
    %s971 = smul.u32 %s967, 10
    %s972 = smul.u32 %s971, 8
    %s973 = sadd.s32 %s972, %s970
    %s974 = scalar_lea.vmem [#allocation4], %s973
    %v975 = vld [vmem:[%s974] ss:$8 sm:$0xf]
    %v976 = vld [vmem:[%s974] ss:$8 sm:$0xf0]
    %v977 = vor.u32 %v975, %v976
    %s978 = sadd.s32 %s971, 8
    %s979 = smul.u32 %s978, 8
    %s980 = sadd.s32 %s979, %s970
    %s981 = scalar_lea.vmem [#allocation4], %s980
    %v982 = vld [vmem:[%s981] ss:$8 sm:$0x3]
    %s983 = scalar_lea.vmem [#allocation7], 321
    %984 = vst [vmem:[%s983] ss:$8 sm:$0xf] %v977
    %985 = vst [vmem:[%s983] ss:$8 sm:$0xf0] %v977
    %s986 = scalar_lea.vmem [#allocation7], 385
    %987 = vst.msk [vmem:[%s986] ss:$8 sm:$0x3] %vm61, %v982
    %988 = vst.msk [vmem:[%s986] ss:$8 sm:$0x0] %vm61, %v982
    %s989 = sadd.s32 %s34, 34
    %s990 = sld [smem:[#allocation3 + %s989]]
    %p991 = scmp.gt.s32.totalorder %s990, 0
    %s992 = scalar_select %p991, %s990, 0
    %p993 = scmp.lt.s32.totalorder %s992, 2047
    %s994 = scalar_select %p993, %s992, 2047
    %s995 = sshra.s32 %s994, 3
    %s996 = sand.u32 %s994, 7
    %s997 = sshra.s32 %s994, 3
    %s998 = sand.u32 %s994, 7
    %s999 = smul.u32 %s995, 10
    %s1000 = smul.u32 %s999, 8
    %s1001 = sadd.s32 %s1000, %s998
    %s1002 = scalar_lea.vmem [#allocation4], %s1001
    %v1003 = vld [vmem:[%s1002] ss:$8 sm:$0xf]
    %v1004 = vld [vmem:[%s1002] ss:$8 sm:$0xf0]
    %v1005 = vor.u32 %v1003, %v1004
    %s1006 = sadd.s32 %s999, 8
    %s1007 = smul.u32 %s1006, 8
    %s1008 = sadd.s32 %s1007, %s998
    %s1009 = scalar_lea.vmem [#allocation4], %s1008
    %v1010 = vld [vmem:[%s1009] ss:$8 sm:$0x3]
    %s1011 = scalar_lea.vmem [#allocation7], 322
    %1012 = vst [vmem:[%s1011] ss:$8 sm:$0xf] %v1005
    %1013 = vst [vmem:[%s1011] ss:$8 sm:$0xf0] %v1005
    %s1014 = scalar_lea.vmem [#allocation7], 386
    %1015 = vst.msk [vmem:[%s1014] ss:$8 sm:$0x3] %vm61, %v1010
    %1016 = vst.msk [vmem:[%s1014] ss:$8 sm:$0x0] %vm61, %v1010
    %s1017 = sadd.s32 %s34, 35
    %s1018 = sld [smem:[#allocation3 + %s1017]]
    %p1019 = scmp.gt.s32.totalorder %s1018, 0
    %s1020 = scalar_select %p1019, %s1018, 0
    %p1021 = scmp.lt.s32.totalorder %s1020, 2047
    %s1022 = scalar_select %p1021, %s1020, 2047
    %s1023 = sshra.s32 %s1022, 3
    %s1024 = sand.u32 %s1022, 7
    %s1025 = sshra.s32 %s1022, 3
    %s1026 = sand.u32 %s1022, 7
    %s1027 = smul.u32 %s1023, 10
    %s1028 = smul.u32 %s1027, 8
    %s1029 = sadd.s32 %s1028, %s1026
    %s1030 = scalar_lea.vmem [#allocation4], %s1029
    %v1031 = vld [vmem:[%s1030] ss:$8 sm:$0xf]
    %v1032 = vld [vmem:[%s1030] ss:$8 sm:$0xf0]
    %v1033 = vor.u32 %v1031, %v1032
    %s1034 = sadd.s32 %s1027, 8
    %s1035 = smul.u32 %s1034, 8
    %s1036 = sadd.s32 %s1035, %s1026
    %s1037 = scalar_lea.vmem [#allocation4], %s1036
    %v1038 = vld [vmem:[%s1037] ss:$8 sm:$0x3]
    %s1039 = scalar_lea.vmem [#allocation7], 323
    %1040 = vst [vmem:[%s1039] ss:$8 sm:$0xf] %v1033
    %1041 = vst [vmem:[%s1039] ss:$8 sm:$0xf0] %v1033
    %s1042 = scalar_lea.vmem [#allocation7], 387
    %1043 = vst.msk [vmem:[%s1042] ss:$8 sm:$0x3] %vm61, %v1038
    %1044 = vst.msk [vmem:[%s1042] ss:$8 sm:$0x0] %vm61, %v1038
    %s1045 = sadd.s32 %s34, 36
    %s1046 = sld [smem:[#allocation3 + %s1045]]
    %p1047 = scmp.gt.s32.totalorder %s1046, 0
    %s1048 = scalar_select %p1047, %s1046, 0
    %p1049 = scmp.lt.s32.totalorder %s1048, 2047
    %s1050 = scalar_select %p1049, %s1048, 2047
    %s1051 = sshra.s32 %s1050, 3
    %s1052 = sand.u32 %s1050, 7
    %s1053 = sshra.s32 %s1050, 3
    %s1054 = sand.u32 %s1050, 7
    %s1055 = smul.u32 %s1051, 10
    %s1056 = smul.u32 %s1055, 8
    %s1057 = sadd.s32 %s1056, %s1054
    %s1058 = scalar_lea.vmem [#allocation4], %s1057
    %v1059 = vld [vmem:[%s1058] ss:$8 sm:$0xf]
    %v1060 = vld [vmem:[%s1058] ss:$8 sm:$0xf0]
    %v1061 = vor.u32 %v1059, %v1060
    %s1062 = sadd.s32 %s1055, 8
    %s1063 = smul.u32 %s1062, 8
    %s1064 = sadd.s32 %s1063, %s1054
    %s1065 = scalar_lea.vmem [#allocation4], %s1064
    %v1066 = vld [vmem:[%s1065] ss:$8 sm:$0x3]
    %s1067 = scalar_lea.vmem [#allocation7], 324
    %1068 = vst [vmem:[%s1067] ss:$8 sm:$0xf] %v1061
    %1069 = vst [vmem:[%s1067] ss:$8 sm:$0xf0] %v1061
    %s1070 = scalar_lea.vmem [#allocation7], 388
    %1071 = vst.msk [vmem:[%s1070] ss:$8 sm:$0x3] %vm61, %v1066
    %1072 = vst.msk [vmem:[%s1070] ss:$8 sm:$0x0] %vm61, %v1066
    %s1073 = sadd.s32 %s34, 37
    %s1074 = sld [smem:[#allocation3 + %s1073]]
    %p1075 = scmp.gt.s32.totalorder %s1074, 0
    %s1076 = scalar_select %p1075, %s1074, 0
    %p1077 = scmp.lt.s32.totalorder %s1076, 2047
    %s1078 = scalar_select %p1077, %s1076, 2047
    %s1079 = sshra.s32 %s1078, 3
    %s1080 = sand.u32 %s1078, 7
    %s1081 = sshra.s32 %s1078, 3
    %s1082 = sand.u32 %s1078, 7
    %s1083 = smul.u32 %s1079, 10
    %s1084 = smul.u32 %s1083, 8
    %s1085 = sadd.s32 %s1084, %s1082
    %s1086 = scalar_lea.vmem [#allocation4], %s1085
    %v1087 = vld [vmem:[%s1086] ss:$8 sm:$0xf]
    %v1088 = vld [vmem:[%s1086] ss:$8 sm:$0xf0]
    %v1089 = vor.u32 %v1087, %v1088
    %s1090 = sadd.s32 %s1083, 8
    %s1091 = smul.u32 %s1090, 8
    %s1092 = sadd.s32 %s1091, %s1082
    %s1093 = scalar_lea.vmem [#allocation4], %s1092
    %v1094 = vld [vmem:[%s1093] ss:$8 sm:$0x3]
    %s1095 = scalar_lea.vmem [#allocation7], 325
    %1096 = vst [vmem:[%s1095] ss:$8 sm:$0xf] %v1089
    %1097 = vst [vmem:[%s1095] ss:$8 sm:$0xf0] %v1089
    %s1098 = scalar_lea.vmem [#allocation7], 389
    %1099 = vst.msk [vmem:[%s1098] ss:$8 sm:$0x3] %vm61, %v1094
    %1100 = vst.msk [vmem:[%s1098] ss:$8 sm:$0x0] %vm61, %v1094
    %s1101 = sadd.s32 %s34, 38
    %s1102 = sld [smem:[#allocation3 + %s1101]]
    %p1103 = scmp.gt.s32.totalorder %s1102, 0
    %s1104 = scalar_select %p1103, %s1102, 0
    %p1105 = scmp.lt.s32.totalorder %s1104, 2047
    %s1106 = scalar_select %p1105, %s1104, 2047
    %s1107 = sshra.s32 %s1106, 3
    %s1108 = sand.u32 %s1106, 7
    %s1109 = sshra.s32 %s1106, 3
    %s1110 = sand.u32 %s1106, 7
    %s1111 = smul.u32 %s1107, 10
    %s1112 = smul.u32 %s1111, 8
    %s1113 = sadd.s32 %s1112, %s1110
    %s1114 = scalar_lea.vmem [#allocation4], %s1113
    %v1115 = vld [vmem:[%s1114] ss:$8 sm:$0xf]
    %v1116 = vld [vmem:[%s1114] ss:$8 sm:$0xf0]
    %v1117 = vor.u32 %v1115, %v1116
    %s1118 = sadd.s32 %s1111, 8
    %s1119 = smul.u32 %s1118, 8
    %s1120 = sadd.s32 %s1119, %s1110
    %s1121 = scalar_lea.vmem [#allocation4], %s1120
    %v1122 = vld [vmem:[%s1121] ss:$8 sm:$0x3]
    %s1123 = scalar_lea.vmem [#allocation7], 326
    %1124 = vst [vmem:[%s1123] ss:$8 sm:$0xf] %v1117
    %1125 = vst [vmem:[%s1123] ss:$8 sm:$0xf0] %v1117
    %s1126 = scalar_lea.vmem [#allocation7], 390
    %1127 = vst.msk [vmem:[%s1126] ss:$8 sm:$0x3] %vm61, %v1122
    %1128 = vst.msk [vmem:[%s1126] ss:$8 sm:$0x0] %vm61, %v1122
    %s1129 = sadd.s32 %s34, 39
    %s1130 = sld [smem:[#allocation3 + %s1129]]
    %p1131 = scmp.gt.s32.totalorder %s1130, 0
    %s1132 = scalar_select %p1131, %s1130, 0
    %p1133 = scmp.lt.s32.totalorder %s1132, 2047
    %s1134 = scalar_select %p1133, %s1132, 2047
    %s1135 = sshra.s32 %s1134, 3
    %s1136 = sand.u32 %s1134, 7
    %s1137 = sshra.s32 %s1134, 3
    %s1138 = sand.u32 %s1134, 7
    %s1139 = smul.u32 %s1135, 10
    %s1140 = smul.u32 %s1139, 8
    %s1141 = sadd.s32 %s1140, %s1138
    %s1142 = scalar_lea.vmem [#allocation4], %s1141
    %v1143 = vld [vmem:[%s1142] ss:$8 sm:$0xf]
    %v1144 = vld [vmem:[%s1142] ss:$8 sm:$0xf0]
    %v1145 = vor.u32 %v1143, %v1144
    %s1146 = sadd.s32 %s1139, 8
    %s1147 = smul.u32 %s1146, 8
    %s1148 = sadd.s32 %s1147, %s1138
    %s1149 = scalar_lea.vmem [#allocation4], %s1148
    %v1150 = vld [vmem:[%s1149] ss:$8 sm:$0x3]
    %s1151 = scalar_lea.vmem [#allocation7], 327
    %1152 = vst [vmem:[%s1151] ss:$8 sm:$0xf] %v1145
    %1153 = vst [vmem:[%s1151] ss:$8 sm:$0xf0] %v1145
    %s1154 = scalar_lea.vmem [#allocation7], 391
    %1155 = vst.msk [vmem:[%s1154] ss:$8 sm:$0x3] %vm61, %v1150
    %1156 = vst.msk [vmem:[%s1154] ss:$8 sm:$0x0] %vm61, %v1150
    %s1157 = sadd.s32 %s34, 40
    %s1158 = sld [smem:[#allocation3 + %s1157]]
    %p1159 = scmp.gt.s32.totalorder %s1158, 0
    %s1160 = scalar_select %p1159, %s1158, 0
    %p1161 = scmp.lt.s32.totalorder %s1160, 2047
    %s1162 = scalar_select %p1161, %s1160, 2047
    %s1163 = sshra.s32 %s1162, 3
    %s1164 = sand.u32 %s1162, 7
    %s1165 = sshra.s32 %s1162, 3
    %s1166 = sand.u32 %s1162, 7
    %s1167 = smul.u32 %s1163, 10
    %s1168 = smul.u32 %s1167, 8
    %s1169 = sadd.s32 %s1168, %s1166
    %s1170 = scalar_lea.vmem [#allocation4], %s1169
    %v1171 = vld [vmem:[%s1170] ss:$8 sm:$0xf]
    %v1172 = vld [vmem:[%s1170] ss:$8 sm:$0xf0]
    %v1173 = vor.u32 %v1171, %v1172
    %s1174 = sadd.s32 %s1167, 8
    %s1175 = smul.u32 %s1174, 8
    %s1176 = sadd.s32 %s1175, %s1166
    %s1177 = scalar_lea.vmem [#allocation4], %s1176
    %v1178 = vld [vmem:[%s1177] ss:$8 sm:$0x3]
    %s1179 = scalar_lea.vmem [#allocation7], 400
    %1180 = vst [vmem:[%s1179] ss:$8 sm:$0xf] %v1173
    %1181 = vst [vmem:[%s1179] ss:$8 sm:$0xf0] %v1173
    %s1182 = scalar_lea.vmem [#allocation7], 464
    %1183 = vst.msk [vmem:[%s1182] ss:$8 sm:$0x3] %vm61, %v1178
    %1184 = vst.msk [vmem:[%s1182] ss:$8 sm:$0x0] %vm61, %v1178
    %s1185 = sadd.s32 %s34, 41
    %s1186 = sld [smem:[#allocation3 + %s1185]]
    %p1187 = scmp.gt.s32.totalorder %s1186, 0
    %s1188 = scalar_select %p1187, %s1186, 0
    %p1189 = scmp.lt.s32.totalorder %s1188, 2047
    %s1190 = scalar_select %p1189, %s1188, 2047
    %s1191 = sshra.s32 %s1190, 3
    %s1192 = sand.u32 %s1190, 7
    %s1193 = sshra.s32 %s1190, 3
    %s1194 = sand.u32 %s1190, 7
    %s1195 = smul.u32 %s1191, 10
    %s1196 = smul.u32 %s1195, 8
    %s1197 = sadd.s32 %s1196, %s1194
    %s1198 = scalar_lea.vmem [#allocation4], %s1197
    %v1199 = vld [vmem:[%s1198] ss:$8 sm:$0xf]
    %v1200 = vld [vmem:[%s1198] ss:$8 sm:$0xf0]
    %v1201 = vor.u32 %v1199, %v1200
    %s1202 = sadd.s32 %s1195, 8
    %s1203 = smul.u32 %s1202, 8
    %s1204 = sadd.s32 %s1203, %s1194
    %s1205 = scalar_lea.vmem [#allocation4], %s1204
    %v1206 = vld [vmem:[%s1205] ss:$8 sm:$0x3]
    %s1207 = scalar_lea.vmem [#allocation7], 401
    %1208 = vst [vmem:[%s1207] ss:$8 sm:$0xf] %v1201
    %1209 = vst [vmem:[%s1207] ss:$8 sm:$0xf0] %v1201
    %s1210 = scalar_lea.vmem [#allocation7], 465
    %1211 = vst.msk [vmem:[%s1210] ss:$8 sm:$0x3] %vm61, %v1206
    %1212 = vst.msk [vmem:[%s1210] ss:$8 sm:$0x0] %vm61, %v1206
    %s1213 = sadd.s32 %s34, 42
    %s1214 = sld [smem:[#allocation3 + %s1213]]
    %p1215 = scmp.gt.s32.totalorder %s1214, 0
    %s1216 = scalar_select %p1215, %s1214, 0
    %p1217 = scmp.lt.s32.totalorder %s1216, 2047
    %s1218 = scalar_select %p1217, %s1216, 2047
    %s1219 = sshra.s32 %s1218, 3
    %s1220 = sand.u32 %s1218, 7
    %s1221 = sshra.s32 %s1218, 3
    %s1222 = sand.u32 %s1218, 7
    %s1223 = smul.u32 %s1219, 10
    %s1224 = smul.u32 %s1223, 8
    %s1225 = sadd.s32 %s1224, %s1222
    %s1226 = scalar_lea.vmem [#allocation4], %s1225
    %v1227 = vld [vmem:[%s1226] ss:$8 sm:$0xf]
    %v1228 = vld [vmem:[%s1226] ss:$8 sm:$0xf0]
    %v1229 = vor.u32 %v1227, %v1228
    %s1230 = sadd.s32 %s1223, 8
    %s1231 = smul.u32 %s1230, 8
    %s1232 = sadd.s32 %s1231, %s1222
    %s1233 = scalar_lea.vmem [#allocation4], %s1232
    %v1234 = vld [vmem:[%s1233] ss:$8 sm:$0x3]
    %s1235 = scalar_lea.vmem [#allocation7], 402
    %1236 = vst [vmem:[%s1235] ss:$8 sm:$0xf] %v1229
    %1237 = vst [vmem:[%s1235] ss:$8 sm:$0xf0] %v1229
    %s1238 = scalar_lea.vmem [#allocation7], 466
    %1239 = vst.msk [vmem:[%s1238] ss:$8 sm:$0x3] %vm61, %v1234
    %1240 = vst.msk [vmem:[%s1238] ss:$8 sm:$0x0] %vm61, %v1234
    %s1241 = sadd.s32 %s34, 43
    %s1242 = sld [smem:[#allocation3 + %s1241]]
    %p1243 = scmp.gt.s32.totalorder %s1242, 0
    %s1244 = scalar_select %p1243, %s1242, 0
    %p1245 = scmp.lt.s32.totalorder %s1244, 2047
    %s1246 = scalar_select %p1245, %s1244, 2047
    %s1247 = sshra.s32 %s1246, 3
    %s1248 = sand.u32 %s1246, 7
    %s1249 = sshra.s32 %s1246, 3
    %s1250 = sand.u32 %s1246, 7
    %s1251 = smul.u32 %s1247, 10
    %s1252 = smul.u32 %s1251, 8
    %s1253 = sadd.s32 %s1252, %s1250
    %s1254 = scalar_lea.vmem [#allocation4], %s1253
    %v1255 = vld [vmem:[%s1254] ss:$8 sm:$0xf]
    %v1256 = vld [vmem:[%s1254] ss:$8 sm:$0xf0]
    %v1257 = vor.u32 %v1255, %v1256
    %s1258 = sadd.s32 %s1251, 8
    %s1259 = smul.u32 %s1258, 8
    %s1260 = sadd.s32 %s1259, %s1250
    %s1261 = scalar_lea.vmem [#allocation4], %s1260
    %v1262 = vld [vmem:[%s1261] ss:$8 sm:$0x3]
    %s1263 = scalar_lea.vmem [#allocation7], 403
    %1264 = vst [vmem:[%s1263] ss:$8 sm:$0xf] %v1257
    %1265 = vst [vmem:[%s1263] ss:$8 sm:$0xf0] %v1257
    %s1266 = scalar_lea.vmem [#allocation7], 467
    %1267 = vst.msk [vmem:[%s1266] ss:$8 sm:$0x3] %vm61, %v1262
    %1268 = vst.msk [vmem:[%s1266] ss:$8 sm:$0x0] %vm61, %v1262
    %s1269 = sadd.s32 %s34, 44
    %s1270 = sld [smem:[#allocation3 + %s1269]]
    %p1271 = scmp.gt.s32.totalorder %s1270, 0
    %s1272 = scalar_select %p1271, %s1270, 0
    %p1273 = scmp.lt.s32.totalorder %s1272, 2047
    %s1274 = scalar_select %p1273, %s1272, 2047
    %s1275 = sshra.s32 %s1274, 3
    %s1276 = sand.u32 %s1274, 7
    %s1277 = sshra.s32 %s1274, 3
    %s1278 = sand.u32 %s1274, 7
    %s1279 = smul.u32 %s1275, 10
    %s1280 = smul.u32 %s1279, 8
    %s1281 = sadd.s32 %s1280, %s1278
    %s1282 = scalar_lea.vmem [#allocation4], %s1281
    %v1283 = vld [vmem:[%s1282] ss:$8 sm:$0xf]
    %v1284 = vld [vmem:[%s1282] ss:$8 sm:$0xf0]
    %v1285 = vor.u32 %v1283, %v1284
    %s1286 = sadd.s32 %s1279, 8
    %s1287 = smul.u32 %s1286, 8
    %s1288 = sadd.s32 %s1287, %s1278
    %s1289 = scalar_lea.vmem [#allocation4], %s1288
    %v1290 = vld [vmem:[%s1289] ss:$8 sm:$0x3]
    %s1291 = scalar_lea.vmem [#allocation7], 404
    %1292 = vst [vmem:[%s1291] ss:$8 sm:$0xf] %v1285
    %1293 = vst [vmem:[%s1291] ss:$8 sm:$0xf0] %v1285
    %s1294 = scalar_lea.vmem [#allocation7], 468
    %1295 = vst.msk [vmem:[%s1294] ss:$8 sm:$0x3] %vm61, %v1290
    %1296 = vst.msk [vmem:[%s1294] ss:$8 sm:$0x0] %vm61, %v1290
    %s1297 = sadd.s32 %s34, 45
    %s1298 = sld [smem:[#allocation3 + %s1297]]
    %p1299 = scmp.gt.s32.totalorder %s1298, 0
    %s1300 = scalar_select %p1299, %s1298, 0
    %p1301 = scmp.lt.s32.totalorder %s1300, 2047
    %s1302 = scalar_select %p1301, %s1300, 2047
    %s1303 = sshra.s32 %s1302, 3
    %s1304 = sand.u32 %s1302, 7
    %s1305 = sshra.s32 %s1302, 3
    %s1306 = sand.u32 %s1302, 7
    %s1307 = smul.u32 %s1303, 10
    %s1308 = smul.u32 %s1307, 8
    %s1309 = sadd.s32 %s1308, %s1306
    %s1310 = scalar_lea.vmem [#allocation4], %s1309
    %v1311 = vld [vmem:[%s1310] ss:$8 sm:$0xf]
    %v1312 = vld [vmem:[%s1310] ss:$8 sm:$0xf0]
    %v1313 = vor.u32 %v1311, %v1312
    %s1314 = sadd.s32 %s1307, 8
    %s1315 = smul.u32 %s1314, 8
    %s1316 = sadd.s32 %s1315, %s1306
    %s1317 = scalar_lea.vmem [#allocation4], %s1316
    %v1318 = vld [vmem:[%s1317] ss:$8 sm:$0x3]
    %s1319 = scalar_lea.vmem [#allocation7], 405
    %1320 = vst [vmem:[%s1319] ss:$8 sm:$0xf] %v1313
    %1321 = vst [vmem:[%s1319] ss:$8 sm:$0xf0] %v1313
    %s1322 = scalar_lea.vmem [#allocation7], 469
    %1323 = vst.msk [vmem:[%s1322] ss:$8 sm:$0x3] %vm61, %v1318
    %1324 = vst.msk [vmem:[%s1322] ss:$8 sm:$0x0] %vm61, %v1318
    %s1325 = sadd.s32 %s34, 46
    %s1326 = sld [smem:[#allocation3 + %s1325]]
    %p1327 = scmp.gt.s32.totalorder %s1326, 0
    %s1328 = scalar_select %p1327, %s1326, 0
    %p1329 = scmp.lt.s32.totalorder %s1328, 2047
    %s1330 = scalar_select %p1329, %s1328, 2047
    %s1331 = sshra.s32 %s1330, 3
    %s1332 = sand.u32 %s1330, 7
    %s1333 = sshra.s32 %s1330, 3
    %s1334 = sand.u32 %s1330, 7
    %s1335 = smul.u32 %s1331, 10
    %s1336 = smul.u32 %s1335, 8
    %s1337 = sadd.s32 %s1336, %s1334
    %s1338 = scalar_lea.vmem [#allocation4], %s1337
    %v1339 = vld [vmem:[%s1338] ss:$8 sm:$0xf]
    %v1340 = vld [vmem:[%s1338] ss:$8 sm:$0xf0]
    %v1341 = vor.u32 %v1339, %v1340
    %s1342 = sadd.s32 %s1335, 8
    %s1343 = smul.u32 %s1342, 8
    %s1344 = sadd.s32 %s1343, %s1334
    %s1345 = scalar_lea.vmem [#allocation4], %s1344
    %v1346 = vld [vmem:[%s1345] ss:$8 sm:$0x3]
    %s1347 = scalar_lea.vmem [#allocation7], 406
    %1348 = vst [vmem:[%s1347] ss:$8 sm:$0xf] %v1341
    %1349 = vst [vmem:[%s1347] ss:$8 sm:$0xf0] %v1341
    %s1350 = scalar_lea.vmem [#allocation7], 470
    %1351 = vst.msk [vmem:[%s1350] ss:$8 sm:$0x3] %vm61, %v1346
    %1352 = vst.msk [vmem:[%s1350] ss:$8 sm:$0x0] %vm61, %v1346
    %s1353 = sadd.s32 %s34, 47
    %s1354 = sld [smem:[#allocation3 + %s1353]]
    %p1355 = scmp.gt.s32.totalorder %s1354, 0
    %s1356 = scalar_select %p1355, %s1354, 0
    %p1357 = scmp.lt.s32.totalorder %s1356, 2047
    %s1358 = scalar_select %p1357, %s1356, 2047
    %s1359 = sshra.s32 %s1358, 3
    %s1360 = sand.u32 %s1358, 7
    %s1361 = sshra.s32 %s1358, 3
    %s1362 = sand.u32 %s1358, 7
    %s1363 = smul.u32 %s1359, 10
    %s1364 = smul.u32 %s1363, 8
    %s1365 = sadd.s32 %s1364, %s1362
    %s1366 = scalar_lea.vmem [#allocation4], %s1365
    %v1367 = vld [vmem:[%s1366] ss:$8 sm:$0xf]
    %v1368 = vld [vmem:[%s1366] ss:$8 sm:$0xf0]
    %v1369 = vor.u32 %v1367, %v1368
    %s1370 = sadd.s32 %s1363, 8
    %s1371 = smul.u32 %s1370, 8
    %s1372 = sadd.s32 %s1371, %s1362
    %s1373 = scalar_lea.vmem [#allocation4], %s1372
    %v1374 = vld [vmem:[%s1373] ss:$8 sm:$0x3]
    %s1375 = scalar_lea.vmem [#allocation7], 407
    %1376 = vst [vmem:[%s1375] ss:$8 sm:$0xf] %v1369
    %1377 = vst [vmem:[%s1375] ss:$8 sm:$0xf0] %v1369
    %s1378 = scalar_lea.vmem [#allocation7], 471
    %1379 = vst.msk [vmem:[%s1378] ss:$8 sm:$0x3] %vm61, %v1374
    %1380 = vst.msk [vmem:[%s1378] ss:$8 sm:$0x0] %vm61, %v1374
    %s1381 = sadd.s32 %s34, 48
    %s1382 = sld [smem:[#allocation3 + %s1381]]
    %p1383 = scmp.gt.s32.totalorder %s1382, 0
    %s1384 = scalar_select %p1383, %s1382, 0
    %p1385 = scmp.lt.s32.totalorder %s1384, 2047
    %s1386 = scalar_select %p1385, %s1384, 2047
    %s1387 = sshra.s32 %s1386, 3
    %s1388 = sand.u32 %s1386, 7
    %s1389 = sshra.s32 %s1386, 3
    %s1390 = sand.u32 %s1386, 7
    %s1391 = smul.u32 %s1387, 10
    %s1392 = smul.u32 %s1391, 8
    %s1393 = sadd.s32 %s1392, %s1390
    %s1394 = scalar_lea.vmem [#allocation4], %s1393
    %v1395 = vld [vmem:[%s1394] ss:$8 sm:$0xf]
    %v1396 = vld [vmem:[%s1394] ss:$8 sm:$0xf0]
    %v1397 = vor.u32 %v1395, %v1396
    %s1398 = sadd.s32 %s1391, 8
    %s1399 = smul.u32 %s1398, 8
    %s1400 = sadd.s32 %s1399, %s1390
    %s1401 = scalar_lea.vmem [#allocation4], %s1400
    %v1402 = vld [vmem:[%s1401] ss:$8 sm:$0x3]
    %s1403 = scalar_lea.vmem [#allocation7], 480
    %1404 = vst [vmem:[%s1403] ss:$8 sm:$0xf] %v1397
    %1405 = vst [vmem:[%s1403] ss:$8 sm:$0xf0] %v1397
    %s1406 = scalar_lea.vmem [#allocation7], 544
    %1407 = vst.msk [vmem:[%s1406] ss:$8 sm:$0x3] %vm61, %v1402
    %1408 = vst.msk [vmem:[%s1406] ss:$8 sm:$0x0] %vm61, %v1402
    %s1409 = sadd.s32 %s34, 49
    %s1410 = sld [smem:[#allocation3 + %s1409]]
    %p1411 = scmp.gt.s32.totalorder %s1410, 0
    %s1412 = scalar_select %p1411, %s1410, 0
    %p1413 = scmp.lt.s32.totalorder %s1412, 2047
    %s1414 = scalar_select %p1413, %s1412, 2047
    %s1415 = sshra.s32 %s1414, 3
    %s1416 = sand.u32 %s1414, 7
    %s1417 = sshra.s32 %s1414, 3
    %s1418 = sand.u32 %s1414, 7
    %s1419 = smul.u32 %s1415, 10
    %s1420 = smul.u32 %s1419, 8
    %s1421 = sadd.s32 %s1420, %s1418
    %s1422 = scalar_lea.vmem [#allocation4], %s1421
    %v1423 = vld [vmem:[%s1422] ss:$8 sm:$0xf]
    %v1424 = vld [vmem:[%s1422] ss:$8 sm:$0xf0]
    %v1425 = vor.u32 %v1423, %v1424
    %s1426 = sadd.s32 %s1419, 8
    %s1427 = smul.u32 %s1426, 8
    %s1428 = sadd.s32 %s1427, %s1418
    %s1429 = scalar_lea.vmem [#allocation4], %s1428
    %v1430 = vld [vmem:[%s1429] ss:$8 sm:$0x3]
    %s1431 = scalar_lea.vmem [#allocation7], 481
    %1432 = vst [vmem:[%s1431] ss:$8 sm:$0xf] %v1425
    %1433 = vst [vmem:[%s1431] ss:$8 sm:$0xf0] %v1425
    %s1434 = scalar_lea.vmem [#allocation7], 545
    %1435 = vst.msk [vmem:[%s1434] ss:$8 sm:$0x3] %vm61, %v1430
    %1436 = vst.msk [vmem:[%s1434] ss:$8 sm:$0x0] %vm61, %v1430
    %s1437 = sadd.s32 %s34, 50
    %s1438 = sld [smem:[#allocation3 + %s1437]]
    %p1439 = scmp.gt.s32.totalorder %s1438, 0
    %s1440 = scalar_select %p1439, %s1438, 0
    %p1441 = scmp.lt.s32.totalorder %s1440, 2047
    %s1442 = scalar_select %p1441, %s1440, 2047
    %s1443 = sshra.s32 %s1442, 3
    %s1444 = sand.u32 %s1442, 7
    %s1445 = sshra.s32 %s1442, 3
    %s1446 = sand.u32 %s1442, 7
    %s1447 = smul.u32 %s1443, 10
    %s1448 = smul.u32 %s1447, 8
    %s1449 = sadd.s32 %s1448, %s1446
    %s1450 = scalar_lea.vmem [#allocation4], %s1449
    %v1451 = vld [vmem:[%s1450] ss:$8 sm:$0xf]
    %v1452 = vld [vmem:[%s1450] ss:$8 sm:$0xf0]
    %v1453 = vor.u32 %v1451, %v1452
    %s1454 = sadd.s32 %s1447, 8
    %s1455 = smul.u32 %s1454, 8
    %s1456 = sadd.s32 %s1455, %s1446
    %s1457 = scalar_lea.vmem [#allocation4], %s1456
    %v1458 = vld [vmem:[%s1457] ss:$8 sm:$0x3]
    %s1459 = scalar_lea.vmem [#allocation7], 482
    %1460 = vst [vmem:[%s1459] ss:$8 sm:$0xf] %v1453
    %1461 = vst [vmem:[%s1459] ss:$8 sm:$0xf0] %v1453
    %s1462 = scalar_lea.vmem [#allocation7], 546
    %1463 = vst.msk [vmem:[%s1462] ss:$8 sm:$0x3] %vm61, %v1458
    %1464 = vst.msk [vmem:[%s1462] ss:$8 sm:$0x0] %vm61, %v1458
    %s1465 = sadd.s32 %s34, 51
    %s1466 = sld [smem:[#allocation3 + %s1465]]
    %p1467 = scmp.gt.s32.totalorder %s1466, 0
    %s1468 = scalar_select %p1467, %s1466, 0
    %p1469 = scmp.lt.s32.totalorder %s1468, 2047
    %s1470 = scalar_select %p1469, %s1468, 2047
    %s1471 = sshra.s32 %s1470, 3
    %s1472 = sand.u32 %s1470, 7
    %s1473 = sshra.s32 %s1470, 3
    %s1474 = sand.u32 %s1470, 7
    %s1475 = smul.u32 %s1471, 10
    %s1476 = smul.u32 %s1475, 8
    %s1477 = sadd.s32 %s1476, %s1474
    %s1478 = scalar_lea.vmem [#allocation4], %s1477
    %v1479 = vld [vmem:[%s1478] ss:$8 sm:$0xf]
    %v1480 = vld [vmem:[%s1478] ss:$8 sm:$0xf0]
    %v1481 = vor.u32 %v1479, %v1480
    %s1482 = sadd.s32 %s1475, 8
    %s1483 = smul.u32 %s1482, 8
    %s1484 = sadd.s32 %s1483, %s1474
    %s1485 = scalar_lea.vmem [#allocation4], %s1484
    %v1486 = vld [vmem:[%s1485] ss:$8 sm:$0x3]
    %s1487 = scalar_lea.vmem [#allocation7], 483
    %1488 = vst [vmem:[%s1487] ss:$8 sm:$0xf] %v1481
    %1489 = vst [vmem:[%s1487] ss:$8 sm:$0xf0] %v1481
    %s1490 = scalar_lea.vmem [#allocation7], 547
    %1491 = vst.msk [vmem:[%s1490] ss:$8 sm:$0x3] %vm61, %v1486
    %1492 = vst.msk [vmem:[%s1490] ss:$8 sm:$0x0] %vm61, %v1486
    %s1493 = sadd.s32 %s34, 52
    %s1494 = sld [smem:[#allocation3 + %s1493]]
    %p1495 = scmp.gt.s32.totalorder %s1494, 0
    %s1496 = scalar_select %p1495, %s1494, 0
    %p1497 = scmp.lt.s32.totalorder %s1496, 2047
    %s1498 = scalar_select %p1497, %s1496, 2047
    %s1499 = sshra.s32 %s1498, 3
    %s1500 = sand.u32 %s1498, 7
    %s1501 = sshra.s32 %s1498, 3
    %s1502 = sand.u32 %s1498, 7
    %s1503 = smul.u32 %s1499, 10
    %s1504 = smul.u32 %s1503, 8
    %s1505 = sadd.s32 %s1504, %s1502
    %s1506 = scalar_lea.vmem [#allocation4], %s1505
    %v1507 = vld [vmem:[%s1506] ss:$8 sm:$0xf]
    %v1508 = vld [vmem:[%s1506] ss:$8 sm:$0xf0]
    %v1509 = vor.u32 %v1507, %v1508
    %s1510 = sadd.s32 %s1503, 8
    %s1511 = smul.u32 %s1510, 8
    %s1512 = sadd.s32 %s1511, %s1502
    %s1513 = scalar_lea.vmem [#allocation4], %s1512
    %v1514 = vld [vmem:[%s1513] ss:$8 sm:$0x3]
    %s1515 = scalar_lea.vmem [#allocation7], 484
    %1516 = vst [vmem:[%s1515] ss:$8 sm:$0xf] %v1509
    %1517 = vst [vmem:[%s1515] ss:$8 sm:$0xf0] %v1509
    %s1518 = scalar_lea.vmem [#allocation7], 548
    %1519 = vst.msk [vmem:[%s1518] ss:$8 sm:$0x3] %vm61, %v1514
    %1520 = vst.msk [vmem:[%s1518] ss:$8 sm:$0x0] %vm61, %v1514
    %s1521 = sadd.s32 %s34, 53
    %s1522 = sld [smem:[#allocation3 + %s1521]]
    %p1523 = scmp.gt.s32.totalorder %s1522, 0
    %s1524 = scalar_select %p1523, %s1522, 0
    %p1525 = scmp.lt.s32.totalorder %s1524, 2047
    %s1526 = scalar_select %p1525, %s1524, 2047
    %s1527 = sshra.s32 %s1526, 3
    %s1528 = sand.u32 %s1526, 7
    %s1529 = sshra.s32 %s1526, 3
    %s1530 = sand.u32 %s1526, 7
    %s1531 = smul.u32 %s1527, 10
    %s1532 = smul.u32 %s1531, 8
    %s1533 = sadd.s32 %s1532, %s1530
    %s1534 = scalar_lea.vmem [#allocation4], %s1533
    %v1535 = vld [vmem:[%s1534] ss:$8 sm:$0xf]
    %v1536 = vld [vmem:[%s1534] ss:$8 sm:$0xf0]
    %v1537 = vor.u32 %v1535, %v1536
    %s1538 = sadd.s32 %s1531, 8
    %s1539 = smul.u32 %s1538, 8
    %s1540 = sadd.s32 %s1539, %s1530
    %s1541 = scalar_lea.vmem [#allocation4], %s1540
    %v1542 = vld [vmem:[%s1541] ss:$8 sm:$0x3]
    %s1543 = scalar_lea.vmem [#allocation7], 485
    %1544 = vst [vmem:[%s1543] ss:$8 sm:$0xf] %v1537
    %1545 = vst [vmem:[%s1543] ss:$8 sm:$0xf0] %v1537
    %s1546 = scalar_lea.vmem [#allocation7], 549
    %1547 = vst.msk [vmem:[%s1546] ss:$8 sm:$0x3] %vm61, %v1542
    %1548 = vst.msk [vmem:[%s1546] ss:$8 sm:$0x0] %vm61, %v1542
    %s1549 = sadd.s32 %s34, 54
    %s1550 = sld [smem:[#allocation3 + %s1549]]
    %p1551 = scmp.gt.s32.totalorder %s1550, 0
    %s1552 = scalar_select %p1551, %s1550, 0
    %p1553 = scmp.lt.s32.totalorder %s1552, 2047
    %s1554 = scalar_select %p1553, %s1552, 2047
    %s1555 = sshra.s32 %s1554, 3
    %s1556 = sand.u32 %s1554, 7
    %s1557 = sshra.s32 %s1554, 3
    %s1558 = sand.u32 %s1554, 7
    %s1559 = smul.u32 %s1555, 10
    %s1560 = smul.u32 %s1559, 8
    %s1561 = sadd.s32 %s1560, %s1558
    %s1562 = scalar_lea.vmem [#allocation4], %s1561
    %v1563 = vld [vmem:[%s1562] ss:$8 sm:$0xf]
    %v1564 = vld [vmem:[%s1562] ss:$8 sm:$0xf0]
    %v1565 = vor.u32 %v1563, %v1564
    %s1566 = sadd.s32 %s1559, 8
    %s1567 = smul.u32 %s1566, 8
    %s1568 = sadd.s32 %s1567, %s1558
    %s1569 = scalar_lea.vmem [#allocation4], %s1568
    %v1570 = vld [vmem:[%s1569] ss:$8 sm:$0x3]
    %s1571 = scalar_lea.vmem [#allocation7], 486
    %1572 = vst [vmem:[%s1571] ss:$8 sm:$0xf] %v1565
    %1573 = vst [vmem:[%s1571] ss:$8 sm:$0xf0] %v1565
    %s1574 = scalar_lea.vmem [#allocation7], 550
    %1575 = vst.msk [vmem:[%s1574] ss:$8 sm:$0x3] %vm61, %v1570
    %1576 = vst.msk [vmem:[%s1574] ss:$8 sm:$0x0] %vm61, %v1570
    %s1577 = sadd.s32 %s34, 55
    %s1578 = sld [smem:[#allocation3 + %s1577]]
    %p1579 = scmp.gt.s32.totalorder %s1578, 0
    %s1580 = scalar_select %p1579, %s1578, 0
    %p1581 = scmp.lt.s32.totalorder %s1580, 2047
    %s1582 = scalar_select %p1581, %s1580, 2047
    %s1583 = sshra.s32 %s1582, 3
    %s1584 = sand.u32 %s1582, 7
    %s1585 = sshra.s32 %s1582, 3
    %s1586 = sand.u32 %s1582, 7
    %s1587 = smul.u32 %s1583, 10
    %s1588 = smul.u32 %s1587, 8
    %s1589 = sadd.s32 %s1588, %s1586
    %s1590 = scalar_lea.vmem [#allocation4], %s1589
    %v1591 = vld [vmem:[%s1590] ss:$8 sm:$0xf]
    %v1592 = vld [vmem:[%s1590] ss:$8 sm:$0xf0]
    %v1593 = vor.u32 %v1591, %v1592
    %s1594 = sadd.s32 %s1587, 8
    %s1595 = smul.u32 %s1594, 8
    %s1596 = sadd.s32 %s1595, %s1586
    %s1597 = scalar_lea.vmem [#allocation4], %s1596
    %v1598 = vld [vmem:[%s1597] ss:$8 sm:$0x3]
    %s1599 = scalar_lea.vmem [#allocation7], 487
    %1600 = vst [vmem:[%s1599] ss:$8 sm:$0xf] %v1593
    %1601 = vst [vmem:[%s1599] ss:$8 sm:$0xf0] %v1593
    %s1602 = scalar_lea.vmem [#allocation7], 551
    %1603 = vst.msk [vmem:[%s1602] ss:$8 sm:$0x3] %vm61, %v1598
    %1604 = vst.msk [vmem:[%s1602] ss:$8 sm:$0x0] %vm61, %v1598
    %s1605 = sadd.s32 %s34, 56
    %s1606 = sld [smem:[#allocation3 + %s1605]]
    %p1607 = scmp.gt.s32.totalorder %s1606, 0
    %s1608 = scalar_select %p1607, %s1606, 0
    %p1609 = scmp.lt.s32.totalorder %s1608, 2047
    %s1610 = scalar_select %p1609, %s1608, 2047
    %s1611 = sshra.s32 %s1610, 3
    %s1612 = sand.u32 %s1610, 7
    %s1613 = sshra.s32 %s1610, 3
    %s1614 = sand.u32 %s1610, 7
    %s1615 = smul.u32 %s1611, 10
    %s1616 = smul.u32 %s1615, 8
    %s1617 = sadd.s32 %s1616, %s1614
    %s1618 = scalar_lea.vmem [#allocation4], %s1617
    %v1619 = vld [vmem:[%s1618] ss:$8 sm:$0xf]
    %v1620 = vld [vmem:[%s1618] ss:$8 sm:$0xf0]
    %v1621 = vor.u32 %v1619, %v1620
    %s1622 = sadd.s32 %s1615, 8
    %s1623 = smul.u32 %s1622, 8
    %s1624 = sadd.s32 %s1623, %s1614
    %s1625 = scalar_lea.vmem [#allocation4], %s1624
    %v1626 = vld [vmem:[%s1625] ss:$8 sm:$0x3]
    %s1627 = scalar_lea.vmem [#allocation7], 560
    %1628 = vst [vmem:[%s1627] ss:$8 sm:$0xf] %v1621
    %1629 = vst [vmem:[%s1627] ss:$8 sm:$0xf0] %v1621
    %s1630 = scalar_lea.vmem [#allocation7], 624
    %1631 = vst.msk [vmem:[%s1630] ss:$8 sm:$0x3] %vm61, %v1626
    %1632 = vst.msk [vmem:[%s1630] ss:$8 sm:$0x0] %vm61, %v1626
    %s1633 = sadd.s32 %s34, 57
    %s1634 = sld [smem:[#allocation3 + %s1633]]
    %p1635 = scmp.gt.s32.totalorder %s1634, 0
    %s1636 = scalar_select %p1635, %s1634, 0
    %p1637 = scmp.lt.s32.totalorder %s1636, 2047
    %s1638 = scalar_select %p1637, %s1636, 2047
    %s1639 = sshra.s32 %s1638, 3
    %s1640 = sand.u32 %s1638, 7
    %s1641 = sshra.s32 %s1638, 3
    %s1642 = sand.u32 %s1638, 7
    %s1643 = smul.u32 %s1639, 10
    %s1644 = smul.u32 %s1643, 8
    %s1645 = sadd.s32 %s1644, %s1642
    %s1646 = scalar_lea.vmem [#allocation4], %s1645
    %v1647 = vld [vmem:[%s1646] ss:$8 sm:$0xf]
    %v1648 = vld [vmem:[%s1646] ss:$8 sm:$0xf0]
    %v1649 = vor.u32 %v1647, %v1648
    %s1650 = sadd.s32 %s1643, 8
    %s1651 = smul.u32 %s1650, 8
    %s1652 = sadd.s32 %s1651, %s1642
    %s1653 = scalar_lea.vmem [#allocation4], %s1652
    %v1654 = vld [vmem:[%s1653] ss:$8 sm:$0x3]
    %s1655 = scalar_lea.vmem [#allocation7], 561
    %1656 = vst [vmem:[%s1655] ss:$8 sm:$0xf] %v1649
    %1657 = vst [vmem:[%s1655] ss:$8 sm:$0xf0] %v1649
    %s1658 = scalar_lea.vmem [#allocation7], 625
    %1659 = vst.msk [vmem:[%s1658] ss:$8 sm:$0x3] %vm61, %v1654
    %1660 = vst.msk [vmem:[%s1658] ss:$8 sm:$0x0] %vm61, %v1654
    %s1661 = sadd.s32 %s34, 58
    %s1662 = sld [smem:[#allocation3 + %s1661]]
    %p1663 = scmp.gt.s32.totalorder %s1662, 0
    %s1664 = scalar_select %p1663, %s1662, 0
    %p1665 = scmp.lt.s32.totalorder %s1664, 2047
    %s1666 = scalar_select %p1665, %s1664, 2047
    %s1667 = sshra.s32 %s1666, 3
    %s1668 = sand.u32 %s1666, 7
    %s1669 = sshra.s32 %s1666, 3
    %s1670 = sand.u32 %s1666, 7
    %s1671 = smul.u32 %s1667, 10
    %s1672 = smul.u32 %s1671, 8
    %s1673 = sadd.s32 %s1672, %s1670
    %s1674 = scalar_lea.vmem [#allocation4], %s1673
    %v1675 = vld [vmem:[%s1674] ss:$8 sm:$0xf]
    %v1676 = vld [vmem:[%s1674] ss:$8 sm:$0xf0]
    %v1677 = vor.u32 %v1675, %v1676
    %s1678 = sadd.s32 %s1671, 8
    %s1679 = smul.u32 %s1678, 8
    %s1680 = sadd.s32 %s1679, %s1670
    %s1681 = scalar_lea.vmem [#allocation4], %s1680
    %v1682 = vld [vmem:[%s1681] ss:$8 sm:$0x3]
    %s1683 = scalar_lea.vmem [#allocation7], 562
    %1684 = vst [vmem:[%s1683] ss:$8 sm:$0xf] %v1677
    %1685 = vst [vmem:[%s1683] ss:$8 sm:$0xf0] %v1677
    %s1686 = scalar_lea.vmem [#allocation7], 626
    %1687 = vst.msk [vmem:[%s1686] ss:$8 sm:$0x3] %vm61, %v1682
    %1688 = vst.msk [vmem:[%s1686] ss:$8 sm:$0x0] %vm61, %v1682
    %s1689 = sadd.s32 %s34, 59
    %s1690 = sld [smem:[#allocation3 + %s1689]]
    %p1691 = scmp.gt.s32.totalorder %s1690, 0
    %s1692 = scalar_select %p1691, %s1690, 0
    %p1693 = scmp.lt.s32.totalorder %s1692, 2047
    %s1694 = scalar_select %p1693, %s1692, 2047
    %s1695 = sshra.s32 %s1694, 3
    %s1696 = sand.u32 %s1694, 7
    %s1697 = sshra.s32 %s1694, 3
    %s1698 = sand.u32 %s1694, 7
    %s1699 = smul.u32 %s1695, 10
    %s1700 = smul.u32 %s1699, 8
    %s1701 = sadd.s32 %s1700, %s1698
    %s1702 = scalar_lea.vmem [#allocation4], %s1701
    %v1703 = vld [vmem:[%s1702] ss:$8 sm:$0xf]
    %v1704 = vld [vmem:[%s1702] ss:$8 sm:$0xf0]
    %v1705 = vor.u32 %v1703, %v1704
    %s1706 = sadd.s32 %s1699, 8
    %s1707 = smul.u32 %s1706, 8
    %s1708 = sadd.s32 %s1707, %s1698
    %s1709 = scalar_lea.vmem [#allocation4], %s1708
    %v1710 = vld [vmem:[%s1709] ss:$8 sm:$0x3]
    %s1711 = scalar_lea.vmem [#allocation7], 563
    %1712 = vst [vmem:[%s1711] ss:$8 sm:$0xf] %v1705
    %1713 = vst [vmem:[%s1711] ss:$8 sm:$0xf0] %v1705
    %s1714 = scalar_lea.vmem [#allocation7], 627
    %1715 = vst.msk [vmem:[%s1714] ss:$8 sm:$0x3] %vm61, %v1710
    %1716 = vst.msk [vmem:[%s1714] ss:$8 sm:$0x0] %vm61, %v1710
    %s1717 = sadd.s32 %s34, 60
    %s1718 = sld [smem:[#allocation3 + %s1717]]
    %p1719 = scmp.gt.s32.totalorder %s1718, 0
    %s1720 = scalar_select %p1719, %s1718, 0
    %p1721 = scmp.lt.s32.totalorder %s1720, 2047
    %s1722 = scalar_select %p1721, %s1720, 2047
    %s1723 = sshra.s32 %s1722, 3
    %s1724 = sand.u32 %s1722, 7
    %s1725 = sshra.s32 %s1722, 3
    %s1726 = sand.u32 %s1722, 7
    %s1727 = smul.u32 %s1723, 10
    %s1728 = smul.u32 %s1727, 8
    %s1729 = sadd.s32 %s1728, %s1726
    %s1730 = scalar_lea.vmem [#allocation4], %s1729
    %v1731 = vld [vmem:[%s1730] ss:$8 sm:$0xf]
    %v1732 = vld [vmem:[%s1730] ss:$8 sm:$0xf0]
    %v1733 = vor.u32 %v1731, %v1732
    %s1734 = sadd.s32 %s1727, 8
    %s1735 = smul.u32 %s1734, 8
    %s1736 = sadd.s32 %s1735, %s1726
    %s1737 = scalar_lea.vmem [#allocation4], %s1736
    %v1738 = vld [vmem:[%s1737] ss:$8 sm:$0x3]
    %s1739 = scalar_lea.vmem [#allocation7], 564
    %1740 = vst [vmem:[%s1739] ss:$8 sm:$0xf] %v1733
    %1741 = vst [vmem:[%s1739] ss:$8 sm:$0xf0] %v1733
    %s1742 = scalar_lea.vmem [#allocation7], 628
    %1743 = vst.msk [vmem:[%s1742] ss:$8 sm:$0x3] %vm61, %v1738
    %1744 = vst.msk [vmem:[%s1742] ss:$8 sm:$0x0] %vm61, %v1738
    %s1745 = sadd.s32 %s34, 61
    %s1746 = sld [smem:[#allocation3 + %s1745]]
    %p1747 = scmp.gt.s32.totalorder %s1746, 0
    %s1748 = scalar_select %p1747, %s1746, 0
    %p1749 = scmp.lt.s32.totalorder %s1748, 2047
    %s1750 = scalar_select %p1749, %s1748, 2047
    %s1751 = sshra.s32 %s1750, 3
    %s1752 = sand.u32 %s1750, 7
    %s1753 = sshra.s32 %s1750, 3
    %s1754 = sand.u32 %s1750, 7
    %s1755 = smul.u32 %s1751, 10
    %s1756 = smul.u32 %s1755, 8
    %s1757 = sadd.s32 %s1756, %s1754
    %s1758 = scalar_lea.vmem [#allocation4], %s1757
    %v1759 = vld [vmem:[%s1758] ss:$8 sm:$0xf]
    %v1760 = vld [vmem:[%s1758] ss:$8 sm:$0xf0]
    %v1761 = vor.u32 %v1759, %v1760
    %s1762 = sadd.s32 %s1755, 8
    %s1763 = smul.u32 %s1762, 8
    %s1764 = sadd.s32 %s1763, %s1754
    %s1765 = scalar_lea.vmem [#allocation4], %s1764
    %v1766 = vld [vmem:[%s1765] ss:$8 sm:$0x3]
    %s1767 = scalar_lea.vmem [#allocation7], 565
    %1768 = vst [vmem:[%s1767] ss:$8 sm:$0xf] %v1761
    %1769 = vst [vmem:[%s1767] ss:$8 sm:$0xf0] %v1761
    %s1770 = scalar_lea.vmem [#allocation7], 629
    %1771 = vst.msk [vmem:[%s1770] ss:$8 sm:$0x3] %vm61, %v1766
    %1772 = vst.msk [vmem:[%s1770] ss:$8 sm:$0x0] %vm61, %v1766
    %s1773 = sadd.s32 %s34, 62
    %s1774 = sld [smem:[#allocation3 + %s1773]]
    %p1775 = scmp.gt.s32.totalorder %s1774, 0
    %s1776 = scalar_select %p1775, %s1774, 0
    %p1777 = scmp.lt.s32.totalorder %s1776, 2047
    %s1778 = scalar_select %p1777, %s1776, 2047
    %s1779 = sshra.s32 %s1778, 3
    %s1780 = sand.u32 %s1778, 7
    %s1781 = sshra.s32 %s1778, 3
    %s1782 = sand.u32 %s1778, 7
    %s1783 = smul.u32 %s1779, 10
    %s1784 = smul.u32 %s1783, 8
    %s1785 = sadd.s32 %s1784, %s1782
    %s1786 = scalar_lea.vmem [#allocation4], %s1785
    %v1787 = vld [vmem:[%s1786] ss:$8 sm:$0xf]
    %v1788 = vld [vmem:[%s1786] ss:$8 sm:$0xf0]
    %v1789 = vor.u32 %v1787, %v1788
    %s1790 = sadd.s32 %s1783, 8
    %s1791 = smul.u32 %s1790, 8
    %s1792 = sadd.s32 %s1791, %s1782
    %s1793 = scalar_lea.vmem [#allocation4], %s1792
    %v1794 = vld [vmem:[%s1793] ss:$8 sm:$0x3]
    %s1795 = scalar_lea.vmem [#allocation7], 566
    %1796 = vst [vmem:[%s1795] ss:$8 sm:$0xf] %v1789
    %1797 = vst [vmem:[%s1795] ss:$8 sm:$0xf0] %v1789
    %s1798 = scalar_lea.vmem [#allocation7], 630
    %1799 = vst.msk [vmem:[%s1798] ss:$8 sm:$0x3] %vm61, %v1794
    %1800 = vst.msk [vmem:[%s1798] ss:$8 sm:$0x0] %vm61, %v1794
    %s1801 = sadd.s32 %s34, 63
    %s1802 = sld [smem:[#allocation3 + %s1801]]
    %p1803 = scmp.gt.s32.totalorder %s1802, 0
    %s1804 = scalar_select %p1803, %s1802, 0
    %p1805 = scmp.lt.s32.totalorder %s1804, 2047
    %s1806 = scalar_select %p1805, %s1804, 2047
    %s1807 = sshra.s32 %s1806, 3
    %s1808 = sand.u32 %s1806, 7
    %s1809 = sshra.s32 %s1806, 3
    %s1810 = sand.u32 %s1806, 7
    %s1811 = smul.u32 %s1807, 10
    %s1812 = smul.u32 %s1811, 8
    %s1813 = sadd.s32 %s1812, %s1810
    %s1814 = scalar_lea.vmem [#allocation4], %s1813
    %v1815 = vld [vmem:[%s1814] ss:$8 sm:$0xf]
    %v1816 = vld [vmem:[%s1814] ss:$8 sm:$0xf0]
    %v1817 = vor.u32 %v1815, %v1816
    %s1818 = sadd.s32 %s1811, 8
    %s1819 = smul.u32 %s1818, 8
    %s1820 = sadd.s32 %s1819, %s1810
    %s1821 = scalar_lea.vmem [#allocation4], %s1820
    %v1822 = vld [vmem:[%s1821] ss:$8 sm:$0x3]
    %s1823 = scalar_lea.vmem [#allocation7], 567
    %1824 = vst [vmem:[%s1823] ss:$8 sm:$0xf] %v1817
    %1825 = vst [vmem:[%s1823] ss:$8 sm:$0xf0] %v1817
    %s1826 = scalar_lea.vmem [#allocation7], 631
    %1827 = vst.msk [vmem:[%s1826] ss:$8 sm:$0x3] %vm61, %v1822
    %1828 = vst.msk [vmem:[%s1826] ss:$8 sm:$0x0] %vm61, %v1822
    // Predicated region
    $region10: #{tpu_custom_call.1} parent=1 // pred_check
      _
    $region11: #{tpu_custom_call.1} parent=1 // pred_check_branch
      %1830 = sbr.rel (0) target = $region13
    $region12: #{tpu_custom_call.1} parent=1 // pred_region
      %1832 = vsyncadd [#allocation6], 0
      %s1833 = sshll.u32 [#allocation7], 4
      %s1834 = int_to_ptr.vmem [resolvable:$true] %s1833
      %s1835 = sshll.u32 %s2, 4
      %s1836 = int_to_ptr.hbm [resolvable:$true] %s1835
      %1841 = dma.vmem_to_hbm [thread:$0]  %s1834, 10240, %s1836, [#allocation6], 1280, 1280, 80
    $region13: #{tpu_custom_call.1} parent=1 // pred_fallthru
      _
    // Predicated region
    $region14: #{tpu_custom_call.1} parent=1 // pred_check
      _
    $region15: #{tpu_custom_call.1} parent=1 // pred_check_branch
      %1843 = sbr.rel (0) target = $region17
    $region16: #{tpu_custom_call.1} parent=1 // pred_region
      %1845 = dma.done [#allocation6], 10240
    $region17: #{tpu_custom_call.1} parent=1 // pred_fallthru
      _
    %1846 = vsyncpa [#allocation5], 1
    %1847 = vsyncpa [#allocation6], 1

</llo_original>
